<compile_context>
chip_gen: v6e
topology: v6e:2x2x1
jax: 0.10.0
libtpu: 0.0.40
codegen_flags: <defaults>
</compile_context>

<pallas_src>
import functools

import jax
import jax.numpy as jnp
from jax import lax
from jax.experimental import pallas as pl
from jax.experimental.pallas import tpu as pltpu

# ---- small synthetic CLIP-text config ------------------------------------
# (real openai/clip-vit-large-patch14 text model: D=768, H=12, L=12, F=3072, S=77)
VOCAB = 1000
MAX_LEN = 16          # tokenizer padding='max_length'
BATCH = 2
D_MODEL = 128
N_HEADS = 4
HEAD_DIM = D_MODEL // N_HEADS
D_FF = 256
N_LAYERS = 2
LN_EPS = 1e-5
NEG_INF = -1e30

# bf16 transcendental path (softmax exp / QuickGELU sigmoid). v6e/v7x have a bf16
# EUP (~2x packed throughput); set False on v5e or when closeness to f32 matters.
BF16_TRANSCENDENTALS = True


def _layer_norm(x, w, b):
    mu = jnp.mean(x, axis=-1, keepdims=True)
    var = jnp.mean((x - mu) ** 2, axis=-1, keepdims=True)
    return (x - mu) * lax.rsqrt(var + LN_EPS) * w + b


def clip_text_kernel(x_ref, bias_ref,
                     ln1_w_ref, ln1_b_ref,
                     wqkv_ref, bqkv_ref,
                     wo_ref, bo_ref,
                     ln2_w_ref, ln2_b_ref,
                     w1_ref, b1_ref, w2_ref, b2_ref,
                     lnf_w_ref, lnf_b_ref,
                     out_ref,
                     *, batch, seq):
    """One grid step == one pre-LN transformer encoder layer for one row block.

    out_ref (constant block index across the layer grid axis) holds the running
    f32 residual stream; the final LayerNorm is applied on the last layer step.
    """
    l = pl.program_id(1)
    n_layers = pl.num_programs(1)
    D, H, hd = D_MODEL, N_HEADS, HEAD_DIM

    @pl.when(l == 0)
    def _():
        # x is only consumed here; it stays resident for the row block's L steps
        # (on v7x it could be single-buffered via pipeline_mode=pl.Buffered(1)).
        out_ref[...] = x_ref[...]

    h = out_ref[...]                                  # (batch*seq, D) f32 residual

    # ---------- self-attention (pre-LN, fused QKV, heads batched on the MXU) ------
    hn = _layer_norm(h, ln1_w_ref[0], ln1_b_ref[0])
    # 1/sqrt(head_dim) is pre-folded into the Q columns of wqkv/bqkv (frozen weights).
    qkv = jnp.dot(hn.astype(jnp.bfloat16), wqkv_ref[0],
                  preferred_element_type=jnp.float32) + bqkv_ref[0]   # (rows, 3D) f32

    def split_heads(x2d):
        # (batch*seq, D) f32 -> (batch*H, seq, hd) bf16 with a head-major batch dim.
        chunks = []
        for b in range(batch):
            xb = x2d[b * seq:(b + 1) * seq, :].reshape(seq, H, hd)
            chunks.append(pltpu.einshape("shd->hsd", xb))
        x3 = chunks[0] if batch == 1 else jnp.concatenate(chunks, axis=0)
        return x3.astype(jnp.bfloat16)

    qh = split_heads(qkv[:, :D])
    kh = split_heads(qkv[:, D:2 * D])
    vh = split_heads(qkv[:, 2 * D:])

    # Two batched einsums over the merged (batch, head) axis: no per-head lane
    # slicing, no lane-concatenate, only two MXU call sites per layer.
    sc = jnp.einsum('hqd,hkd->hqk', qh, kh,
                    preferred_element_type=jnp.float32)     # (batch*H, seq, seq) f32
    sc = sc + bias_ref[...][None]                            # causal + key-padding
    sc = sc - jnp.max(sc, axis=-1, keepdims=True)
    if BF16_TRANSCENDENTALS:
        p = jnp.exp(sc.astype(jnp.bfloat16))                 # bf16 EUP path
        denom = jnp.sum(p.astype(jnp.float32), axis=-1, keepdims=True)
    else:
        pf = jnp.exp(sc)
        denom = jnp.sum(pf, axis=-1, keepdims=True)
        p = pf.astype(jnp.bfloat16)
    o = jnp.einsum('hqk,hkd->hqd', p, vh,
                   preferred_element_type=jnp.float32)       # (batch*H, seq, hd) f32
    o = o * pl.reciprocal(denom, approx=True)                # normalize after PV

    rows = []
    for b in range(batch):
        ob = o[b * H:(b + 1) * H]                            # (H, seq, hd)
        rows.append(pltpu.einshape("hsd->shd", ob).reshape(seq, D))
    attn = rows[0] if batch == 1 else jnp.concatenate(rows, axis=0)

    attn = jnp.dot(attn.astype(jnp.bfloat16), wo_ref[0],
                   preferred_element_type=jnp.float32) + bo_ref[0]
    h = h + attn

    # ---------- MLP block (pre-LN, QuickGELU) ----------
    hn2 = _layer_norm(h, ln2_w_ref[0], ln2_b_ref[0])
    f = jnp.dot(hn2.astype(jnp.bfloat16), w1_ref[0],
                preferred_element_type=jnp.float32) + b1_ref[0]
    if BF16_TRANSCENDENTALS:
        fb = f.astype(jnp.bfloat16)
        g = fb * jax.nn.sigmoid(1.702 * fb)        # QuickGELU, bf16 sigmoid on EUP
    else:
        g = (f * jax.nn.sigmoid(1.702 * f)).astype(jnp.bfloat16)
    f = jnp.dot(g, w2_ref[0], preferred_element_type=jnp.float32) + b2_ref[0]
    h = h + f

    @pl.when(l < n_layers - 1)
    def _():
        out_ref[...] = h

    @pl.when(l == n_layers - 1)
    def _():
        out_ref[...] = _layer_norm(h, lnf_w_ref[0], lnf_b_ref[0])


def clip_text_pallas(x_emb, attn_bias, p, num_row_blocks=1):
    """x_emb: (B, S_pad, D) f32 (token emb + position emb, seq already padded).
    attn_bias: (S_pad, S_pad) f32 additive causal + key-padding mask.
    num_row_blocks: how many "parallel" row blocks the batch is split into
    (2 feeds both v7x TensorCores; 1 avoids re-streaming weights on v5e/v6e).
    Returns last_hidden_state of shape (B, S_pad, D)."""
    B, S, D = x_emb.shape
    assert B % num_row_blocks == 0
    bpb = B // num_row_blocks                 # batch elements per row block
    rows = bpb * S                            # matmul M dim per grid step
    BS = B * S
    L = p['wqkv'].shape[0]
    F = p['w1'].shape[2]

    x_flat = x_emb.reshape(BS, D).astype(jnp.float32)

    vec = lambda n: pl.BlockSpec((1, 1, n), lambda r, l: (l, 0, 0))     # per-layer vec
    mat = lambda a, b: pl.BlockSpec((1, a, b), lambda r, l: (l, 0, 0))  # per-layer mat
    const_vec = pl.BlockSpec((1, 1, D), lambda r, l: (0, 0, 0))

    grid_spec = pltpu.PrefetchScalarGridSpec(
        num_scalar_prefetch=0,
        grid=(num_row_blocks, L),
        in_specs=[
            pl.BlockSpec((rows, D), lambda r, l: (r, 0)),   # x (flattened embeddings)
            pl.BlockSpec((S, S), lambda r, l: (0, 0)),      # additive attention bias
            vec(D), vec(D),                                 # ln1 w, b
            mat(D, 3 * D), vec(3 * D),                      # fused wqkv (bf16), bqkv
            mat(D, D), vec(D),                              # wo (bf16), bo
            vec(D), vec(D),                                 # ln2 w, b
            mat(D, F), vec(F),                              # w1 (bf16), b1
            mat(F, D), vec(D),                              # w2 (bf16), b2
            const_vec, const_vec,                           # final ln w, b
        ],
        out_specs=pl.BlockSpec((rows, D), lambda r, l: (r, 0)),
    )

    kernel = functools.partial(clip_text_kernel, batch=bpb, seq=S)
    out = pl.pallas_call(
        kernel,
        out_shape=jax.ShapeDtypeStruct((BS, D), jnp.float32),
        grid_spec=grid_spec,
        compiler_params=pltpu.CompilerParams(
            # row axis independent -> megacore shardable; layer axis is sequential.
            dimension_semantics=("parallel", "arbitrary"),
            vmem_limit_bytes=48 * 1024 * 1024,   # leave headroom on v7x (64 MiB phys)
        ),
    )(x_flat, attn_bias,
      p['ln1_w'], p['ln1_b'],
      p['wqkv'], p['bqkv'],
      p['wo'], p['bo'],
      p['ln2_w'], p['ln2_b'],
      p['w1'], p['b1'], p['w2'], p['b2'],
      p['lnf_w'], p['lnf_b'])
    return out.reshape(B, S, D)


def init_params(key):
    ks = jax.random.split(key, 10)
    s = 0.02
    D, F, L, hd = D_MODEL, D_FF, N_LAYERS, HEAD_DIM
    bf = jnp.bfloat16
    nrm = lambda k, shape: jax.random.normal(k, shape, jnp.float32) * s

    # Fused QKV projection. The frozen weights are transformed once on the host:
    # the attention scale 1/sqrt(head_dim) is folded into the Q columns (and Q bias),
    # removing a per-layer (rows, D) VPU multiply from the kernel for free.
    wqkv = nrm(ks[2], (L, D, 3 * D))
    bqkv = nrm(ks[3], (L, 1, 3 * D))
    scale = hd ** -0.5
    wqkv = wqkv.at[:, :, :D].multiply(scale)
    bqkv = bqkv.at[:, :, :D].multiply(scale)

    return dict(
        tok_emb=nrm(ks[0], (VOCAB, D)),
        pos_emb=nrm(ks[1], (MAX_LEN, D)),
        ln1_w=jnp.ones((L, 1, D), jnp.float32),
        ln1_b=jnp.zeros((L, 1, D), jnp.float32),
        wqkv=wqkv.astype(bf), bqkv=bqkv,
        wo=nrm(ks[4], (L, D, D)).astype(bf), bo=nrm(ks[5], (L, 1, D)),
        ln2_w=jnp.ones((L, 1, D), jnp.float32),
        ln2_b=jnp.zeros((L, 1, D), jnp.float32),
        w1=nrm(ks[6], (L, D, F)).astype(bf), b1=nrm(ks[7], (L, 1, F)),
        w2=nrm(ks[8], (L, F, D)).astype(bf), b2=nrm(ks[9], (L, 1, D)),
        lnf_w=jnp.ones((1, 1, D), jnp.float32),
        lnf_b=jnp.zeros((1, 1, D), jnp.float32),
    )


def frozen_clip_text_embedder(tokens, params, num_row_blocks=1):
    """Equivalent of FrozenCLIPTextEmbedder.forward after tokenization:
    returns last_hidden_state of shape (B, max_length, D)."""
    B, S = tokens.shape
    # embedding lookup + position embedding (glue, plain JAX)
    x = params['tok_emb'][tokens] + params['pos_emb'][None, :S]

    # Pad the sequence only to a multiple of 16 (bf16 sublane packing). Real CLIP-L
    # S=77 pads to 80, NOT 128: the QKV/out/MLP projections (~97% of FLOPs) scale
    # with B*S_pad, while the (S_pad,S_pad) score block lives in 128-lane vregs
    # either way. Padded keys are masked; padded query rows are sliced off at the end.
    S_pad = -(-S // 16) * 16
    if S_pad != S:
        x = jnp.pad(x, ((0, 0), (0, S_pad - S), (0, 0)))

    row = jnp.arange(S_pad)[:, None]
    col = jnp.arange(S_pad)[None, :]
    attn_bias = jnp.where((col <= row) & (col < S), 0.0, NEG_INF).astype(jnp.float32)

    z = clip_text_pallas(x.astype(jnp.float32), attn_bias, params,
                         num_row_blocks=num_row_blocks)
    return z[:, :S, :]


if __name__ == "__main__":
    key = jax.random.PRNGKey(0)
    k_param, k_tok = jax.random.split(key)
    params = init_params(k_param)

    # "tokenized text": padded token ids, shape (batch, max_length)
    tokens = jax.random.randint(k_tok, (BATCH, MAX_LEN), 0, VOCAB, dtype=jnp.int32)

    # num_row_blocks=2 splits the batch rows over the leading "parallel" grid axis
    # (uses both v7x TensorCores); pass 1 on v5e/v6e at small batch (weight-BW bound).
    z = frozen_clip_text_embedder(tokens, params, num_row_blocks=2)
    z = jax.block_until_ready(z)
    assert z.shape == (BATCH, MAX_LEN, D_MODEL) and z.dtype == jnp.float32
    assert bool(jnp.all(jnp.isfinite(z)))
    print("KERNEL_OK")
</pallas_src>

<mosaic_0001>
module attributes {stable_mosaic.version = 11 : i64} {
  func.func @clip_text_kernel(%arg0: i32, %arg1: i32, %arg2: memref<16x128xf32, #tpu.memory_space<vmem>>, %arg3: memref<16x16xf32, #tpu.memory_space<vmem>>, %arg4: memref<1x1x128xf32, #tpu.memory_space<vmem>>, %arg5: memref<1x1x128xf32, #tpu.memory_space<vmem>>, %arg6: memref<1x128x384xbf16, #tpu.memory_space<vmem>>, %arg7: memref<1x1x384xf32, #tpu.memory_space<vmem>>, %arg8: memref<1x128x128xbf16, #tpu.memory_space<vmem>>, %arg9: memref<1x1x128xf32, #tpu.memory_space<vmem>>, %arg10: memref<1x1x128xf32, #tpu.memory_space<vmem>>, %arg11: memref<1x1x128xf32, #tpu.memory_space<vmem>>, %arg12: memref<1x128x256xbf16, #tpu.memory_space<vmem>>, %arg13: memref<1x1x256xf32, #tpu.memory_space<vmem>>, %arg14: memref<1x256x128xbf16, #tpu.memory_space<vmem>>, %arg15: memref<1x1x128xf32, #tpu.memory_space<vmem>>, %arg16: memref<1x1x128xf32, #tpu.memory_space<vmem>>, %arg17: memref<1x1x128xf32, #tpu.memory_space<vmem>>, %arg18: memref<16x128xf32, #tpu.memory_space<vmem>>) attributes {dimension_semantics = [#tpu.dimension_semantics<parallel>, #tpu.dimension_semantics<arbitrary>], iteration_bounds = array<i64: 2, 2>, scalar_prefetch = 0 : i64, scratch_operands = 0 : i64, tpu.core_type = #tpu.core_type<tc>, window_params = [{transform_indices = @transform_0, window_bounds = array<i64: 16, 128>}, {pipeline_mode = #tpu.pipeline_mode<synchronous>, transform_indices = @transform_1, window_bounds = array<i64: 16, 16>}, {transform_indices = @transform_2, window_bounds = array<i64: 1, 1, 128>}, {transform_indices = @transform_3, window_bounds = array<i64: 1, 1, 128>}, {transform_indices = @transform_4, window_bounds = array<i64: 1, 128, 384>}, {transform_indices = @transform_5, window_bounds = array<i64: 1, 1, 384>}, {transform_indices = @transform_6, window_bounds = array<i64: 1, 128, 128>}, {transform_indices = @transform_7, window_bounds = array<i64: 1, 1, 128>}, {transform_indices = @transform_8, window_bounds = array<i64: 1, 1, 128>}, {transform_indices = @transform_9, window_bounds = array<i64: 1, 1, 128>}, {transform_indices = @transform_10, window_bounds = array<i64: 1, 128, 256>}, {transform_indices = @transform_11, window_bounds = array<i64: 1, 1, 256>}, {transform_indices = @transform_12, window_bounds = array<i64: 1, 256, 128>}, {transform_indices = @transform_13, window_bounds = array<i64: 1, 1, 128>}, {pipeline_mode = #tpu.pipeline_mode<synchronous>, transform_indices = @transform_14, window_bounds = array<i64: 1, 1, 128>}, {pipeline_mode = #tpu.pipeline_mode<synchronous>, transform_indices = @transform_15, window_bounds = array<i64: 1, 1, 128>}, {transform_indices = @transform_16, window_bounds = array<i64: 16, 128>}]} {
    %c0_i32 = arith.constant 0 : i32
    %0 = arith.cmpi eq, %arg1, %c0_i32 : i32
    %1 = arith.extui %0 : i1 to i32
    %c0_i32_0 = arith.constant 0 : i32
    %2 = arith.cmpi ne, %1, %c0_i32_0 : i32
    scf.if %2 {
      %c0_62 = arith.constant 0 : index
      %c0_63 = arith.constant 0 : index
      %136 = vector.load %arg2[%c0_62, %c0_63] : memref<16x128xf32, #tpu.memory_space<vmem>>, vector<16x128xf32>
      %c0_64 = arith.constant 0 : index
      %c0_65 = arith.constant 0 : index
      %137 = vector.load %arg18[%c0_64, %c0_65] : memref<16x128xf32, #tpu.memory_space<vmem>>, vector<16x128xf32>
      tpu.vector_store %arg18[%c0_64, %c0_65], %136 {strides = array<i32>} : memref<16x128xf32, #tpu.memory_space<vmem>>, vector<16x128xf32>,
    } else {
    }
    %c0 = arith.constant 0 : index
    %c0_1 = arith.constant 0 : index
    %3 = vector.load %arg18[%c0, %c0_1] : memref<16x128xf32, #tpu.memory_space<vmem>>, vector<16x128xf32>
    %c0_2 = arith.constant 0 : index
    %c0_3 = arith.constant 0 : index
    %c0_4 = arith.constant 0 : index
    %4 = vector.load %arg4[%c0_2, %c0_3, %c0_4] : memref<1x1x128xf32, #tpu.memory_space<vmem>>, vector<1x1x128xf32>
    %5 = vector.shape_cast %4 : vector<1x1x128xf32> to vector<1x128xf32>
    %c0_5 = arith.constant 0 : index
    %c0_6 = arith.constant 0 : index
    %c0_7 = arith.constant 0 : index
    %6 = vector.load %arg5[%c0_5, %c0_6, %c0_7] : memref<1x1x128xf32, #tpu.memory_space<vmem>>, vector<1x1x128xf32>
    %7 = vector.shape_cast %6 : vector<1x1x128xf32> to vector<1x128xf32>
    %cst = arith.constant dense<0.000000e+00> : vector<16xf32>
    %8 = vector.multi_reduction <add>, %3, %cst [1] : vector<16x128xf32> to vector<16xf32>
    %9 = vector.shape_cast %8 : vector<16xf32> to vector<16x1xf32>
    %cst_8 = arith.constant 1.280000e+02 : f32
    %10 = vector.broadcast %cst_8 : f32 to vector<16x1xf32>
    %11 = arith.divf %9, %10 : vector<16x1xf32>
    %12 = vector.broadcast %11 : vector<16x1xf32> to vector<16x128xf32>
    %13 = arith.subf %3, %12 : vector<16x128xf32>
    %14 = arith.mulf %13, %13 : vector<16x128xf32>
    %cst_9 = arith.constant dense<0.000000e+00> : vector<16xf32>
    %15 = vector.multi_reduction <add>, %14, %cst_9 [1] : vector<16x128xf32> to vector<16xf32>
    %16 = vector.shape_cast %15 : vector<16xf32> to vector<16x1xf32>
    %cst_10 = arith.constant 1.280000e+02 : f32
    %17 = vector.broadcast %cst_10 : f32 to vector<16x1xf32>
    %18 = arith.divf %16, %17 : vector<16x1xf32>
    %19 = vector.broadcast %11 : vector<16x1xf32> to vector<16x128xf32>
    %20 = arith.subf %3, %19 : vector<16x128xf32>
    %cst_11 = arith.constant 9.99999974E-6 : f32
    %21 = vector.broadcast %cst_11 : f32 to vector<16x1xf32>
    %22 = arith.addf %18, %21 : vector<16x1xf32>
    %23 = math.rsqrt %22 : vector<16x1xf32>
    %24 = vector.broadcast %23 : vector<16x1xf32> to vector<16x128xf32>
    %25 = arith.mulf %20, %24 : vector<16x128xf32>
    %26 = vector.broadcast %5 : vector<1x128xf32> to vector<16x128xf32>
    %27 = arith.mulf %25, %26 : vector<16x128xf32>
    %28 = vector.broadcast %7 : vector<1x128xf32> to vector<16x128xf32>
    %29 = arith.addf %27, %28 : vector<16x128xf32>
    %30 = arith.truncf %29 : vector<16x128xf32> to vector<16x128xbf16>
    %c0_12 = arith.constant 0 : index
    %c0_13 = arith.constant 0 : index
    %c0_14 = arith.constant 0 : index
    %31 = vector.load %arg6[%c0_12, %c0_13, %c0_14] : memref<1x128x384xbf16, #tpu.memory_space<vmem>>, vector<1x128x384xbf16>
    %32 = vector.shape_cast %31 : vector<1x128x384xbf16> to vector<128x384xbf16>
    %cst_15 = arith.constant dense<0.000000e+00> : vector<16x384xf32>
    %33 = tpu.matmul %30, %32, %cst_15 {dimension_numbers = #tpu.dot_dimension_numbers<[1], [0], [0], [1], [0, 0, 1, 1], [], []>} : vector<16x128xbf16>, vector<128x384xbf16>, vector<16x384xf32> -> vector<16x384xf32>
    %c0_16 = arith.constant 0 : index
    %c0_17 = arith.constant 0 : index
    %c0_18 = arith.constant 0 : index
    %34 = vector.load %arg7[%c0_16, %c0_17, %c0_18] : memref<1x1x384xf32, #tpu.memory_space<vmem>>, vector<1x1x384xf32>
    %35 = vector.shape_cast %34 : vector<1x1x384xf32> to vector<1x384xf32>
    %36 = vector.broadcast %35 : vector<1x384xf32> to vector<16x384xf32>
    %37 = arith.addf %33, %36 : vector<16x384xf32>
    %38 = vector.extract_strided_slice %37 {offsets = [0, 0], sizes = [16, 128], strides = [1, 1]} : vector<16x384xf32> to vector<16x128xf32>
    %39 = vector.shape_cast %38 : vector<16x128xf32> to vector<16x4x32xf32>
    %40 = tpu.transpose %39, [1, 0, 2] : vector<16x4x32xf32> -> vector<4x16x32xf32>
    %41 = arith.truncf %40 : vector<4x16x32xf32> to vector<4x16x32xbf16>
    %42 = vector.extract_strided_slice %37 {offsets = [0, 128], sizes = [16, 128], strides = [1, 1]} : vector<16x384xf32> to vector<16x128xf32>
    %43 = vector.shape_cast %42 : vector<16x128xf32> to vector<16x4x32xf32>
    %44 = tpu.transpose %43, [1, 0, 2] : vector<16x4x32xf32> -> vector<4x16x32xf32>
    %45 = arith.truncf %44 : vector<4x16x32xf32> to vector<4x16x32xbf16>
    %46 = vector.extract_strided_slice %37 {offsets = [0, 256], sizes = [16, 128], strides = [1, 1]} : vector<16x384xf32> to vector<16x128xf32>
    %47 = vector.shape_cast %46 : vector<16x128xf32> to vector<16x4x32xf32>
    %48 = tpu.transpose %47, [1, 0, 2] : vector<16x4x32xf32> -> vector<4x16x32xf32>
    %49 = arith.truncf %48 : vector<4x16x32xf32> to vector<4x16x32xbf16>
    "tpu.trace_start"() <{level = 10 : i32, message = "hqd,hkd->hqk"}> : () -> ()
    %cst_19 = arith.constant dense<0.000000e+00> : vector<4x16x16xf32>
    %50 = tpu.matmul %41, %45, %cst_19 {dimension_numbers = #tpu.dot_dimension_numbers<[2], [2], [1], [1], [0, 0, 0, 1, 1, 1], [0], [0]>} : vector<4x16x32xbf16>, vector<4x16x32xbf16>, vector<4x16x16xf32> -> vector<4x16x16xf32>
    "tpu.trace_stop"() : () -> ()
    %c0_20 = arith.constant 0 : index
    %c0_21 = arith.constant 0 : index
    %51 = vector.load %arg3[%c0_20, %c0_21] : memref<16x16xf32, #tpu.memory_space<vmem>>, vector<16x16xf32>
    %52 = vector.shape_cast %51 : vector<16x16xf32> to vector<1x16x16xf32>
    %53 = vector.broadcast %52 : vector<1x16x16xf32> to vector<4x16x16xf32>
    %54 = arith.addf %50, %53 : vector<4x16x16xf32>
    %cst_22 = arith.constant dense<0xFF800000> : vector<4x16xf32>
    %55 = vector.multi_reduction <maximumf>, %54, %cst_22 [2] : vector<4x16x16xf32> to vector<4x16xf32>
    %56 = vector.shape_cast %55 : vector<4x16xf32> to vector<4x16x1xf32>
    %57 = vector.broadcast %56 : vector<4x16x1xf32> to vector<4x16x16xf32>
    %58 = arith.subf %54, %57 : vector<4x16x16xf32>
    %59 = arith.truncf %58 : vector<4x16x16xf32> to vector<4x16x16xbf16>
    %60 = math.exp %59 : vector<4x16x16xbf16>
    %61 = arith.extf %60 : vector<4x16x16xbf16> to vector<4x16x16xf32>
    %cst_23 = arith.constant dense<0.000000e+00> : vector<4x16xf32>
    %62 = vector.multi_reduction <add>, %61, %cst_23 [2] : vector<4x16x16xf32> to vector<4x16xf32>
    %63 = vector.shape_cast %62 : vector<4x16xf32> to vector<4x16x1xf32>
    "tpu.trace_start"() <{level = 10 : i32, message = "hqk,hkd->hqd"}> : () -> ()
    %cst_24 = arith.constant dense<0.000000e+00> : vector<4x16x32xf32>
    %64 = tpu.matmul %60, %49, %cst_24 {dimension_numbers = #tpu.dot_dimension_numbers<[2], [1], [1], [2], [0, 0, 0, 1, 1, 2], [0], [0]>} : vector<4x16x16xbf16>, vector<4x16x32xbf16>, vector<4x16x32xf32> -> vector<4x16x32xf32>
    "tpu.trace_stop"() : () -> ()
    %65 = tpu.reciprocal %63 {approx = true} : vector<4x16x1xf32> -> vector<4x16x1xf32>
    %66 = vector.broadcast %65 : vector<4x16x1xf32> to vector<4x16x32xf32>
    %67 = arith.mulf %64, %66 : vector<4x16x32xf32>
    %68 = tpu.transpose %67, [1, 0, 2] : vector<4x16x32xf32> -> vector<16x4x32xf32>
    %69 = vector.shape_cast %68 : vector<16x4x32xf32> to vector<16x128xf32>
    %70 = arith.truncf %69 : vector<16x128xf32> to vector<16x128xbf16>
    %c0_25 = arith.constant 0 : index
    %c0_26 = arith.constant 0 : index
    %c0_27 = arith.constant 0 : index
    %71 = vector.load %arg8[%c0_25, %c0_26, %c0_27] : memref<1x128x128xbf16, #tpu.memory_space<vmem>>, vector<1x128x128xbf16>
    %72 = vector.shape_cast %71 : vector<1x128x128xbf16> to vector<128x128xbf16>
    %cst_28 = arith.constant dense<0.000000e+00> : vector<16x128xf32>
    %73 = tpu.matmul %70, %72, %cst_28 {dimension_numbers = #tpu.dot_dimension_numbers<[1], [0], [0], [1], [0, 0, 1, 1], [], []>} : vector<16x128xbf16>, vector<128x128xbf16>, vector<16x128xf32> -> vector<16x128xf32>
    %c0_29 = arith.constant 0 : index
    %c0_30 = arith.constant 0 : index
    %c0_31 = arith.constant 0 : index
    %74 = vector.load %arg9[%c0_29, %c0_30, %c0_31] : memref<1x1x128xf32, #tpu.memory_space<vmem>>, vector<1x1x128xf32>
    %75 = vector.shape_cast %74 : vector<1x1x128xf32> to vector<1x128xf32>
    %76 = vector.broadcast %75 : vector<1x128xf32> to vector<16x128xf32>
    %77 = arith.addf %73, %76 : vector<16x128xf32>
    %78 = arith.addf %3, %77 : vector<16x128xf32>
    %c0_32 = arith.constant 0 : index
    %c0_33 = arith.constant 0 : index
    %c0_34 = arith.constant 0 : index
    %79 = vector.load %arg10[%c0_32, %c0_33, %c0_34] : memref<1x1x128xf32, #tpu.memory_space<vmem>>, vector<1x1x128xf32>
    %80 = vector.shape_cast %79 : vector<1x1x128xf32> to vector<1x128xf32>
    %c0_35 = arith.constant 0 : index
    %c0_36 = arith.constant 0 : index
    %c0_37 = arith.constant 0 : index
    %81 = vector.load %arg11[%c0_35, %c0_36, %c0_37] : memref<1x1x128xf32, #tpu.memory_space<vmem>>, vector<1x1x128xf32>
    %82 = vector.shape_cast %81 : vector<1x1x128xf32> to vector<1x128xf32>
    %cst_38 = arith.constant dense<0.000000e+00> : vector<16xf32>
    %83 = vector.multi_reduction <add>, %78, %cst_38 [1] : vector<16x128xf32> to vector<16xf32>
    %84 = vector.shape_cast %83 : vector<16xf32> to vector<16x1xf32>
    %cst_39 = arith.constant 1.280000e+02 : f32
    %85 = vector.broadcast %cst_39 : f32 to vector<16x1xf32>
    %86 = arith.divf %84, %85 : vector<16x1xf32>
    %87 = vector.broadcast %86 : vector<16x1xf32> to vector<16x128xf32>
    %88 = arith.subf %78, %87 : vector<16x128xf32>
    %89 = arith.mulf %88, %88 : vector<16x128xf32>
    %cst_40 = arith.constant dense<0.000000e+00> : vector<16xf32>
    %90 = vector.multi_reduction <add>, %89, %cst_40 [1] : vector<16x128xf32> to vector<16xf32>
    %91 = vector.shape_cast %90 : vector<16xf32> to vector<16x1xf32>
    %cst_41 = arith.constant 1.280000e+02 : f32
    %92 = vector.broadcast %cst_41 : f32 to vector<16x1xf32>
    %93 = arith.divf %91, %92 : vector<16x1xf32>
    %94 = vector.broadcast %86 : vector<16x1xf32> to vector<16x128xf32>
    %95 = arith.subf %78, %94 : vector<16x128xf32>
    %cst_42 = arith.constant 9.99999974E-6 : f32
    %96 = vector.broadcast %cst_42 : f32 to vector<16x1xf32>
    %97 = arith.addf %93, %96 : vector<16x1xf32>
    %98 = math.rsqrt %97 : vector<16x1xf32>
    %99 = vector.broadcast %98 : vector<16x1xf32> to vector<16x128xf32>
    %100 = arith.mulf %95, %99 : vector<16x128xf32>
    %101 = vector.broadcast %80 : vector<1x128xf32> to vector<16x128xf32>
    %102 = arith.mulf %100, %101 : vector<16x128xf32>
    %103 = vector.broadcast %82 : vector<1x128xf32> to vector<16x128xf32>
    %104 = arith.addf %102, %103 : vector<16x128xf32>
    %105 = arith.truncf %104 : vector<16x128xf32> to vector<16x128xbf16>
    %c0_43 = arith.constant 0 : index
    %c0_44 = arith.constant 0 : index
    %c0_45 = arith.constant 0 : index
    %106 = vector.load %arg12[%c0_43, %c0_44, %c0_45] : memref<1x128x256xbf16, #tpu.memory_space<vmem>>, vector<1x128x256xbf16>
    %107 = vector.shape_cast %106 : vector<1x128x256xbf16> to vector<128x256xbf16>
    %cst_46 = arith.constant dense<0.000000e+00> : vector<16x256xf32>
    %108 = tpu.matmul %105, %107, %cst_46 {dimension_numbers = #tpu.dot_dimension_numbers<[1], [0], [0], [1], [0, 0, 1, 1], [], []>} : vector<16x128xbf16>, vector<128x256xbf16>, vector<16x256xf32> -> vector<16x256xf32>
    %c0_47 = arith.constant 0 : index
    %c0_48 = arith.constant 0 : index
    %c0_49 = arith.constant 0 : index
    %109 = vector.load %arg13[%c0_47, %c0_48, %c0_49] : memref<1x1x256xf32, #tpu.memory_space<vmem>>, vector<1x1x256xf32>
    %110 = vector.shape_cast %109 : vector<1x1x256xf32> to vector<1x256xf32>
    %111 = vector.broadcast %110 : vector<1x256xf32> to vector<16x256xf32>
    %112 = arith.addf %108, %111 : vector<16x256xf32>
    %113 = arith.truncf %112 : vector<16x256xf32> to vector<16x256xbf16>
    %cst_50 = arith.constant 1.703130e+00 : bf16
    %114 = vector.broadcast %cst_50 : bf16 to vector<16x256xbf16>
    %115 = arith.mulf %114, %113 : vector<16x256xbf16>
    %116 = arith.negf %115 : vector<16x256xbf16>
    %117 = math.exp %116 : vector<16x256xbf16>
    %cst_51 = arith.constant 1.000000e+00 : bf16
    %118 = vector.broadcast %cst_51 : bf16 to vector<16x256xbf16>
    %119 = arith.addf %118, %117 : vector<16x256xbf16>
    %120 = arith.divf %118, %119 : vector<16x256xbf16>
    %121 = arith.mulf %113, %120 : vector<16x256xbf16>
    %c0_52 = arith.constant 0 : index
    %c0_53 = arith.constant 0 : index
    %c0_54 = arith.constant 0 : index
    %122 = vector.load %arg14[%c0_52, %c0_53, %c0_54] : memref<1x256x128xbf16, #tpu.memory_space<vmem>>, vector<1x256x128xbf16>
    %123 = vector.shape_cast %122 : vector<1x256x128xbf16> to vector<256x128xbf16>
    %cst_55 = arith.constant dense<0.000000e+00> : vector<16x128xf32>
    %124 = tpu.matmul %121, %123, %cst_55 {dimension_numbers = #tpu.dot_dimension_numbers<[1], [0], [0], [1], [0, 0, 1, 1], [], []>} : vector<16x256xbf16>, vector<256x128xbf16>, vector<16x128xf32> -> vector<16x128xf32>
    %c0_56 = arith.constant 0 : index
    %c0_57 = arith.constant 0 : index
    %c0_58 = arith.constant 0 : index
    %125 = vector.load %arg15[%c0_56, %c0_57, %c0_58] : memref<1x1x128xf32, #tpu.memory_space<vmem>>, vector<1x1x128xf32>
    %126 = vector.shape_cast %125 : vector<1x1x128xf32> to vector<1x128xf32>
    %127 = vector.broadcast %126 : vector<1x128xf32> to vector<16x128xf32>
    %128 = arith.addf %124, %127 : vector<16x128xf32>
    %129 = arith.addf %78, %128 : vector<16x128xf32>
    %c1_i32 = arith.constant 1 : i32
    %130 = arith.cmpi slt, %arg1, %c1_i32 : i32
    %131 = arith.extui %130 : i1 to i32
    %c0_i32_59 = arith.constant 0 : i32
    %132 = arith.cmpi ne, %131, %c0_i32_59 : i32
    scf.if %132 {
      %c0_62 = arith.constant 0 : index
      %c0_63 = arith.constant 0 : index
      %136 = vector.load %arg18[%c0_62, %c0_63] : memref<16x128xf32, #tpu.memory_space<vmem>>, vector<16x128xf32>
      tpu.vector_store %arg18[%c0_62, %c0_63], %129 {strides = array<i32>} : memref<16x128xf32, #tpu.memory_space<vmem>>, vector<16x128xf32>,
    } else {
    }
    %c1_i32_60 = arith.constant 1 : i32
    %133 = arith.cmpi eq, %arg1, %c1_i32_60 : i32
    %134 = arith.extui %133 : i1 to i32
    %c0_i32_61 = arith.constant 0 : i32
    %135 = arith.cmpi ne, %134, %c0_i32_61 : i32
    scf.if %135 {
      %c0_62 = arith.constant 0 : index
      %c0_63 = arith.constant 0 : index
      %c0_64 = arith.constant 0 : index
      %136 = vector.load %arg16[%c0_62, %c0_63, %c0_64] : memref<1x1x128xf32, #tpu.memory_space<vmem>>, vector<1x1x128xf32>
      %137 = vector.shape_cast %136 : vector<1x1x128xf32> to vector<1x128xf32>
      %c0_65 = arith.constant 0 : index
      %c0_66 = arith.constant 0 : index
      %c0_67 = arith.constant 0 : index
      %138 = vector.load %arg17[%c0_65, %c0_66, %c0_67] : memref<1x1x128xf32, #tpu.memory_space<vmem>>, vector<1x1x128xf32>
      %139 = vector.shape_cast %138 : vector<1x1x128xf32> to vector<1x128xf32>
      %cst_68 = arith.constant dense<0.000000e+00> : vector<16xf32>
      %140 = vector.multi_reduction <add>, %129, %cst_68 [1] : vector<16x128xf32> to vector<16xf32>
      %141 = vector.shape_cast %140 : vector<16xf32> to vector<16x1xf32>
      %cst_69 = arith.constant 1.280000e+02 : f32
      %142 = vector.broadcast %cst_69 : f32 to vector<16x1xf32>
      %143 = arith.divf %141, %142 : vector<16x1xf32>
      %144 = vector.broadcast %143 : vector<16x1xf32> to vector<16x128xf32>
      %145 = arith.subf %129, %144 : vector<16x128xf32>
      %146 = arith.mulf %145, %145 : vector<16x128xf32>
      %cst_70 = arith.constant dense<0.000000e+00> : vector<16xf32>
      %147 = vector.multi_reduction <add>, %146, %cst_70 [1] : vector<16x128xf32> to vector<16xf32>
      %148 = vector.shape_cast %147 : vector<16xf32> to vector<16x1xf32>
      %cst_71 = arith.constant 1.280000e+02 : f32
      %149 = vector.broadcast %cst_71 : f32 to vector<16x1xf32>
      %150 = arith.divf %148, %149 : vector<16x1xf32>
      %151 = vector.broadcast %143 : vector<16x1xf32> to vector<16x128xf32>
      %152 = arith.subf %129, %151 : vector<16x128xf32>
      %cst_72 = arith.constant 9.99999974E-6 : f32
      %153 = vector.broadcast %cst_72 : f32 to vector<16x1xf32>
      %154 = arith.addf %150, %153 : vector<16x1xf32>
      %155 = math.rsqrt %154 : vector<16x1xf32>
      %156 = vector.broadcast %155 : vector<16x1xf32> to vector<16x128xf32>
      %157 = arith.mulf %152, %156 : vector<16x128xf32>
      %158 = vector.broadcast %137 : vector<1x128xf32> to vector<16x128xf32>
      %159 = arith.mulf %157, %158 : vector<16x128xf32>
      %160 = vector.broadcast %139 : vector<1x128xf32> to vector<16x128xf32>
      %161 = arith.addf %159, %160 : vector<16x128xf32>
      %c0_73 = arith.constant 0 : index
      %c0_74 = arith.constant 0 : index
      %162 = vector.load %arg18[%c0_73, %c0_74] : memref<16x128xf32, #tpu.memory_space<vmem>>, vector<16x128xf32>
      tpu.vector_store %arg18[%c0_73, %c0_74], %161 {strides = array<i32>} : memref<16x128xf32, #tpu.memory_space<vmem>>, vector<16x128xf32>,
    } else {
    }
    return
  }
  func.func @transform_0(%arg0: i32, %arg1: i32) -> (i32, i32) {
    %c0_i32 = arith.constant 0 : i32
    %c0_i32_0 = arith.constant 0 : i32
    return %arg0, %c0_i32 : i32, i32
  }
  func.func @transform_1(%arg0: i32, %arg1: i32) -> (i32, i32) {
    %c0_i32 = arith.constant 0 : i32
    %c0_i32_0 = arith.constant 0 : i32
    %c0_i32_1 = arith.constant 0 : i32
    return %c0_i32, %c0_i32_0 : i32, i32
  }
  func.func @transform_2(%arg0: i32, %arg1: i32) -> (i32, i32, i32) {
    %c0_i32 = arith.constant 0 : i32
    %c0_i32_0 = arith.constant 0 : i32
    %c0_i32_1 = arith.constant 0 : i32
    return %arg1, %c0_i32, %c0_i32_0 : i32, i32, i32
  }
  func.func @transform_3(%arg0: i32, %arg1: i32) -> (i32, i32, i32) {
    %c0_i32 = arith.constant 0 : i32
    %c0_i32_0 = arith.constant 0 : i32
    %c0_i32_1 = arith.constant 0 : i32
    return %arg1, %c0_i32, %c0_i32_0 : i32, i32, i32
  }
  func.func @transform_4(%arg0: i32, %arg1: i32) -> (i32, i32, i32) {
    %c0_i32 = arith.constant 0 : i32
    %c0_i32_0 = arith.constant 0 : i32
    %c0_i32_1 = arith.constant 0 : i32
    return %arg1, %c0_i32, %c0_i32_0 : i32, i32, i32
  }
  func.func @transform_5(%arg0: i32, %arg1: i32) -> (i32, i32, i32) {
    %c0_i32 = arith.constant 0 : i32
    %c0_i32_0 = arith.constant 0 : i32
    %c0_i32_1 = arith.constant 0 : i32
    return %arg1, %c0_i32, %c0_i32_0 : i32, i32, i32
  }
  func.func @transform_6(%arg0: i32, %arg1: i32) -> (i32, i32, i32) {
    %c0_i32 = arith.constant 0 : i32
    %c0_i32_0 = arith.constant 0 : i32
    %c0_i32_1 = arith.constant 0 : i32
    return %arg1, %c0_i32, %c0_i32_0 : i32, i32, i32
  }
  func.func @transform_7(%arg0: i32, %arg1: i32) -> (i32, i32, i32) {
    %c0_i32 = arith.constant 0 : i32
    %c0_i32_0 = arith.constant 0 : i32
    %c0_i32_1 = arith.constant 0 : i32
    return %arg1, %c0_i32, %c0_i32_0 : i32, i32, i32
  }
  func.func @transform_8(%arg0: i32, %arg1: i32) -> (i32, i32, i32) {
    %c0_i32 = arith.constant 0 : i32
    %c0_i32_0 = arith.constant 0 : i32
    %c0_i32_1 = arith.constant 0 : i32
    return %arg1, %c0_i32, %c0_i32_0 : i32, i32, i32
  }
  func.func @transform_9(%arg0: i32, %arg1: i32) -> (i32, i32, i32) {
    %c0_i32 = arith.constant 0 : i32
    %c0_i32_0 = arith.constant 0 : i32
    %c0_i32_1 = arith.constant 0 : i32
    return %arg1, %c0_i32, %c0_i32_0 : i32, i32, i32
  }
  func.func @transform_10(%arg0: i32, %arg1: i32) -> (i32, i32, i32) {
    %c0_i32 = arith.constant 0 : i32
    %c0_i32_0 = arith.constant 0 : i32
    %c0_i32_1 = arith.constant 0 : i32
    return %arg1, %c0_i32, %c0_i32_0 : i32, i32, i32
  }
  func.func @transform_11(%arg0: i32, %arg1: i32) -> (i32, i32, i32) {
    %c0_i32 = arith.constant 0 : i32
    %c0_i32_0 = arith.constant 0 : i32
    %c0_i32_1 = arith.constant 0 : i32
    return %arg1, %c0_i32, %c0_i32_0 : i32, i32, i32
  }
  func.func @transform_12(%arg0: i32, %arg1: i32) -> (i32, i32, i32) {
    %c0_i32 = arith.constant 0 : i32
    %c0_i32_0 = arith.constant 0 : i32
    %c0_i32_1 = arith.constant 0 : i32
    return %arg1, %c0_i32, %c0_i32_0 : i32, i32, i32
  }
  func.func @transform_13(%arg0: i32, %arg1: i32) -> (i32, i32, i32) {
    %c0_i32 = arith.constant 0 : i32
    %c0_i32_0 = arith.constant 0 : i32
    %c0_i32_1 = arith.constant 0 : i32
    return %arg1, %c0_i32, %c0_i32_0 : i32, i32, i32
  }
  func.func @transform_14(%arg0: i32, %arg1: i32) -> (i32, i32, i32) {
    %c0_i32 = arith.constant 0 : i32
    %c0_i32_0 = arith.constant 0 : i32
    %c0_i32_1 = arith.constant 0 : i32
    %c0_i32_2 = arith.constant 0 : i32
    return %c0_i32, %c0_i32_0, %c0_i32_1 : i32, i32, i32
  }
  func.func @transform_15(%arg0: i32, %arg1: i32) -> (i32, i32, i32) {
    %c0_i32 = arith.constant 0 : i32
    %c0_i32_0 = arith.constant 0 : i32
    %c0_i32_1 = arith.constant 0 : i32
    %c0_i32_2 = arith.constant 0 : i32
    return %c0_i32, %c0_i32_0, %c0_i32_1 : i32, i32, i32
  }
  func.func @transform_16(%arg0: i32, %arg1: i32) -> (i32, i32) {
    %c0_i32 = arith.constant 0 : i32
    %c0_i32_0 = arith.constant 0 : i32
    return %arg0, %c0_i32 : i32, i32
  }
}

</mosaic_0001>

<llo_original>
// kernel: tpu_custom_call.1
$region0: #{tpu_custom_call.1}
  #allocation0 [shape = 'u32[]', space=smem, size = 0x4, offset = 0x4, fixed_abs, tag = 'smem constant byte address 0x4 - core index']
  #allocation1 [shape = 'u32[144,128]{1,0:T(1,128)}', space=vmem, size = 0x12000, scoped, tag = 'internal scratch']
  %s0 = inlined_call_operand.hbm [shape: f32[32,128], index: 0, kind: input, shape index: {}]
  %s1 = inlined_call_operand.hbm [shape: f32[16,16], index: 1, kind: input, shape index: {}]
  %s2 = inlined_call_operand.hbm [shape: f32[2,1,128], index: 2, kind: input, shape index: {}]
  %s3 = inlined_call_operand.hbm [shape: f32[2,1,128], index: 3, kind: input, shape index: {}]
  %s4 = inlined_call_operand.hbm [shape: bf16[2,128,384], index: 4, kind: input, shape index: {}]
  %s5 = inlined_call_operand.vmem [shape: f32[2,1,384], index: 5, kind: input, shape index: {}]
  %s6 = inlined_call_operand.hbm [shape: bf16[2,128,128], index: 6, kind: input, shape index: {}]
  %s7 = inlined_call_operand.vmem [shape: f32[2,1,128], index: 7, kind: input, shape index: {}]
  %s8 = inlined_call_operand.vmem [shape: f32[2,1,128], index: 8, kind: input, shape index: {}]
  %s9 = inlined_call_operand.vmem [shape: f32[2,1,128], index: 9, kind: input, shape index: {}]
  %s10 = inlined_call_operand.hbm [shape: bf16[2,128,256], index: 10, kind: input, shape index: {}]
  %s11 = inlined_call_operand.vmem [shape: f32[2,1,256], index: 11, kind: input, shape index: {}]
  %s12 = inlined_call_operand.hbm [shape: bf16[2,256,128], index: 12, kind: input, shape index: {}]
  %s13 = inlined_call_operand.vmem [shape: f32[2,1,128], index: 13, kind: input, shape index: {}]
  %s14 = inlined_call_operand.vmem [shape: f32[1,1,128], index: 14, kind: input, shape index: {}]
  %s15 = inlined_call_operand.vmem [shape: f32[1,1,128], index: 15, kind: input, shape index: {}]
  %s16 = inlined_call_operand.hbm [shape: f32[32,128], index: 16, kind: output, shape index: {}]
  %s17 = sld [smem:[#allocation0]]
  $region141: #{tpu_custom_call.1} parent=0
    _
  %s19 = ssub.s32 1, %s17
  %s20 = scalar_select 0, %s19, %s17
  $region1: #{tpu_custom_call.1} parent=0
    #allocation2 [shape = 'u8[16384]{0}', space=vmem, size = 0x4000, scoped, tag = 'input window, operand 0']
    #allocation3 [shape = 's32[2]{0}', space=sflag, size = 0x8, scoped, tag = 'scoped memory for tpu_custom_call.1']
    #allocation4 [shape = 's32[2]{0}', space=sflag, size = 0x8, scoped, tag = 'scoped memory for tpu_custom_call.1']
    #allocation5 [shape = 'u8[8192]{0}', space=vmem, size = 0x2000, scoped, tag = 'input window, operand 1, single buffered']
    #allocation6 [shape = 's32[1]{0}', space=sflag, size = 0x4, scoped, tag = 'scoped memory for tpu_custom_call.1']
    #allocation7 [shape = 'u8[1024]{0}', space=vmem, size = 0x400, scoped, tag = 'input window, operand 2']
    #allocation8 [shape = 'u8[1024]{0}', space=vmem, size = 0x400, scoped, tag = 'input window, operand 3']
    #allocation9 [shape = 'u8[196608]{0}', space=vmem, size = 0x30000, scoped, tag = 'input window, operand 4']
    #allocation10 [shape = 'u8[65536]{0}', space=vmem, size = 0x10000, scoped, tag = 'input window, operand 6']
    #allocation11 [shape = 'u8[131072]{0}', space=vmem, size = 0x20000, scoped, tag = 'input window, operand 10']
    #allocation12 [shape = 'u8[131072]{0}', space=vmem, size = 0x20000, scoped, tag = 'input window, operand 12']
    #allocation13 [shape = 'u8[16384]{0}', space=vmem, size = 0x4000, scoped, tag = 'output window, operand 0']
    %21 = vsyncpa [#allocation3], 0
    %s22 = scalar_lea.sflag [#allocation3], 1
    %23 = vsyncpa %s22, 0
    %24 = vsyncpa [#allocation6], 0
    %25 = vsyncpa [#allocation4], 0
    %s26 = scalar_lea.sflag [#allocation4], 1
    %27 = vsyncpa %s26, 0
    loop: start=0, step=1, limit=6
    $region2: #{tpu_custom_call.1} parent=1 // loop_pre_header
      _
    $region3: #{tpu_custom_call.1} parent=1 // loop_header
      %s29 = sphi 0, %s33
      %p30 = scmp.ge.s32.totalorder %s29, 6
      %s36 = sphi 0, %s48
      %s37 = sphi 0, %s44
      %s38 = sphi 0, %s36
      %s39 = sphi 0, %s37
      %s40 = sphi 0, %s38
      %s41 = sphi 0, %s39
      %s51 = sphi 0, %s53
      %s54 = sphi 0, %s51
      %s55 = sphi 0, %s54
      %s71 = sphi 0, %s55
      %s75 = sphi 0, %s75
      %s77 = sphi 0, %s75
      %s78 = sphi 0, %s77
      %s92 = sphi 0, %s78
      %s98 = sphi 0, %s100
      %s101 = sphi 0, %s98
      %s102 = sphi 0, %s101
      %s118 = sphi 0, %s102
      %s124 = sphi 0, %s126
      %s127 = sphi 0, %s124
      %s128 = sphi 0, %s127
      %s144 = sphi 0, %s128
      %s150 = sphi 0, %s152
      %s153 = sphi 0, %s150
      %s154 = sphi 0, %s153
      %s170 = sphi 0, %s154
      %s176 = sphi 0, %s178
      %s179 = sphi 0, %s176
      %s180 = sphi 0, %s179
      %s196 = sphi 0, %s180
      %s202 = sphi 0, %s204
      %s205 = sphi 0, %s202
      %s206 = sphi 0, %s205
      %s222 = sphi 0, %s206
      %s228 = sphi 0, %s230
      %s231 = sphi 0, %s228
      %s232 = sphi 0, %s231
      %s248 = sphi 0, %s232
      %s254 = sphi 0, %s256
      %s257 = sphi 0, %s254
      %s258 = sphi 0, %s257
      %s274 = sphi 0, %s258
      %s280 = sphi 0, %s282
      %s283 = sphi 0, %s280
      %s284 = sphi 0, %s283
      %s300 = sphi 0, %s284
      %s306 = sphi 0, %s308
      %s309 = sphi 0, %s306
      %s310 = sphi 0, %s309
      %s326 = sphi 0, %s310
      %s332 = sphi 0, %s334
      %s335 = sphi 0, %s332
      %s336 = sphi 0, %s335
      %s352 = sphi 0, %s336
      %s358 = sphi 0, %s360
      %s361 = sphi 0, %s358
      %s362 = sphi 0, %s361
      %s378 = sphi 0, %s362
      %s384 = sphi 0, %s386
      %s387 = sphi 0, %s384
      %s388 = sphi 0, %s387
      %s404 = sphi 0, %s388
      %s408 = sphi 0, %s408
      %s410 = sphi 0, %s408
      %s411 = sphi 0, %s410
      %s425 = sphi 0, %s411
      %s429 = sphi 0, %s429
      %s431 = sphi 0, %s429
      %s432 = sphi 0, %s431
      %s446 = sphi 0, %s432
      %s452 = sphi 0, %s454
      %s455 = sphi 0, %s452
      %s456 = sphi 0, %s455
      %s472 = sphi 0, %s456
    $region4: #{tpu_custom_call.1} parent=1 // loop_header_branch
      %32 = sbr.rel (%p30) target = $region8
    $region5: #{tpu_custom_call.1} parent=1 // loop_body
      %s34 = ssub.s32 %s29, 1
      %s35 = ssub.s32 %s29, 2
      %s42 = sadd.s32 1, %s37
      %p43 = scmp.ge.s32.totalorder %s42, 2
      %s44 = scalar_select %p43, 0, %s42
      %s45 = sadd.s32 1, %s36
      %s46 = scalar_select %p43, %s45, %s36
      %p47 = scmp.ge.s32.totalorder %s46, 2
      %s48 = scalar_select %p47, 0, %s46
      %s49 = ssub.s32 %s36, %s48
      %p50 = scmp.eq.s32.totalorder %s49, 0
      %s52 = sadd.s32 %s51, 1
      %s53 = scalar_select %p50, %s51, %s52
      %p56 = pneg %p50
      %p57 = scmp.eq.s32.totalorder %s29, 3
      %p58 = por %p56, %p57
      %p59 = scmp.ne.s32.totalorder %s51, %s54
      %p60 = scmp.eq.s32.totalorder %s29, 0
      %p61 = por %p59, %p60
      %p62 = scmp.ne.s32.totalorder %s51, %s54
      %p63 = scmp.eq.s32.totalorder %s34, 3
      %p64 = por %p62, %p63
      %p65 = scmp.ne.s32.totalorder %s54, %s55
      %p66 = scmp.eq.s32.totalorder %s34, 0
      %p67 = por %p65, %p66
      %p68 = scmp.ne.s32.totalorder %s54, %s55
      %p69 = scmp.eq.s32.totalorder %s35, 3
      %p70 = por %p68, %p69
      %p72 = scmp.ne.s32.totalorder %s55, %s71
      %p73 = scmp.eq.s32.totalorder %s35, 0
      %p74 = por %p72, %p73
      %s76 = sadd.s32 %s75, 1
      %p79 = scmp.eq.s32.totalorder %s29, 3
      %p80 = scmp.ne.s32.totalorder %s75, %s77
      %p81 = scmp.eq.s32.totalorder %s29, 0
      %p82 = por %p80, %p81
      %p83 = scmp.ne.s32.totalorder %s75, %s77
      %p84 = scmp.eq.s32.totalorder %s34, 3
      %p85 = por %p83, %p84
      %p86 = scmp.ne.s32.totalorder %s77, %s78
      %p87 = scmp.eq.s32.totalorder %s34, 0
      %p88 = por %p86, %p87
      %p89 = scmp.ne.s32.totalorder %s77, %s78
      %p90 = scmp.eq.s32.totalorder %s35, 3
      %p91 = por %p89, %p90
      %p93 = scmp.ne.s32.totalorder %s78, %s92
      %p94 = scmp.eq.s32.totalorder %s35, 0
      %p95 = por %p93, %p94
      %s96 = ssub.s32 %s37, %s44
      %p97 = scmp.eq.s32.totalorder %s96, 0
      %s99 = sadd.s32 %s98, 1
      %s100 = scalar_select %p97, %s98, %s99
      %p103 = pneg %p97
      %p104 = scmp.eq.s32.totalorder %s29, 3
      %p105 = por %p103, %p104
      %p106 = scmp.ne.s32.totalorder %s98, %s101
      %p107 = scmp.eq.s32.totalorder %s29, 0
      %p108 = por %p106, %p107
      %p109 = scmp.ne.s32.totalorder %s98, %s101
      %p110 = scmp.eq.s32.totalorder %s34, 3
      %p111 = por %p109, %p110
      %p112 = scmp.ne.s32.totalorder %s101, %s102
      %p113 = scmp.eq.s32.totalorder %s34, 0
      %p114 = por %p112, %p113
      %p115 = scmp.ne.s32.totalorder %s101, %s102
      %p116 = scmp.eq.s32.totalorder %s35, 3
      %p117 = por %p115, %p116
      %p119 = scmp.ne.s32.totalorder %s102, %s118
      %p120 = scmp.eq.s32.totalorder %s35, 0
      %p121 = por %p119, %p120
      %s122 = ssub.s32 %s37, %s44
      %p123 = scmp.eq.s32.totalorder %s122, 0
      %s125 = sadd.s32 %s124, 1
      %s126 = scalar_select %p123, %s124, %s125
      %p129 = pneg %p123
      %p130 = scmp.eq.s32.totalorder %s29, 3
      %p131 = por %p129, %p130
      %p132 = scmp.ne.s32.totalorder %s124, %s127
      %p133 = scmp.eq.s32.totalorder %s29, 0
      %p134 = por %p132, %p133
      %p135 = scmp.ne.s32.totalorder %s124, %s127
      %p136 = scmp.eq.s32.totalorder %s34, 3
      %p137 = por %p135, %p136
      %p138 = scmp.ne.s32.totalorder %s127, %s128
      %p139 = scmp.eq.s32.totalorder %s34, 0
      %p140 = por %p138, %p139
      %p141 = scmp.ne.s32.totalorder %s127, %s128
      %p142 = scmp.eq.s32.totalorder %s35, 3
      %p143 = por %p141, %p142
      %p145 = scmp.ne.s32.totalorder %s128, %s144
      %p146 = scmp.eq.s32.totalorder %s35, 0
      %p147 = por %p145, %p146
      %s148 = ssub.s32 %s37, %s44
      %p149 = scmp.eq.s32.totalorder %s148, 0
      %s151 = sadd.s32 %s150, 1
      %s152 = scalar_select %p149, %s150, %s151
      %p155 = pneg %p149
      %p156 = scmp.eq.s32.totalorder %s29, 3
      %p157 = por %p155, %p156
      %p158 = scmp.ne.s32.totalorder %s150, %s153
      %p159 = scmp.eq.s32.totalorder %s29, 0
      %p160 = por %p158, %p159
      %p161 = scmp.ne.s32.totalorder %s150, %s153
      %p162 = scmp.eq.s32.totalorder %s34, 3
      %p163 = por %p161, %p162
      %p164 = scmp.ne.s32.totalorder %s153, %s154
      %p165 = scmp.eq.s32.totalorder %s34, 0
      %p166 = por %p164, %p165
      %p167 = scmp.ne.s32.totalorder %s153, %s154
      %p168 = scmp.eq.s32.totalorder %s35, 3
      %p169 = por %p167, %p168
      %p171 = scmp.ne.s32.totalorder %s154, %s170
      %p172 = scmp.eq.s32.totalorder %s35, 0
      %p173 = por %p171, %p172
      %s174 = ssub.s32 %s37, %s44
      %p175 = scmp.eq.s32.totalorder %s174, 0
      %s177 = sadd.s32 %s176, 1
      %s178 = scalar_select %p175, %s176, %s177
      %p181 = pneg %p175
      %p182 = scmp.eq.s32.totalorder %s29, 3
      %p183 = por %p181, %p182
      %p184 = scmp.ne.s32.totalorder %s176, %s179
      %p185 = scmp.eq.s32.totalorder %s29, 0
      %p186 = por %p184, %p185
      %p187 = scmp.ne.s32.totalorder %s176, %s179
      %p188 = scmp.eq.s32.totalorder %s34, 3
      %p189 = por %p187, %p188
      %p190 = scmp.ne.s32.totalorder %s179, %s180
      %p191 = scmp.eq.s32.totalorder %s34, 0
      %p192 = por %p190, %p191
      %p193 = scmp.ne.s32.totalorder %s179, %s180
      %p194 = scmp.eq.s32.totalorder %s35, 3
      %p195 = por %p193, %p194
      %p197 = scmp.ne.s32.totalorder %s180, %s196
      %p198 = scmp.eq.s32.totalorder %s35, 0
      %p199 = por %p197, %p198
      %s200 = ssub.s32 %s37, %s44
      %p201 = scmp.eq.s32.totalorder %s200, 0
      %s203 = sadd.s32 %s202, 1
      %s204 = scalar_select %p201, %s202, %s203
      %p207 = pneg %p201
      %p208 = scmp.eq.s32.totalorder %s29, 3
      %p209 = por %p207, %p208
      %p210 = scmp.ne.s32.totalorder %s202, %s205
      %p211 = scmp.eq.s32.totalorder %s29, 0
      %p212 = por %p210, %p211
      %p213 = scmp.ne.s32.totalorder %s202, %s205
      %p214 = scmp.eq.s32.totalorder %s34, 3
      %p215 = por %p213, %p214
      %p216 = scmp.ne.s32.totalorder %s205, %s206
      %p217 = scmp.eq.s32.totalorder %s34, 0
      %p218 = por %p216, %p217
      %p219 = scmp.ne.s32.totalorder %s205, %s206
      %p220 = scmp.eq.s32.totalorder %s35, 3
      %p221 = por %p219, %p220
      %p223 = scmp.ne.s32.totalorder %s206, %s222
      %p224 = scmp.eq.s32.totalorder %s35, 0
      %p225 = por %p223, %p224
      %s226 = ssub.s32 %s37, %s44
      %p227 = scmp.eq.s32.totalorder %s226, 0
      %s229 = sadd.s32 %s228, 1
      %s230 = scalar_select %p227, %s228, %s229
      %p233 = pneg %p227
      %p234 = scmp.eq.s32.totalorder %s29, 3
      %p235 = por %p233, %p234
      %p236 = scmp.ne.s32.totalorder %s228, %s231
      %p237 = scmp.eq.s32.totalorder %s29, 0
      %p238 = por %p236, %p237
      %p239 = scmp.ne.s32.totalorder %s228, %s231
      %p240 = scmp.eq.s32.totalorder %s34, 3
      %p241 = por %p239, %p240
      %p242 = scmp.ne.s32.totalorder %s231, %s232
      %p243 = scmp.eq.s32.totalorder %s34, 0
      %p244 = por %p242, %p243
      %p245 = scmp.ne.s32.totalorder %s231, %s232
      %p246 = scmp.eq.s32.totalorder %s35, 3
      %p247 = por %p245, %p246
      %p249 = scmp.ne.s32.totalorder %s232, %s248
      %p250 = scmp.eq.s32.totalorder %s35, 0
      %p251 = por %p249, %p250
      %s252 = ssub.s32 %s37, %s44
      %p253 = scmp.eq.s32.totalorder %s252, 0
      %s255 = sadd.s32 %s254, 1
      %s256 = scalar_select %p253, %s254, %s255
      %p259 = pneg %p253
      %p260 = scmp.eq.s32.totalorder %s29, 3
      %p261 = por %p259, %p260
      %p262 = scmp.ne.s32.totalorder %s254, %s257
      %p263 = scmp.eq.s32.totalorder %s29, 0
      %p264 = por %p262, %p263
      %p265 = scmp.ne.s32.totalorder %s254, %s257
      %p266 = scmp.eq.s32.totalorder %s34, 3
      %p267 = por %p265, %p266
      %p268 = scmp.ne.s32.totalorder %s257, %s258
      %p269 = scmp.eq.s32.totalorder %s34, 0
      %p270 = por %p268, %p269
      %p271 = scmp.ne.s32.totalorder %s257, %s258
      %p272 = scmp.eq.s32.totalorder %s35, 3
      %p273 = por %p271, %p272
      %p275 = scmp.ne.s32.totalorder %s258, %s274
      %p276 = scmp.eq.s32.totalorder %s35, 0
      %p277 = por %p275, %p276
      %s278 = ssub.s32 %s37, %s44
      %p279 = scmp.eq.s32.totalorder %s278, 0
      %s281 = sadd.s32 %s280, 1
      %s282 = scalar_select %p279, %s280, %s281
      %p285 = pneg %p279
      %p286 = scmp.eq.s32.totalorder %s29, 3
      %p287 = por %p285, %p286
      %p288 = scmp.ne.s32.totalorder %s280, %s283
      %p289 = scmp.eq.s32.totalorder %s29, 0
      %p290 = por %p288, %p289
      %p291 = scmp.ne.s32.totalorder %s280, %s283
      %p292 = scmp.eq.s32.totalorder %s34, 3
      %p293 = por %p291, %p292
      %p294 = scmp.ne.s32.totalorder %s283, %s284
      %p295 = scmp.eq.s32.totalorder %s34, 0
      %p296 = por %p294, %p295
      %p297 = scmp.ne.s32.totalorder %s283, %s284
      %p298 = scmp.eq.s32.totalorder %s35, 3
      %p299 = por %p297, %p298
      %p301 = scmp.ne.s32.totalorder %s284, %s300
      %p302 = scmp.eq.s32.totalorder %s35, 0
      %p303 = por %p301, %p302
      %s304 = ssub.s32 %s37, %s44
      %p305 = scmp.eq.s32.totalorder %s304, 0
      %s307 = sadd.s32 %s306, 1
      %s308 = scalar_select %p305, %s306, %s307
      %p311 = pneg %p305
      %p312 = scmp.eq.s32.totalorder %s29, 3
      %p313 = por %p311, %p312
      %p314 = scmp.ne.s32.totalorder %s306, %s309
      %p315 = scmp.eq.s32.totalorder %s29, 0
      %p316 = por %p314, %p315
      %p317 = scmp.ne.s32.totalorder %s306, %s309
      %p318 = scmp.eq.s32.totalorder %s34, 3
      %p319 = por %p317, %p318
      %p320 = scmp.ne.s32.totalorder %s309, %s310
      %p321 = scmp.eq.s32.totalorder %s34, 0
      %p322 = por %p320, %p321
      %p323 = scmp.ne.s32.totalorder %s309, %s310
      %p324 = scmp.eq.s32.totalorder %s35, 3
      %p325 = por %p323, %p324
      %p327 = scmp.ne.s32.totalorder %s310, %s326
      %p328 = scmp.eq.s32.totalorder %s35, 0
      %p329 = por %p327, %p328
      %s330 = ssub.s32 %s37, %s44
      %p331 = scmp.eq.s32.totalorder %s330, 0
      %s333 = sadd.s32 %s332, 1
      %s334 = scalar_select %p331, %s332, %s333
      %p337 = pneg %p331
      %p338 = scmp.eq.s32.totalorder %s29, 3
      %p339 = por %p337, %p338
      %p340 = scmp.ne.s32.totalorder %s332, %s335
      %p341 = scmp.eq.s32.totalorder %s29, 0
      %p342 = por %p340, %p341
      %p343 = scmp.ne.s32.totalorder %s332, %s335
      %p344 = scmp.eq.s32.totalorder %s34, 3
      %p345 = por %p343, %p344
      %p346 = scmp.ne.s32.totalorder %s335, %s336
      %p347 = scmp.eq.s32.totalorder %s34, 0
      %p348 = por %p346, %p347
      %p349 = scmp.ne.s32.totalorder %s335, %s336
      %p350 = scmp.eq.s32.totalorder %s35, 3
      %p351 = por %p349, %p350
      %p353 = scmp.ne.s32.totalorder %s336, %s352
      %p354 = scmp.eq.s32.totalorder %s35, 0
      %p355 = por %p353, %p354
      %s356 = ssub.s32 %s37, %s44
      %p357 = scmp.eq.s32.totalorder %s356, 0
      %s359 = sadd.s32 %s358, 1
      %s360 = scalar_select %p357, %s358, %s359
      %p363 = pneg %p357
      %p364 = scmp.eq.s32.totalorder %s29, 3
      %p365 = por %p363, %p364
      %p366 = scmp.ne.s32.totalorder %s358, %s361
      %p367 = scmp.eq.s32.totalorder %s29, 0
      %p368 = por %p366, %p367
      %p369 = scmp.ne.s32.totalorder %s358, %s361
      %p370 = scmp.eq.s32.totalorder %s34, 3
      %p371 = por %p369, %p370
      %p372 = scmp.ne.s32.totalorder %s361, %s362
      %p373 = scmp.eq.s32.totalorder %s34, 0
      %p374 = por %p372, %p373
      %p375 = scmp.ne.s32.totalorder %s361, %s362
      %p376 = scmp.eq.s32.totalorder %s35, 3
      %p377 = por %p375, %p376
      %p379 = scmp.ne.s32.totalorder %s362, %s378
      %p380 = scmp.eq.s32.totalorder %s35, 0
      %p381 = por %p379, %p380
      %s382 = ssub.s32 %s37, %s44
      %p383 = scmp.eq.s32.totalorder %s382, 0
      %s385 = sadd.s32 %s384, 1
      %s386 = scalar_select %p383, %s384, %s385
      %p389 = pneg %p383
      %p390 = scmp.eq.s32.totalorder %s29, 3
      %p391 = por %p389, %p390
      %p392 = scmp.ne.s32.totalorder %s384, %s387
      %p393 = scmp.eq.s32.totalorder %s29, 0
      %p394 = por %p392, %p393
      %p395 = scmp.ne.s32.totalorder %s384, %s387
      %p396 = scmp.eq.s32.totalorder %s34, 3
      %p397 = por %p395, %p396
      %p398 = scmp.ne.s32.totalorder %s387, %s388
      %p399 = scmp.eq.s32.totalorder %s34, 0
      %p400 = por %p398, %p399
      %p401 = scmp.ne.s32.totalorder %s387, %s388
      %p402 = scmp.eq.s32.totalorder %s35, 3
      %p403 = por %p401, %p402
      %p405 = scmp.ne.s32.totalorder %s388, %s404
      %p406 = scmp.eq.s32.totalorder %s35, 0
      %p407 = por %p405, %p406
      %s409 = sadd.s32 %s408, 1
      %p412 = scmp.eq.s32.totalorder %s29, 3
      %p413 = scmp.ne.s32.totalorder %s408, %s410
      %p414 = scmp.eq.s32.totalorder %s29, 0
      %p415 = por %p413, %p414
      %p416 = scmp.ne.s32.totalorder %s408, %s410
      %p417 = scmp.eq.s32.totalorder %s34, 3
      %p418 = por %p416, %p417
      %p419 = scmp.ne.s32.totalorder %s410, %s411
      %p420 = scmp.eq.s32.totalorder %s34, 0
      %p421 = por %p419, %p420
      %p422 = scmp.ne.s32.totalorder %s410, %s411
      %p423 = scmp.eq.s32.totalorder %s35, 3
      %p424 = por %p422, %p423
      %p426 = scmp.ne.s32.totalorder %s411, %s425
      %p427 = scmp.eq.s32.totalorder %s35, 0
      %p428 = por %p426, %p427
      %s430 = sadd.s32 %s429, 1
      %p433 = scmp.eq.s32.totalorder %s29, 3
      %p434 = scmp.ne.s32.totalorder %s429, %s431
      %p435 = scmp.eq.s32.totalorder %s29, 0
      %p436 = por %p434, %p435
      %p437 = scmp.ne.s32.totalorder %s429, %s431
      %p438 = scmp.eq.s32.totalorder %s34, 3
      %p439 = por %p437, %p438
      %p440 = scmp.ne.s32.totalorder %s431, %s432
      %p441 = scmp.eq.s32.totalorder %s34, 0
      %p442 = por %p440, %p441
      %p443 = scmp.ne.s32.totalorder %s431, %s432
      %p444 = scmp.eq.s32.totalorder %s35, 3
      %p445 = por %p443, %p444
      %p447 = scmp.ne.s32.totalorder %s432, %s446
      %p448 = scmp.eq.s32.totalorder %s35, 0
      %p449 = por %p447, %p448
      %s450 = ssub.s32 %s36, %s48
      %p451 = scmp.eq.s32.totalorder %s450, 0
      %s453 = sadd.s32 %s452, 1
      %s454 = scalar_select %p451, %s452, %s453
      %p457 = pneg %p451
      %p458 = scmp.eq.s32.totalorder %s29, 3
      %p459 = por %p457, %p458
      %p460 = scmp.ne.s32.totalorder %s452, %s455
      %p461 = scmp.eq.s32.totalorder %s29, 0
      %p462 = por %p460, %p461
      %p463 = scmp.ne.s32.totalorder %s452, %s455
      %p464 = scmp.eq.s32.totalorder %s34, 3
      %p465 = por %p463, %p464
      %p466 = scmp.ne.s32.totalorder %s455, %s456
      %p467 = scmp.eq.s32.totalorder %s34, 0
      %p468 = por %p466, %p467
      %p469 = scmp.ne.s32.totalorder %s455, %s456
      %p470 = scmp.eq.s32.totalorder %s35, 3
      %p471 = por %p469, %p470
      %p473 = scmp.ne.s32.totalorder %s456, %s472
      %p474 = scmp.eq.s32.totalorder %s35, 0
      %p475 = por %p473, %p474
      %p476 = scmp.le.s32.totalorder 1, %s29
      %p477 = scmp.lt.s32.totalorder %s29, 5
      %p478 = pnand %p476, %p477
      %p479 = pneg %p478
      // Predicated region
      $region9: #{tpu_custom_call.1} parent=5 // pred_check
        _
      $region10: #{tpu_custom_call.1} parent=5 // pred_check_branch
        %481 = sbr.rel (%p478) target = $region12
      $region11: #{tpu_custom_call.1} parent=5 // pred_region
        %s482 = ssub.s32 %s29, 1
        // Predicated region
        $region13: #{tpu_custom_call.1} parent=11 // pred_check
          %p483 = pneg %p88
        $region14: #{tpu_custom_call.1} parent=11 // pred_check_branch
          %485 = sbr.rel (%p483) target = $region16
        $region15: #{tpu_custom_call.1} parent=11 // pred_region
          %s487 = ssub.s32 256, 256
          %488 = vsyncadd [#allocation6], %s487
          %s489 = sshll.u32 [#allocation5], 4
          %s490 = int_to_ptr.vmem [resolvable:$true] %s489
          %495 = dma.hbm_to_vmem [thread:$0]  %s1, 256, %s490, [#allocation6], 128, 128, 8
        $region16: #{tpu_custom_call.1} parent=11 // pred_fallthru
          _
        // Predicated region
        $region17: #{tpu_custom_call.1} parent=11 // pred_check
          %p496 = pneg %p421
        $region18: #{tpu_custom_call.1} parent=11 // pred_check_branch
          %498 = sbr.rel (%p496) target = $region20
        $region19: #{tpu_custom_call.1} parent=11 // pred_region
          _
        $region20: #{tpu_custom_call.1} parent=11 // pred_fallthru
          _
        // Predicated region
        $region21: #{tpu_custom_call.1} parent=11 // pred_check
          %p499 = pneg %p442
        $region22: #{tpu_custom_call.1} parent=11 // pred_check_branch
          %501 = sbr.rel (%p499) target = $region24
        $region23: #{tpu_custom_call.1} parent=11 // pred_region
          _
        $region24: #{tpu_custom_call.1} parent=11 // pred_fallthru
          _
      $region12: #{tpu_custom_call.1} parent=5 // pred_fallthru
        _
      %p502 = scmp.lt.s32.totalorder %s29, 4
      // Predicated region
      $region25: #{tpu_custom_call.1} parent=5 // pred_check
        %p503 = pneg %p502
      $region26: #{tpu_custom_call.1} parent=5 // pred_check_branch
        %505 = sbr.rel (%p503) target = $region28
      $region27: #{tpu_custom_call.1} parent=5 // pred_region
        // Predicated region
        $region29: #{tpu_custom_call.1} parent=27 // pred_check
          %p506 = pneg %p61
        $region30: #{tpu_custom_call.1} parent=27 // pred_check_branch
          %508 = sbr.rel (%p506) target = $region32
        $region31: #{tpu_custom_call.1} parent=27 // pred_region
          %s509 = sand.u32 %s29, 1
          %s510 = scalar_lea.sflag [#allocation3], %s509
          %s511 = sand.u32 %s51, 1
          %s512 = smul.addr %s511, 16
          %s513 = scalar_lea.vmem [#allocation2], %s512
          %s514 = smul.u32 2, %s36
          %s516 = ssub.s32 256, 256
          %517 = vsyncadd %s510, %s516
          %s518 = smul.addr %s514, 128
          %s519 = scalar_lea.hbm %s0, %s518
          %s520 = sshll.u32 %s513, 4
          %s521 = int_to_ptr.vmem [resolvable:$true] %s520
          %526 = dma.hbm_to_vmem [thread:$0]  %s519, 256, %s521, %s510, 128, 128, 8
        $region32: #{tpu_custom_call.1} parent=27 // pred_fallthru
          _
        // Predicated region
        $region33: #{tpu_custom_call.1} parent=27 // pred_check
          %p527 = pneg %p108
        $region34: #{tpu_custom_call.1} parent=27 // pred_check_branch
          %529 = sbr.rel (%p527) target = $region36
        $region35: #{tpu_custom_call.1} parent=27 // pred_region
          %s530 = sand.u32 %s29, 1
          %s531 = scalar_lea.sflag [#allocation3], %s530
          %s532 = sand.u32 %s98, 1
          %s533 = scalar_lea.vmem [#allocation7], %s532
          %s535 = ssub.s32 16, 16
          %536 = vsyncadd %s531, %s535
          %s537 = smul.addr %s37, 16
          %s538 = scalar_lea.hbm %s2, %s537
          %s540 = sshll.u32 %s533, 4
          %s541 = int_to_ptr.vmem [resolvable:$true] %s540
          %543 = dma.hbm_to_vmem [thread:$0]  %s538, 16, %s541, %s531
        $region36: #{tpu_custom_call.1} parent=27 // pred_fallthru
          _
        // Predicated region
        $region37: #{tpu_custom_call.1} parent=27 // pred_check
          %p544 = pneg %p134
        $region38: #{tpu_custom_call.1} parent=27 // pred_check_branch
          %546 = sbr.rel (%p544) target = $region40
        $region39: #{tpu_custom_call.1} parent=27 // pred_region
          %s547 = sand.u32 %s29, 1
          %s548 = scalar_lea.sflag [#allocation3], %s547
          %s549 = sand.u32 %s124, 1
          %s550 = scalar_lea.vmem [#allocation8], %s549
          %s552 = ssub.s32 16, 16
          %553 = vsyncadd %s548, %s552
          %s554 = smul.addr %s37, 16
          %s555 = scalar_lea.hbm %s3, %s554
          %s557 = sshll.u32 %s550, 4
          %s558 = int_to_ptr.vmem [resolvable:$true] %s557
          %560 = dma.hbm_to_vmem [thread:$0]  %s555, 16, %s558, %s548
        $region40: #{tpu_custom_call.1} parent=27 // pred_fallthru
          _
        // Predicated region
        $region41: #{tpu_custom_call.1} parent=27 // pred_check
          %p561 = pneg %p160
        $region42: #{tpu_custom_call.1} parent=27 // pred_check_branch
          %563 = sbr.rel (%p561) target = $region44
        $region43: #{tpu_custom_call.1} parent=27 // pred_region
          %s564 = sand.u32 %s29, 1
          %s565 = scalar_lea.sflag [#allocation3], %s564
          %s566 = sand.u32 %s150, 1
          %s567 = smul.addr %s566, 192
          %s568 = scalar_lea.vmem [#allocation9], %s567
          %s570 = ssub.s32 3072, 3072
          %571 = vsyncadd %s565, %s570
          %s572 = smul.addr %s37, 48
          %s573 = smul.addr %s572, 64
          %s574 = scalar_lea.hbm %s4, %s573
          %s575 = sshll.u32 %s568, 4
          %s576 = int_to_ptr.vmem [resolvable:$true] %s575
          %581 = dma.hbm_to_vmem [thread:$0]  %s574, 3072, %s576, %s565, 192, 192, 12
        $region44: #{tpu_custom_call.1} parent=27 // pred_fallthru
          _
        // Predicated region
        $region45: #{tpu_custom_call.1} parent=27 // pred_check
          %p582 = pneg %p186
        $region46: #{tpu_custom_call.1} parent=27 // pred_check_branch
          %584 = sbr.rel (%p582) target = $region48
        $region47: #{tpu_custom_call.1} parent=27 // pred_region
          %p585 = scmp.lt.s32.totalorder %s37, 1
          %s586 = scalar_select %p585, %s37, 1
          %s587 = smul.addr %s586, 3
          %s588 = scalar_lea.vmem %s5, %s587
        $region48: #{tpu_custom_call.1} parent=27 // pred_fallthru
          _
        // Predicated region
        $region49: #{tpu_custom_call.1} parent=27 // pred_check
          %p589 = pneg %p212
        $region50: #{tpu_custom_call.1} parent=27 // pred_check_branch
          %591 = sbr.rel (%p589) target = $region52
        $region51: #{tpu_custom_call.1} parent=27 // pred_region
          %s592 = sand.u32 %s29, 1
          %s593 = scalar_lea.sflag [#allocation3], %s592
          %s594 = sand.u32 %s202, 1
          %s595 = smul.addr %s594, 64
          %s596 = scalar_lea.vmem [#allocation10], %s595
          %s598 = ssub.s32 1024, 1024
          %599 = vsyncadd %s593, %s598
          %s600 = smul.addr %s37, 16
          %s601 = smul.addr %s600, 64
          %s602 = scalar_lea.hbm %s6, %s601
          %s603 = sshll.u32 %s596, 4
          %s604 = int_to_ptr.vmem [resolvable:$true] %s603
          %609 = dma.hbm_to_vmem [thread:$0]  %s602, 1024, %s604, %s593, 64, 64, 4
        $region52: #{tpu_custom_call.1} parent=27 // pred_fallthru
          _
        // Predicated region
        $region53: #{tpu_custom_call.1} parent=27 // pred_check
          %p610 = pneg %p238
        $region54: #{tpu_custom_call.1} parent=27 // pred_check_branch
          %612 = sbr.rel (%p610) target = $region56
        $region55: #{tpu_custom_call.1} parent=27 // pred_region
          %p613 = scmp.lt.s32.totalorder %s37, 1
          %s614 = scalar_select %p613, %s37, 1
          %s615 = scalar_lea.vmem %s7, %s614
        $region56: #{tpu_custom_call.1} parent=27 // pred_fallthru
          _
        // Predicated region
        $region57: #{tpu_custom_call.1} parent=27 // pred_check
          %p616 = pneg %p264
        $region58: #{tpu_custom_call.1} parent=27 // pred_check_branch
          %618 = sbr.rel (%p616) target = $region60
        $region59: #{tpu_custom_call.1} parent=27 // pred_region
          %p619 = scmp.lt.s32.totalorder %s37, 1
          %s620 = scalar_select %p619, %s37, 1
          %s621 = scalar_lea.vmem %s8, %s620
        $region60: #{tpu_custom_call.1} parent=27 // pred_fallthru
          _
        // Predicated region
        $region61: #{tpu_custom_call.1} parent=27 // pred_check
          %p622 = pneg %p290
        $region62: #{tpu_custom_call.1} parent=27 // pred_check_branch
          %624 = sbr.rel (%p622) target = $region64
        $region63: #{tpu_custom_call.1} parent=27 // pred_region
          %p625 = scmp.lt.s32.totalorder %s37, 1
          %s626 = scalar_select %p625, %s37, 1
          %s627 = scalar_lea.vmem %s9, %s626
        $region64: #{tpu_custom_call.1} parent=27 // pred_fallthru
          _
        // Predicated region
        $region65: #{tpu_custom_call.1} parent=27 // pred_check
          %p628 = pneg %p316
        $region66: #{tpu_custom_call.1} parent=27 // pred_check_branch
          %630 = sbr.rel (%p628) target = $region68
        $region67: #{tpu_custom_call.1} parent=27 // pred_region
          %s631 = sand.u32 %s29, 1
          %s632 = scalar_lea.sflag [#allocation3], %s631
          %s633 = sand.u32 %s306, 1
          %s634 = smul.addr %s633, 128
          %s635 = scalar_lea.vmem [#allocation11], %s634
          %s637 = ssub.s32 2048, 2048
          %638 = vsyncadd %s632, %s637
          %s639 = smul.addr %s37, 32
          %s640 = smul.addr %s639, 64
          %s641 = scalar_lea.hbm %s10, %s640
          %s642 = sshll.u32 %s635, 4
          %s643 = int_to_ptr.vmem [resolvable:$true] %s642
          %648 = dma.hbm_to_vmem [thread:$0]  %s641, 2048, %s643, %s632, 128, 128, 8
        $region68: #{tpu_custom_call.1} parent=27 // pred_fallthru
          _
        // Predicated region
        $region69: #{tpu_custom_call.1} parent=27 // pred_check
          %p649 = pneg %p342
        $region70: #{tpu_custom_call.1} parent=27 // pred_check_branch
          %651 = sbr.rel (%p649) target = $region72
        $region71: #{tpu_custom_call.1} parent=27 // pred_region
          %p652 = scmp.lt.s32.totalorder %s37, 1
          %s653 = scalar_select %p652, %s37, 1
          %s654 = smul.addr %s653, 2
          %s655 = scalar_lea.vmem %s11, %s654
        $region72: #{tpu_custom_call.1} parent=27 // pred_fallthru
          _
        // Predicated region
        $region73: #{tpu_custom_call.1} parent=27 // pred_check
          %p656 = pneg %p368
        $region74: #{tpu_custom_call.1} parent=27 // pred_check_branch
          %658 = sbr.rel (%p656) target = $region76
        $region75: #{tpu_custom_call.1} parent=27 // pred_region
          %s659 = sand.u32 %s29, 1
          %s660 = scalar_lea.sflag [#allocation3], %s659
          %s661 = sand.u32 %s358, 1
          %s662 = smul.addr %s661, 128
          %s663 = scalar_lea.vmem [#allocation12], %s662
          %s665 = ssub.s32 2048, 2048
          %666 = vsyncadd %s660, %s665
          %s667 = smul.addr %s37, 32
          %s668 = smul.addr %s667, 64
          %s669 = scalar_lea.hbm %s12, %s668
          %s670 = sshll.u32 %s663, 4
          %s671 = int_to_ptr.vmem [resolvable:$true] %s670
          %676 = dma.hbm_to_vmem [thread:$0]  %s669, 2048, %s671, %s660, 64, 64, 4
        $region76: #{tpu_custom_call.1} parent=27 // pred_fallthru
          _
        // Predicated region
        $region77: #{tpu_custom_call.1} parent=27 // pred_check
          %p677 = pneg %p394
        $region78: #{tpu_custom_call.1} parent=27 // pred_check_branch
          %679 = sbr.rel (%p677) target = $region80
        $region79: #{tpu_custom_call.1} parent=27 // pred_region
          %p680 = scmp.lt.s32.totalorder %s37, 1
          %s681 = scalar_select %p680, %s37, 1
          %s682 = scalar_lea.vmem %s13, %s681
        $region80: #{tpu_custom_call.1} parent=27 // pred_fallthru
          _
      $region28: #{tpu_custom_call.1} parent=5 // pred_fallthru
        _
      %p683 = scmp.le.s32.totalorder 1, %s29
      %p684 = scmp.lt.s32.totalorder %s29, 5
      %p685 = pnand %p683, %p684
      %p686 = pneg %p685
      // Predicated region
      $region81: #{tpu_custom_call.1} parent=5 // pred_check
        _
      $region82: #{tpu_custom_call.1} parent=5 // pred_check_branch
        %688 = sbr.rel (%p685) target = $region84
      $region83: #{tpu_custom_call.1} parent=5 // pred_region
        %s689 = ssub.s32 %s29, 1
        %s690 = sand.u32 %s34, 1
        %s691 = scalar_lea.sflag [#allocation3], %s690
        %s692 = sand.u32 %s54, 1
        %s693 = smul.addr %s692, 16
        %s694 = scalar_lea.vmem [#allocation2], %s693
        // Predicated region
        $region85: #{tpu_custom_call.1} parent=83 // pred_check
          %p695 = pneg %p67
        $region86: #{tpu_custom_call.1} parent=83 // pred_check_branch
          %697 = sbr.rel (%p695) target = $region88
        $region87: #{tpu_custom_call.1} parent=83 // pred_region
          %698 = dma.done %s691, 256
        $region88: #{tpu_custom_call.1} parent=83 // pred_fallthru
          _
        // Predicated region
        $region89: #{tpu_custom_call.1} parent=83 // pred_check
          %p699 = pneg %p88
        $region90: #{tpu_custom_call.1} parent=83 // pred_check_branch
          %701 = sbr.rel (%p699) target = $region92
        $region91: #{tpu_custom_call.1} parent=83 // pred_region
          %702 = dma.done [#allocation6], 256
        $region92: #{tpu_custom_call.1} parent=83 // pred_fallthru
          _
        %s703 = sand.u32 %s34, 1
        %s704 = scalar_lea.sflag [#allocation3], %s703
        %s705 = sand.u32 %s101, 1
        %s706 = scalar_lea.vmem [#allocation7], %s705
        // Predicated region
        $region93: #{tpu_custom_call.1} parent=83 // pred_check
          %p707 = pneg %p114
        $region94: #{tpu_custom_call.1} parent=83 // pred_check_branch
          %709 = sbr.rel (%p707) target = $region96
        $region95: #{tpu_custom_call.1} parent=83 // pred_region
          %710 = dma.done %s704, 16
        $region96: #{tpu_custom_call.1} parent=83 // pred_fallthru
          _
        %s711 = sand.u32 %s34, 1
        %s712 = scalar_lea.sflag [#allocation3], %s711
        %s713 = sand.u32 %s127, 1
        %s714 = scalar_lea.vmem [#allocation8], %s713
        // Predicated region
        $region97: #{tpu_custom_call.1} parent=83 // pred_check
          %p715 = pneg %p140
        $region98: #{tpu_custom_call.1} parent=83 // pred_check_branch
          %717 = sbr.rel (%p715) target = $region100
        $region99: #{tpu_custom_call.1} parent=83 // pred_region
          %718 = dma.done %s712, 16
        $region100: #{tpu_custom_call.1} parent=83 // pred_fallthru
          _
        %s719 = sand.u32 %s34, 1
        %s720 = scalar_lea.sflag [#allocation3], %s719
        %s721 = sand.u32 %s153, 1
        %s722 = smul.addr %s721, 192
        %s723 = scalar_lea.vmem [#allocation9], %s722
        // Predicated region
        $region101: #{tpu_custom_call.1} parent=83 // pred_check
          %p724 = pneg %p166
        $region102: #{tpu_custom_call.1} parent=83 // pred_check_branch
          %726 = sbr.rel (%p724) target = $region104
        $region103: #{tpu_custom_call.1} parent=83 // pred_region
          %727 = dma.done %s720, 3072
        $region104: #{tpu_custom_call.1} parent=83 // pred_fallthru
          _
        %s728 = sand.u32 %s34, 1
        %s729 = scalar_lea.sflag [#allocation3], %s728
        %s730 = sand.u32 %s205, 1
        %s731 = smul.addr %s730, 64
        %s732 = scalar_lea.vmem [#allocation10], %s731
        // Predicated region
        $region105: #{tpu_custom_call.1} parent=83 // pred_check
          %p733 = pneg %p218
        $region106: #{tpu_custom_call.1} parent=83 // pred_check_branch
          %735 = sbr.rel (%p733) target = $region108
        $region107: #{tpu_custom_call.1} parent=83 // pred_region
          %736 = dma.done %s729, 1024
        $region108: #{tpu_custom_call.1} parent=83 // pred_fallthru
          _
        %s737 = sand.u32 %s34, 1
        %s738 = scalar_lea.sflag [#allocation3], %s737
        %s739 = sand.u32 %s309, 1
        %s740 = smul.addr %s739, 128
        %s741 = scalar_lea.vmem [#allocation11], %s740
        // Predicated region
        $region109: #{tpu_custom_call.1} parent=83 // pred_check
          %p742 = pneg %p322
        $region110: #{tpu_custom_call.1} parent=83 // pred_check_branch
          %744 = sbr.rel (%p742) target = $region112
        $region111: #{tpu_custom_call.1} parent=83 // pred_region
          %745 = dma.done %s738, 2048
        $region112: #{tpu_custom_call.1} parent=83 // pred_fallthru
          _
        %s746 = sand.u32 %s34, 1
        %s747 = scalar_lea.sflag [#allocation3], %s746
        %s748 = sand.u32 %s361, 1
        %s749 = smul.addr %s748, 128
        %s750 = scalar_lea.vmem [#allocation12], %s749
        // Predicated region
        $region113: #{tpu_custom_call.1} parent=83 // pred_check
          %p751 = pneg %p374
        $region114: #{tpu_custom_call.1} parent=83 // pred_check_branch
          %753 = sbr.rel (%p751) target = $region116
        $region115: #{tpu_custom_call.1} parent=83 // pred_region
          %754 = dma.done %s747, 2048
        $region116: #{tpu_custom_call.1} parent=83 // pred_fallthru
          _
        %s755 = sand.u32 %s34, 1
        %s756 = scalar_lea.sflag [#allocation3], %s755
        %s757 = sand.u32 %s54, 1
        %s758 = smul.addr %s757, 16
        %s759 = scalar_lea.vmem [#allocation2], %s758
        %p760 = pneg %p67
        %p761 = pneg %p64
        %p762 = pneg %p88
        %p763 = pneg %p85
        %s764 = sand.u32 %s34, 1
        %s765 = scalar_lea.sflag [#allocation3], %s764
        %s766 = sand.u32 %s101, 1
        %s767 = scalar_lea.vmem [#allocation7], %s766
        %p768 = pneg %p114
        %p769 = pneg %p111
        %s770 = sand.u32 %s34, 1
        %s771 = scalar_lea.sflag [#allocation3], %s770
        %s772 = sand.u32 %s127, 1
        %s773 = scalar_lea.vmem [#allocation8], %s772
        %p774 = pneg %p140
        %p775 = pneg %p137
        %s776 = sand.u32 %s34, 1
        %s777 = scalar_lea.sflag [#allocation3], %s776
        %s778 = sand.u32 %s153, 1
        %s779 = smul.addr %s778, 192
        %s780 = scalar_lea.vmem [#allocation9], %s779
        %p781 = pneg %p166
        %p782 = pneg %p163
        %p783 = scmp.lt.s32.totalorder %s39, 1
        %s784 = scalar_select %p783, %s39, 1
        %s785 = smul.addr %s784, 3
        %s786 = scalar_lea.vmem %s5, %s785
        %p787 = pneg %p192
        %p788 = pneg %p189
        %s789 = sand.u32 %s34, 1
        %s790 = scalar_lea.sflag [#allocation3], %s789
        %s791 = sand.u32 %s205, 1
        %s792 = smul.addr %s791, 64
        %s793 = scalar_lea.vmem [#allocation10], %s792
        %p794 = pneg %p218
        %p795 = pneg %p215
        %p796 = scmp.lt.s32.totalorder %s39, 1
        %s797 = scalar_select %p796, %s39, 1
        %s798 = scalar_lea.vmem %s7, %s797
        %p799 = pneg %p244
        %p800 = pneg %p241
        %p801 = scmp.lt.s32.totalorder %s39, 1
        %s802 = scalar_select %p801, %s39, 1
        %s803 = scalar_lea.vmem %s8, %s802
        %p804 = pneg %p270
        %p805 = pneg %p267
        %p806 = scmp.lt.s32.totalorder %s39, 1
        %s807 = scalar_select %p806, %s39, 1
        %s808 = scalar_lea.vmem %s9, %s807
        %p809 = pneg %p296
        %p810 = pneg %p293
        %s811 = sand.u32 %s34, 1
        %s812 = scalar_lea.sflag [#allocation3], %s811
        %s813 = sand.u32 %s309, 1
        %s814 = smul.addr %s813, 128
        %s815 = scalar_lea.vmem [#allocation11], %s814
        %p816 = pneg %p322
        %p817 = pneg %p319
        %p818 = scmp.lt.s32.totalorder %s39, 1
        %s819 = scalar_select %p818, %s39, 1
        %s820 = smul.addr %s819, 2
        %s821 = scalar_lea.vmem %s11, %s820
        %p822 = pneg %p348
        %p823 = pneg %p345
        %s824 = sand.u32 %s34, 1
        %s825 = scalar_lea.sflag [#allocation3], %s824
        %s826 = sand.u32 %s361, 1
        %s827 = smul.addr %s826, 128
        %s828 = scalar_lea.vmem [#allocation12], %s827
        %p829 = pneg %p374
        %p830 = pneg %p371
        %p831 = scmp.lt.s32.totalorder %s39, 1
        %s832 = scalar_select %p831, %s39, 1
        %s833 = scalar_lea.vmem %s13, %s832
        %p834 = pneg %p400
        %p835 = pneg %p397
        %p836 = pneg %p421
        %p837 = pneg %p418
        %p838 = pneg %p442
        %p839 = pneg %p439
        %p840 = pneg %p468
        %p841 = pneg %p465
        %s842 = sand.u32 %s455, 1
        %s843 = scalar_lea.sflag [#allocation4], %s842
        %s844 = sand.u32 %s455, 1
        %s845 = smul.addr %s844, 16
        %s846 = scalar_lea.vmem [#allocation13], %s845
        %s847 = smul.u32 2, %s38
        %p848 = scmp.lt.s32.totalorder %s39, 1
        %s849 = scalar_select %p848, %s39, 1
        %s850 = smul.addr %s849, 3
        %s851 = scalar_lea.vmem %s5, %s850
        %p852 = scmp.lt.s32.totalorder %s39, 1
        %s853 = scalar_select %p852, %s39, 1
        %s854 = scalar_lea.vmem %s7, %s853
        %p855 = scmp.lt.s32.totalorder %s39, 1
        %s856 = scalar_select %p855, %s39, 1
        %s857 = scalar_lea.vmem %s8, %s856
        %p858 = scmp.lt.s32.totalorder %s39, 1
        %s859 = scalar_select %p858, %s39, 1
        %s860 = scalar_lea.vmem %s9, %s859
        %p861 = scmp.lt.s32.totalorder %s39, 1
        %s862 = scalar_select %p861, %s39, 1
        %s863 = smul.addr %s862, 2
        %s864 = scalar_lea.vmem %s11, %s863
        %p865 = scmp.lt.s32.totalorder %s39, 1
        %s866 = scalar_select %p865, %s39, 1
        %s867 = scalar_lea.vmem %s13, %s866
        %s868 = smul.u32 2, %s38
        %p872 = scmp.eq.s32.totalorder %s39, 0
        // Predicated region
        $region117: #{tpu_custom_call.1} parent=83 // pred_check
          %p873 = pneg %p872
        $region118: #{tpu_custom_call.1} parent=83 // pred_check_branch
          %875 = sbr.rel (%p873) target = $region120
        $region119: #{tpu_custom_call.1} parent=83 // pred_region
          %v876 = vld [vmem:[%s694] sm:$0xff]
          %v877 = vld [vmem:[%s694 + $0x8] sm:$0xff]
          %878 = vst [vmem:[%s846] sm:$0xff] %v876
          %879 = vst [vmem:[%s846 + $0x8] sm:$0xff] %v877
        $region120: #{tpu_custom_call.1} parent=83 // pred_fallthru
          _
        %v880 = vld [vmem:[%s846] sm:$0xff]
        %v881 = vld [vmem:[%s846 + $0x8] sm:$0xff]
        %v882 = vld [vmem:[%s706] sm:$0x1]
        %v883 = vld [vmem:[%s714] sm:$0x1]
        %884 = vadd.xlane.f32.xlu0 %v880
        %v885 = vpop.xlane.xlu0 %884
        %886 = vadd.xlane.f32.xlu0 %v881
        %v887 = vpop.xlane.xlu0 %886
        %v888 = vrcp.pop 128.0
        %v889 = vmul.f32 %v885, %v888
        %v890 = vmul.f32 %v887, %v888
        %v891 = vsub.f32 %v880, %v889
        %v892 = vsub.f32 %v881, %v890
        %v893 = vmul.f32 %v891, %v891
        %v894 = vmul.f32 %v892, %v892
        %895 = vadd.xlane.f32.xlu0 %v893
        %v896 = vpop.xlane.xlu0 %895
        %897 = vadd.xlane.f32.xlu0 %v894
        %v898 = vpop.xlane.xlu0 %897
        %v899 = vmul.f32 %v896, %v888
        %v900 = vmul.f32 %v898, %v888
        %v901 = vadd.f32 %v899, 1e-05
        %v902 = vadd.f32 %v900, 1e-05
        %v903 = vrsqrt.pop %v901
        %v904 = vrsqrt.pop %v902
        %v905 = vmul.f32 %v891, %v903
        %v906 = vmul.f32 %v892, %v904
        %v908 = vlaneseq
        %v909 = vshrl.u32 %v908, 7
        %v910 = vsub.s32 0, %v909
        %v911 = vrot.slane %v882, %v910
        %v913 = vmul.f32 %v905, %v911
        %v914 = vmul.f32 %v906, %v911
        %v916 = vlaneseq
        %v917 = vshrl.u32 %v916, 7
        %v918 = vsub.s32 0, %v917
        %v919 = vrot.slane %v883, %v918
        %v921 = vadd.f32 %v913, %v919
        %v922 = vadd.f32 %v914, %v919
        %v923 = vpack.c.bf16 %v922, %v921
        %v924 = vld [vmem:[%s723] sm:$0xff]
        %v925 = vld [vmem:[%s723 + $0x8] sm:$0xf]
        %v926 = vld [vmem:[%s723 + $0xc] sm:$0xff]
        %v927 = vld [vmem:[%s723 + $0x14] sm:$0xf]
        %v928 = vld [vmem:[%s723 + $0x18] sm:$0xff]
        %v929 = vld [vmem:[%s723 + $0x20] sm:$0xf]
        %v930 = vld [vmem:[%s723 + $0x24] sm:$0xff]
        %v931 = vld [vmem:[%s723 + $0x2c] sm:$0xf]
        %v932 = vld [vmem:[%s723 + $0x30] sm:$0xff]
        %v933 = vld [vmem:[%s723 + $0x38] sm:$0xf]
        %v934 = vld [vmem:[%s723 + $0x3c] sm:$0xff]
        %v935 = vld [vmem:[%s723 + $0x44] sm:$0xf]
        %v936 = vld [vmem:[%s723 + $0x48] sm:$0xff]
        %v937 = vld [vmem:[%s723 + $0x50] sm:$0xf]
        %v938 = vld [vmem:[%s723 + $0x54] sm:$0xff]
        %v939 = vld [vmem:[%s723 + $0x5c] sm:$0xf]
        %v940 = vld [vmem:[%s723 + $0x60] sm:$0xff]
        %v941 = vld [vmem:[%s723 + $0x68] sm:$0xf]
        %v942 = vld [vmem:[%s723 + $0x6c] sm:$0xff]
        %v943 = vld [vmem:[%s723 + $0x74] sm:$0xf]
        %v944 = vld [vmem:[%s723 + $0x78] sm:$0xff]
        %v945 = vld [vmem:[%s723 + $0x80] sm:$0xf]
        %v946 = vld [vmem:[%s723 + $0x84] sm:$0xff]
        %v947 = vld [vmem:[%s723 + $0x8c] sm:$0xf]
        %v948 = vld [vmem:[%s723 + $0x90] sm:$0xff]
        %v949 = vld [vmem:[%s723 + $0x98] sm:$0xf]
        %v950 = vld [vmem:[%s723 + $0x9c] sm:$0xff]
        %v951 = vld [vmem:[%s723 + $0xa4] sm:$0xf]
        %v952 = vld [vmem:[%s723 + $0xa8] sm:$0xff]
        %v953 = vld [vmem:[%s723 + $0xb0] sm:$0xf]
        %v954 = vld [vmem:[%s723 + $0xb4] sm:$0xff]
        %v955 = vld [vmem:[%s723 + $0xbc] sm:$0xf]
        %v956 = vld [vmem:[%s851] sm:$0x7]
        %v958 = vlaneseq
        %v959 = vshrl.u32 %v958, 7
        %v960 = vsub.s32 0, %v959
        %v961 = vrot.slane %v956, %v960
        %v962 = vlaneseq
        %v963 = vshrl.u32 %v962, 7
        %v964 = vsub.s32 1, %v963
        %v965 = vrot.slane %v956, %v964
        %v966 = vlaneseq
        %v967 = vshrl.u32 %v966, 7
        %v968 = vsub.s32 2, %v967
        %v969 = vrot.slane %v956, %v968
        %v1005 = vunpack.c.l.b16 %v924
        %v1006 = vunpack.c.h.b16 %v924
        %v1007 = vunpack.c.l.b16 %v925
        %v1008 = vunpack.c.l.b16 %v926
        %v1009 = vunpack.c.h.b16 %v926
        %v1010 = vunpack.c.l.b16 %v927
        %v1011 = vunpack.c.l.b16 %v928
        %v1012 = vunpack.c.h.b16 %v928
        %v1013 = vunpack.c.l.b16 %v929
        %v1014 = vunpack.c.l.b16 %v930
        %v1015 = vunpack.c.h.b16 %v930
        %v1016 = vunpack.c.l.b16 %v931
        %v1017 = vunpack.c.l.b16 %v932
        %v1018 = vunpack.c.h.b16 %v932
        %v1019 = vunpack.c.l.b16 %v933
        %v1020 = vunpack.c.l.b16 %v934
        %v1021 = vunpack.c.h.b16 %v934
        %v1022 = vunpack.c.l.b16 %v935
        %v1023 = vunpack.c.l.b16 %v936
        %v1024 = vunpack.c.h.b16 %v936
        %v1025 = vunpack.c.l.b16 %v937
        %v1026 = vunpack.c.l.b16 %v938
        %v1027 = vunpack.c.h.b16 %v938
        %v1028 = vunpack.c.l.b16 %v939
        %v1029 = vunpack.c.l.b16 %v940
        %v1030 = vunpack.c.h.b16 %v940
        %v1031 = vunpack.c.l.b16 %v941
        %v1032 = vunpack.c.l.b16 %v942
        %v1033 = vunpack.c.h.b16 %v942
        %v1034 = vunpack.c.l.b16 %v943
        %v1035 = vunpack.c.l.b16 %v944
        %v1036 = vunpack.c.h.b16 %v944
        %v1037 = vunpack.c.l.b16 %v945
        %v1038 = vunpack.c.l.b16 %v946
        %v1039 = vunpack.c.h.b16 %v946
        %v1040 = vunpack.c.l.b16 %v947
        %v1041 = vunpack.c.l.b16 %v948
        %v1042 = vunpack.c.h.b16 %v948
        %v1043 = vunpack.c.l.b16 %v949
        %v1044 = vunpack.c.l.b16 %v950
        %v1045 = vunpack.c.h.b16 %v950
        %v1046 = vunpack.c.l.b16 %v951
        %v1047 = vunpack.c.l.b16 %v952
        %v1048 = vunpack.c.h.b16 %v952
        %v1049 = vunpack.c.l.b16 %v953
        %v1050 = vunpack.c.l.b16 %v954
        %v1051 = vunpack.c.h.b16 %v954
        %v1052 = vunpack.c.l.b16 %v955
        %v1053 = vpack.c.b16 %v1008, %v1005
        %v1054 = vpack.c.b16 %v1009, %v1006
        %v1055 = vpack.c.b16 %v1010, %v1007
        %v1056 = vpack.c.b16 %v1014, %v1011
        %v1057 = vpack.c.b16 %v1015, %v1012
        %v1058 = vpack.c.b16 %v1016, %v1013
        %v1059 = vpack.c.b16 %v1020, %v1017
        %v1060 = vpack.c.b16 %v1021, %v1018
        %v1061 = vpack.c.b16 %v1022, %v1019
        %v1062 = vpack.c.b16 %v1026, %v1023
        %v1063 = vpack.c.b16 %v1027, %v1024
        %v1064 = vpack.c.b16 %v1028, %v1025
        %v1065 = vpack.c.b16 %v1032, %v1029
        %v1066 = vpack.c.b16 %v1033, %v1030
        %v1067 = vpack.c.b16 %v1034, %v1031
        %v1068 = vpack.c.b16 %v1038, %v1035
        %v1069 = vpack.c.b16 %v1039, %v1036
        %v1070 = vpack.c.b16 %v1040, %v1037
        %v1071 = vpack.c.b16 %v1044, %v1041
        %v1072 = vpack.c.b16 %v1045, %v1042
        %v1073 = vpack.c.b16 %v1046, %v1043
        %v1074 = vpack.c.b16 %v1050, %v1047
        %v1075 = vpack.c.b16 %v1051, %v1048
        %v1076 = vpack.c.b16 %v1052, %v1049
        %1101 = vmatprep.subr.bf16.mxu0 %v1075
        %1102 = vmatpush1.bf16.msra.mxu0 %v1074
        %1103 = vmatprep.subr.bf16.mxu0 %v1072
        %1104 = vmatpush1.bf16.msra.mxu0 %v1071
        %1105 = vmatprep.subr.bf16.mxu0 %v1069
        %1106 = vmatpush1.bf16.msra.mxu0 %v1068
        %1107 = vmatprep.subr.bf16.mxu0 %v1066
        %1108 = vmatpush1.bf16.msra.mxu0 %v1065
        %1109 = vmatprep.subr.bf16.mxu0 %v1063
        %1110 = vmatpush1.bf16.msra.mxu0 %v1062
        %1111 = vmatprep.subr.bf16.mxu0 %v1060
        %1112 = vmatpush1.bf16.msra.mxu0 %v1059
        %1113 = vmatprep.subr.bf16.mxu0 %v1057
        %1114 = vmatpush1.bf16.msra.mxu0 %v1056
        %1115 = vmatprep.subr.bf16.mxu0 %v1054
        %1116 = vmatpush1.bf16.msra.mxu0 %v1053
        %1117 = vmatprep.subr.bf16.mxu0 0
        %1118 = vmatpush2.bf16.msra.mxu0 0
        %1119 = vmatprep.subr.bf16.mxu0 0
        %1120 = vmatpush2.bf16.msra.mxu0 0
        %1121 = vmatprep.subr.bf16.mxu0 0
        %1122 = vmatpush2.bf16.msra.mxu0 0
        %1123 = vmatprep.subr.bf16.mxu0 0
        %1124 = vmatpush2.bf16.msra.mxu0 0
        %1125 = vmatprep.subr.bf16.mxu0 0
        %1126 = vmatpush2.bf16.msra.mxu0 0
        %1127 = vmatprep.subr.bf16.mxu0 0
        %1128 = vmatpush2.bf16.msra.mxu0 0
        %1129 = vmatprep.subr.bf16.mxu0 0
        %1130 = vmatpush2.bf16.msra.mxu0 0
        %1131 = vmatprep.subr.bf16.mxu0 0
        %1132 = vmatpush2.bf16.msra.mxu0 0
        %1133 = vmatprep.mubr.bf16.mxu0 0
        %1134 = vmatmul.mubr.bf16.gmra.mxu0 %v923
        %v1135 = vpop.f32.mrf.mxu0
        %v1136 = vadd.f32 %v961, %v1135
        %v1137 = vpop.f32.mrf.mxu0
        %v1138 = vadd.f32 %v965, %v1137
        %v1139 = vpop.f32.mrf.mxu0
        %v1140 = vadd.f32 %v961, %v1139
        %v1141 = vpop.f32.mrf.mxu0
        %v1142 = vadd.f32 %v965, %v1141
        %1143 = vdwg.mxu0
        %1144 = vmatprep.subr.bf16.mxu0 0
        %1145 = vmatpush1.bf16.msra.mxu0 %v1076
        %1146 = vmatprep.subr.bf16.mxu0 0
        %1147 = vmatpush1.bf16.msra.mxu0 %v1073
        %1148 = vmatprep.subr.bf16.mxu0 0
        %1149 = vmatpush1.bf16.msra.mxu0 %v1070
        %1150 = vmatprep.subr.bf16.mxu0 0
        %1151 = vmatpush1.bf16.msra.mxu0 %v1067
        %1152 = vmatprep.subr.bf16.mxu0 0
        %1153 = vmatpush1.bf16.msra.mxu0 %v1064
        %1154 = vmatprep.subr.bf16.mxu0 0
        %1155 = vmatpush1.bf16.msra.mxu0 %v1061
        %1156 = vmatprep.subr.bf16.mxu0 0
        %1157 = vmatpush1.bf16.msra.mxu0 %v1058
        %1158 = vmatprep.subr.bf16.mxu0 0
        %1159 = vmatpush1.bf16.msra.mxu0 %v1055
        %1160 = vmatprep.subr.bf16.mxu0 0
        %1161 = vmatpush2.bf16.msra.mxu0 0
        %1162 = vmatprep.subr.bf16.mxu0 0
        %1163 = vmatpush2.bf16.msra.mxu0 0
        %1164 = vmatprep.subr.bf16.mxu0 0
        %1165 = vmatpush2.bf16.msra.mxu0 0
        %1166 = vmatprep.subr.bf16.mxu0 0
        %1167 = vmatpush2.bf16.msra.mxu0 0
        %1168 = vmatprep.subr.bf16.mxu0 0
        %1169 = vmatpush2.bf16.msra.mxu0 0
        %1170 = vmatprep.subr.bf16.mxu0 0
        %1171 = vmatpush2.bf16.msra.mxu0 0
        %1172 = vmatprep.subr.bf16.mxu0 0
        %1173 = vmatpush2.bf16.msra.mxu0 0
        %1174 = vmatprep.subr.bf16.mxu0 0
        %1175 = vmatpush2.bf16.msra.mxu0 0
        %1176 = vmatprep.mubr.bf16.mxu0 0
        %1177 = vmatmul.mubr.bf16.gmra.mxu0 %v923
        %v1178 = vpop.f32.mrf.mxu0
        %v1179 = vadd.f32 %v969, %v1178
        %v1180 = vpop.f32.mrf.mxu0
        %v1181 = vpop.f32.mrf.mxu0
        %v1182 = vadd.f32 %v969, %v1181
        %v1183 = vpop.f32.mrf.mxu0
        %1184 = vdwg.mxu0
        %1187 = vrot.lane.b32.xlu0 %v1136, 96
        %v1188 = vpop.permute.xlu0 %1187
        %1189 = vrot.lane.b32.xlu0 %v1140, 96
        %v1190 = vpop.permute.xlu0 %1189
        %1193 = vrot.lane.b32.xlu0 %v1136, 64
        %v1194 = vpop.permute.xlu0 %1193
        %1195 = vrot.lane.b32.xlu0 %v1140, 64
        %v1196 = vpop.permute.xlu0 %1195
        %1199 = vrot.lane.b32.xlu0 %v1136, 32
        %v1200 = vpop.permute.xlu0 %1199
        %1201 = vrot.lane.b32.xlu0 %v1140, 32
        %v1202 = vpop.permute.xlu0 %1201
        %v1205 = vcombine.low %v1136, %v1194
        %v1206 = vcombine.high %v1136, %v1194
        %v1208 = vunpack.c.l.s4 1983009808
        %v1209 = vunpack.c.0.s8 %v1208
        %v1210 = vlaneseq
        %v1211 = vshrl.u32 %v1210, 7
        %v1212 = vsub.s32 %v1209, %v1211
        %v1213 = vrot.slane %v1205, %v1212
        %v1215 = vunpack.c.l.s4 1983009808
        %v1216 = vunpack.c.0.s8 %v1215
        %v1217 = vlaneseq
        %v1218 = vshrl.u32 %v1217, 7
        %v1219 = vsub.s32 %v1216, %v1218
        %v1220 = vrot.slane %v1206, %v1219
        %v1221 = vcombine.low %v1188, %v1200
        %v1222 = vcombine.high %v1188, %v1200
        %v1224 = vunpack.c.l.s4 1983009808
        %v1225 = vunpack.c.0.s8 %v1224
        %v1226 = vlaneseq
        %v1227 = vshrl.u32 %v1226, 7
        %v1228 = vsub.s32 %v1225, %v1227
        %v1229 = vrot.slane %v1221, %v1228
        %v1231 = vunpack.c.l.s4 1983009808
        %v1232 = vunpack.c.0.s8 %v1231
        %v1233 = vlaneseq
        %v1234 = vshrl.u32 %v1233, 7
        %v1235 = vsub.s32 %v1232, %v1234
        %v1236 = vrot.slane %v1222, %v1235
        %v1237 = vcombine.low %v1213, %v1229
        %v1238 = vcombine.high %v1213, %v1229
        %v1240 = vunpack.c.l.s4 1934713408
        %v1241 = vunpack.c.0.s8 %v1240
        %v1242 = vlaneseq
        %v1243 = vshrl.u32 %v1242, 7
        %v1244 = vsub.s32 %v1241, %v1243
        %v1245 = vrot.slane %v1237, %v1244
        %v1247 = vunpack.c.l.s4 1934713408
        %v1248 = vunpack.c.0.s8 %v1247
        %v1249 = vlaneseq
        %v1250 = vshrl.u32 %v1249, 7
        %v1251 = vsub.s32 %v1248, %v1250
        %v1252 = vrot.slane %v1238, %v1251
        %v1253 = vcombine.low %v1220, %v1236
        %v1254 = vcombine.high %v1220, %v1236
        %v1256 = vunpack.c.l.s4 1934713408
        %v1257 = vunpack.c.0.s8 %v1256
        %v1258 = vlaneseq
        %v1259 = vshrl.u32 %v1258, 7
        %v1260 = vsub.s32 %v1257, %v1259
        %v1261 = vrot.slane %v1253, %v1260
        %v1263 = vunpack.c.l.s4 1934713408
        %v1264 = vunpack.c.0.s8 %v1263
        %v1265 = vlaneseq
        %v1266 = vshrl.u32 %v1265, 7
        %v1267 = vsub.s32 %v1264, %v1266
        %v1268 = vrot.slane %v1254, %v1267
        %v1269 = vcombine.high %v1245, 0.0
        %v1270 = vcombine.high %v1252, 0.0
        %v1271 = vcombine.high %v1261, 0.0
        %v1272 = vcombine.high %v1268, 0.0
        %v1273 = vcombine.low %v1140, %v1196
        %v1274 = vcombine.high %v1140, %v1196
        %v1276 = vunpack.c.l.s4 1983009808
        %v1277 = vunpack.c.0.s8 %v1276
        %v1278 = vlaneseq
        %v1279 = vshrl.u32 %v1278, 7
        %v1280 = vsub.s32 %v1277, %v1279
        %v1281 = vrot.slane %v1273, %v1280
        %v1283 = vunpack.c.l.s4 1983009808
        %v1284 = vunpack.c.0.s8 %v1283
        %v1285 = vlaneseq
        %v1286 = vshrl.u32 %v1285, 7
        %v1287 = vsub.s32 %v1284, %v1286
        %v1288 = vrot.slane %v1274, %v1287
        %v1289 = vcombine.low %v1190, %v1202
        %v1290 = vcombine.high %v1190, %v1202
        %v1292 = vunpack.c.l.s4 1983009808
        %v1293 = vunpack.c.0.s8 %v1292
        %v1294 = vlaneseq
        %v1295 = vshrl.u32 %v1294, 7
        %v1296 = vsub.s32 %v1293, %v1295
        %v1297 = vrot.slane %v1289, %v1296
        %v1299 = vunpack.c.l.s4 1983009808
        %v1300 = vunpack.c.0.s8 %v1299
        %v1301 = vlaneseq
        %v1302 = vshrl.u32 %v1301, 7
        %v1303 = vsub.s32 %v1300, %v1302
        %v1304 = vrot.slane %v1290, %v1303
        %v1305 = vcombine.low %v1281, %v1297
        %v1306 = vcombine.high %v1281, %v1297
        %v1308 = vunpack.c.l.s4 1934713408
        %v1309 = vunpack.c.0.s8 %v1308
        %v1310 = vlaneseq
        %v1311 = vshrl.u32 %v1310, 7
        %v1312 = vsub.s32 %v1309, %v1311
        %v1313 = vrot.slane %v1305, %v1312
        %v1315 = vunpack.c.l.s4 1934713408
        %v1316 = vunpack.c.0.s8 %v1315
        %v1317 = vlaneseq
        %v1318 = vshrl.u32 %v1317, 7
        %v1319 = vsub.s32 %v1316, %v1318
        %v1320 = vrot.slane %v1306, %v1319
        %v1321 = vcombine.low %v1288, %v1304
        %v1322 = vcombine.high %v1288, %v1304
        %v1324 = vunpack.c.l.s4 1934713408
        %v1325 = vunpack.c.0.s8 %v1324
        %v1326 = vlaneseq
        %v1327 = vshrl.u32 %v1326, 7
        %v1328 = vsub.s32 %v1325, %v1327
        %v1329 = vrot.slane %v1321, %v1328
        %v1331 = vunpack.c.l.s4 1934713408
        %v1332 = vunpack.c.0.s8 %v1331
        %v1333 = vlaneseq
        %v1334 = vshrl.u32 %v1333, 7
        %v1335 = vsub.s32 %v1332, %v1334
        %v1336 = vrot.slane %v1322, %v1335
        %v1337 = vcombine.high %v1313, 0.0
        %v1338 = vcombine.high %v1320, 0.0
        %v1339 = vcombine.high %v1329, 0.0
        %v1340 = vcombine.high %v1336, 0.0
        %v1341 = vcombine.low %v1245, %v1252
        %v1343 = vunpack.c.l.s4 1983009808
        %v1344 = vunpack.c.0.s8 %v1343
        %v1345 = vlaneseq
        %v1346 = vshrl.u32 %v1345, 7
        %v1347 = vsub.s32 %v1344, %v1346
        %v1348 = vrot.slane %v1341, %v1347
        %v1349 = vcombine.low %v1269, %v1270
        %v1351 = vunpack.c.l.s4 1983009808
        %v1352 = vunpack.c.0.s8 %v1351
        %v1353 = vlaneseq
        %v1354 = vshrl.u32 %v1353, 7
        %v1355 = vsub.s32 %v1352, %v1354
        %v1356 = vrot.slane %v1349, %v1355
        %v1357 = vcombine.low %v1261, %v1268
        %v1359 = vunpack.c.l.s4 1983009808
        %v1360 = vunpack.c.0.s8 %v1359
        %v1361 = vlaneseq
        %v1362 = vshrl.u32 %v1361, 7
        %v1363 = vsub.s32 %v1360, %v1362
        %v1364 = vrot.slane %v1357, %v1363
        %v1365 = vcombine.low %v1271, %v1272
        %v1367 = vunpack.c.l.s4 1983009808
        %v1368 = vunpack.c.0.s8 %v1367
        %v1369 = vlaneseq
        %v1370 = vshrl.u32 %v1369, 7
        %v1371 = vsub.s32 %v1368, %v1370
        %v1372 = vrot.slane %v1365, %v1371
        %v1373 = vcombine.low %v1348, %v1356
        %v1374 = vcombine.high %v1348, %v1356
        %v1376 = vunpack.c.l.s4 1934713408
        %v1377 = vunpack.c.0.s8 %v1376
        %v1378 = vlaneseq
        %v1379 = vshrl.u32 %v1378, 7
        %v1380 = vsub.s32 %v1377, %v1379
        %v1381 = vrot.slane %v1373, %v1380
        %v1383 = vunpack.c.l.s4 1934713408
        %v1384 = vunpack.c.0.s8 %v1383
        %v1385 = vlaneseq
        %v1386 = vshrl.u32 %v1385, 7
        %v1387 = vsub.s32 %v1384, %v1386
        %v1388 = vrot.slane %v1374, %v1387
        %v1389 = vcombine.low %v1364, %v1372
        %v1390 = vcombine.high %v1364, %v1372
        %v1392 = vunpack.c.l.s4 1934713408
        %v1393 = vunpack.c.0.s8 %v1392
        %v1394 = vlaneseq
        %v1395 = vshrl.u32 %v1394, 7
        %v1396 = vsub.s32 %v1393, %v1395
        %v1397 = vrot.slane %v1389, %v1396
        %v1399 = vunpack.c.l.s4 1934713408
        %v1400 = vunpack.c.0.s8 %v1399
        %v1401 = vlaneseq
        %v1402 = vshrl.u32 %v1401, 7
        %v1403 = vsub.s32 %v1400, %v1402
        %v1404 = vrot.slane %v1390, %v1403
        %v1405 = vcombine.low %v1381, %v1397
        %v1406 = vcombine.high %v1381, %v1397
        %v1407 = vcombine.low %v1388, %v1404
        %v1408 = vcombine.high %v1388, %v1404
        %v1409 = vcombine.low %v1313, %v1320
        %v1411 = vunpack.c.l.s4 1983009808
        %v1412 = vunpack.c.0.s8 %v1411
        %v1413 = vlaneseq
        %v1414 = vshrl.u32 %v1413, 7
        %v1415 = vsub.s32 %v1412, %v1414
        %v1416 = vrot.slane %v1409, %v1415
        %v1417 = vcombine.low %v1337, %v1338
        %v1419 = vunpack.c.l.s4 1983009808
        %v1420 = vunpack.c.0.s8 %v1419
        %v1421 = vlaneseq
        %v1422 = vshrl.u32 %v1421, 7
        %v1423 = vsub.s32 %v1420, %v1422
        %v1424 = vrot.slane %v1417, %v1423
        %v1425 = vcombine.low %v1329, %v1336
        %v1427 = vunpack.c.l.s4 1983009808
        %v1428 = vunpack.c.0.s8 %v1427
        %v1429 = vlaneseq
        %v1430 = vshrl.u32 %v1429, 7
        %v1431 = vsub.s32 %v1428, %v1430
        %v1432 = vrot.slane %v1425, %v1431
        %v1433 = vcombine.low %v1339, %v1340
        %v1435 = vunpack.c.l.s4 1983009808
        %v1436 = vunpack.c.0.s8 %v1435
        %v1437 = vlaneseq
        %v1438 = vshrl.u32 %v1437, 7
        %v1439 = vsub.s32 %v1436, %v1438
        %v1440 = vrot.slane %v1433, %v1439
        %v1441 = vcombine.low %v1416, %v1424
        %v1442 = vcombine.high %v1416, %v1424
        %v1444 = vunpack.c.l.s4 1934713408
        %v1445 = vunpack.c.0.s8 %v1444
        %v1446 = vlaneseq
        %v1447 = vshrl.u32 %v1446, 7
        %v1448 = vsub.s32 %v1445, %v1447
        %v1449 = vrot.slane %v1441, %v1448
        %v1451 = vunpack.c.l.s4 1934713408
        %v1452 = vunpack.c.0.s8 %v1451
        %v1453 = vlaneseq
        %v1454 = vshrl.u32 %v1453, 7
        %v1455 = vsub.s32 %v1452, %v1454
        %v1456 = vrot.slane %v1442, %v1455
        %v1457 = vcombine.low %v1432, %v1440
        %v1458 = vcombine.high %v1432, %v1440
        %v1460 = vunpack.c.l.s4 1934713408
        %v1461 = vunpack.c.0.s8 %v1460
        %v1462 = vlaneseq
        %v1463 = vshrl.u32 %v1462, 7
        %v1464 = vsub.s32 %v1461, %v1463
        %v1465 = vrot.slane %v1457, %v1464
        %v1467 = vunpack.c.l.s4 1934713408
        %v1468 = vunpack.c.0.s8 %v1467
        %v1469 = vlaneseq
        %v1470 = vshrl.u32 %v1469, 7
        %v1471 = vsub.s32 %v1468, %v1470
        %v1472 = vrot.slane %v1458, %v1471
        %v1473 = vcombine.low %v1449, %v1465
        %v1474 = vcombine.high %v1449, %v1465
        %v1475 = vcombine.low %v1456, %v1472
        %v1476 = vcombine.high %v1456, %v1472
        %v1477 = vpack.c.bf16 %v1473, %v1405
        %v1478 = vpack.c.bf16 %v1474, %v1406
        %v1479 = vpack.c.bf16 %v1475, %v1407
        %v1480 = vpack.c.bf16 %v1476, %v1408
        %1483 = vrot.lane.b32.xlu0 %v1138, 96
        %v1484 = vpop.permute.xlu0 %1483
        %1485 = vrot.lane.b32.xlu0 %v1142, 96
        %v1486 = vpop.permute.xlu0 %1485
        %1489 = vrot.lane.b32.xlu0 %v1138, 64
        %v1490 = vpop.permute.xlu0 %1489
        %1491 = vrot.lane.b32.xlu0 %v1142, 64
        %v1492 = vpop.permute.xlu0 %1491
        %1495 = vrot.lane.b32.xlu0 %v1138, 32
        %v1496 = vpop.permute.xlu0 %1495
        %1497 = vrot.lane.b32.xlu0 %v1142, 32
        %v1498 = vpop.permute.xlu0 %1497
        %v1501 = vcombine.low %v1138, %v1490
        %v1502 = vcombine.high %v1138, %v1490
        %v1504 = vunpack.c.l.s4 1983009808
        %v1505 = vunpack.c.0.s8 %v1504
        %v1506 = vlaneseq
        %v1507 = vshrl.u32 %v1506, 7
        %v1508 = vsub.s32 %v1505, %v1507
        %v1509 = vrot.slane %v1501, %v1508
        %v1511 = vunpack.c.l.s4 1983009808
        %v1512 = vunpack.c.0.s8 %v1511
        %v1513 = vlaneseq
        %v1514 = vshrl.u32 %v1513, 7
        %v1515 = vsub.s32 %v1512, %v1514
        %v1516 = vrot.slane %v1502, %v1515
        %v1517 = vcombine.low %v1484, %v1496
        %v1518 = vcombine.high %v1484, %v1496
        %v1520 = vunpack.c.l.s4 1983009808
        %v1521 = vunpack.c.0.s8 %v1520
        %v1522 = vlaneseq
        %v1523 = vshrl.u32 %v1522, 7
        %v1524 = vsub.s32 %v1521, %v1523
        %v1525 = vrot.slane %v1517, %v1524
        %v1527 = vunpack.c.l.s4 1983009808
        %v1528 = vunpack.c.0.s8 %v1527
        %v1529 = vlaneseq
        %v1530 = vshrl.u32 %v1529, 7
        %v1531 = vsub.s32 %v1528, %v1530
        %v1532 = vrot.slane %v1518, %v1531
        %v1533 = vcombine.low %v1509, %v1525
        %v1534 = vcombine.high %v1509, %v1525
        %v1536 = vunpack.c.l.s4 1934713408
        %v1537 = vunpack.c.0.s8 %v1536
        %v1538 = vlaneseq
        %v1539 = vshrl.u32 %v1538, 7
        %v1540 = vsub.s32 %v1537, %v1539
        %v1541 = vrot.slane %v1533, %v1540
        %v1543 = vunpack.c.l.s4 1934713408
        %v1544 = vunpack.c.0.s8 %v1543
        %v1545 = vlaneseq
        %v1546 = vshrl.u32 %v1545, 7
        %v1547 = vsub.s32 %v1544, %v1546
        %v1548 = vrot.slane %v1534, %v1547
        %v1549 = vcombine.low %v1516, %v1532
        %v1550 = vcombine.high %v1516, %v1532
        %v1552 = vunpack.c.l.s4 1934713408
        %v1553 = vunpack.c.0.s8 %v1552
        %v1554 = vlaneseq
        %v1555 = vshrl.u32 %v1554, 7
        %v1556 = vsub.s32 %v1553, %v1555
        %v1557 = vrot.slane %v1549, %v1556
        %v1559 = vunpack.c.l.s4 1934713408
        %v1560 = vunpack.c.0.s8 %v1559
        %v1561 = vlaneseq
        %v1562 = vshrl.u32 %v1561, 7
        %v1563 = vsub.s32 %v1560, %v1562
        %v1564 = vrot.slane %v1550, %v1563
        %v1565 = vcombine.high %v1541, 0.0
        %v1566 = vcombine.high %v1548, 0.0
        %v1567 = vcombine.high %v1557, 0.0
        %v1568 = vcombine.high %v1564, 0.0
        %v1569 = vcombine.low %v1142, %v1492
        %v1570 = vcombine.high %v1142, %v1492
        %v1572 = vunpack.c.l.s4 1983009808
        %v1573 = vunpack.c.0.s8 %v1572
        %v1574 = vlaneseq
        %v1575 = vshrl.u32 %v1574, 7
        %v1576 = vsub.s32 %v1573, %v1575
        %v1577 = vrot.slane %v1569, %v1576
        %v1579 = vunpack.c.l.s4 1983009808
        %v1580 = vunpack.c.0.s8 %v1579
        %v1581 = vlaneseq
        %v1582 = vshrl.u32 %v1581, 7
        %v1583 = vsub.s32 %v1580, %v1582
        %v1584 = vrot.slane %v1570, %v1583
        %v1585 = vcombine.low %v1486, %v1498
        %v1586 = vcombine.high %v1486, %v1498
        %v1588 = vunpack.c.l.s4 1983009808
        %v1589 = vunpack.c.0.s8 %v1588
        %v1590 = vlaneseq
        %v1591 = vshrl.u32 %v1590, 7
        %v1592 = vsub.s32 %v1589, %v1591
        %v1593 = vrot.slane %v1585, %v1592
        %v1595 = vunpack.c.l.s4 1983009808
        %v1596 = vunpack.c.0.s8 %v1595
        %v1597 = vlaneseq
        %v1598 = vshrl.u32 %v1597, 7
        %v1599 = vsub.s32 %v1596, %v1598
        %v1600 = vrot.slane %v1586, %v1599
        %v1601 = vcombine.low %v1577, %v1593
        %v1602 = vcombine.high %v1577, %v1593
        %v1604 = vunpack.c.l.s4 1934713408
        %v1605 = vunpack.c.0.s8 %v1604
        %v1606 = vlaneseq
        %v1607 = vshrl.u32 %v1606, 7
        %v1608 = vsub.s32 %v1605, %v1607
        %v1609 = vrot.slane %v1601, %v1608
        %v1611 = vunpack.c.l.s4 1934713408
        %v1612 = vunpack.c.0.s8 %v1611
        %v1613 = vlaneseq
        %v1614 = vshrl.u32 %v1613, 7
        %v1615 = vsub.s32 %v1612, %v1614
        %v1616 = vrot.slane %v1602, %v1615
        %v1617 = vcombine.low %v1584, %v1600
        %v1618 = vcombine.high %v1584, %v1600
        %v1620 = vunpack.c.l.s4 1934713408
        %v1621 = vunpack.c.0.s8 %v1620
        %v1622 = vlaneseq
        %v1623 = vshrl.u32 %v1622, 7
        %v1624 = vsub.s32 %v1621, %v1623
        %v1625 = vrot.slane %v1617, %v1624
        %v1627 = vunpack.c.l.s4 1934713408
        %v1628 = vunpack.c.0.s8 %v1627
        %v1629 = vlaneseq
        %v1630 = vshrl.u32 %v1629, 7
        %v1631 = vsub.s32 %v1628, %v1630
        %v1632 = vrot.slane %v1618, %v1631
        %v1633 = vcombine.high %v1609, 0.0
        %v1634 = vcombine.high %v1616, 0.0
        %v1635 = vcombine.high %v1625, 0.0
        %v1636 = vcombine.high %v1632, 0.0
        %v1637 = vcombine.low %v1541, %v1548
        %v1639 = vunpack.c.l.s4 1983009808
        %v1640 = vunpack.c.0.s8 %v1639
        %v1641 = vlaneseq
        %v1642 = vshrl.u32 %v1641, 7
        %v1643 = vsub.s32 %v1640, %v1642
        %v1644 = vrot.slane %v1637, %v1643
        %v1645 = vcombine.low %v1565, %v1566
        %v1647 = vunpack.c.l.s4 1983009808
        %v1648 = vunpack.c.0.s8 %v1647
        %v1649 = vlaneseq
        %v1650 = vshrl.u32 %v1649, 7
        %v1651 = vsub.s32 %v1648, %v1650
        %v1652 = vrot.slane %v1645, %v1651
        %v1653 = vcombine.low %v1557, %v1564
        %v1655 = vunpack.c.l.s4 1983009808
        %v1656 = vunpack.c.0.s8 %v1655
        %v1657 = vlaneseq
        %v1658 = vshrl.u32 %v1657, 7
        %v1659 = vsub.s32 %v1656, %v1658
        %v1660 = vrot.slane %v1653, %v1659
        %v1661 = vcombine.low %v1567, %v1568
        %v1663 = vunpack.c.l.s4 1983009808
        %v1664 = vunpack.c.0.s8 %v1663
        %v1665 = vlaneseq
        %v1666 = vshrl.u32 %v1665, 7
        %v1667 = vsub.s32 %v1664, %v1666
        %v1668 = vrot.slane %v1661, %v1667
        %v1669 = vcombine.low %v1644, %v1652
        %v1670 = vcombine.high %v1644, %v1652
        %v1672 = vunpack.c.l.s4 1934713408
        %v1673 = vunpack.c.0.s8 %v1672
        %v1674 = vlaneseq
        %v1675 = vshrl.u32 %v1674, 7
        %v1676 = vsub.s32 %v1673, %v1675
        %v1677 = vrot.slane %v1669, %v1676
        %v1679 = vunpack.c.l.s4 1934713408
        %v1680 = vunpack.c.0.s8 %v1679
        %v1681 = vlaneseq
        %v1682 = vshrl.u32 %v1681, 7
        %v1683 = vsub.s32 %v1680, %v1682
        %v1684 = vrot.slane %v1670, %v1683
        %v1685 = vcombine.low %v1660, %v1668
        %v1686 = vcombine.high %v1660, %v1668
        %v1688 = vunpack.c.l.s4 1934713408
        %v1689 = vunpack.c.0.s8 %v1688
        %v1690 = vlaneseq
        %v1691 = vshrl.u32 %v1690, 7
        %v1692 = vsub.s32 %v1689, %v1691
        %v1693 = vrot.slane %v1685, %v1692
        %v1695 = vunpack.c.l.s4 1934713408
        %v1696 = vunpack.c.0.s8 %v1695
        %v1697 = vlaneseq
        %v1698 = vshrl.u32 %v1697, 7
        %v1699 = vsub.s32 %v1696, %v1698
        %v1700 = vrot.slane %v1686, %v1699
        %v1701 = vcombine.low %v1677, %v1693
        %v1702 = vcombine.high %v1677, %v1693
        %v1703 = vcombine.low %v1684, %v1700
        %v1704 = vcombine.high %v1684, %v1700
        %v1705 = vcombine.low %v1609, %v1616
        %v1707 = vunpack.c.l.s4 1983009808
        %v1708 = vunpack.c.0.s8 %v1707
        %v1709 = vlaneseq
        %v1710 = vshrl.u32 %v1709, 7
        %v1711 = vsub.s32 %v1708, %v1710
        %v1712 = vrot.slane %v1705, %v1711
        %v1713 = vcombine.low %v1633, %v1634
        %v1715 = vunpack.c.l.s4 1983009808
        %v1716 = vunpack.c.0.s8 %v1715
        %v1717 = vlaneseq
        %v1718 = vshrl.u32 %v1717, 7
        %v1719 = vsub.s32 %v1716, %v1718
        %v1720 = vrot.slane %v1713, %v1719
        %v1721 = vcombine.low %v1625, %v1632
        %v1723 = vunpack.c.l.s4 1983009808
        %v1724 = vunpack.c.0.s8 %v1723
        %v1725 = vlaneseq
        %v1726 = vshrl.u32 %v1725, 7
        %v1727 = vsub.s32 %v1724, %v1726
        %v1728 = vrot.slane %v1721, %v1727
        %v1729 = vcombine.low %v1635, %v1636
        %v1731 = vunpack.c.l.s4 1983009808
        %v1732 = vunpack.c.0.s8 %v1731
        %v1733 = vlaneseq
        %v1734 = vshrl.u32 %v1733, 7
        %v1735 = vsub.s32 %v1732, %v1734
        %v1736 = vrot.slane %v1729, %v1735
        %v1737 = vcombine.low %v1712, %v1720
        %v1738 = vcombine.high %v1712, %v1720
        %v1740 = vunpack.c.l.s4 1934713408
        %v1741 = vunpack.c.0.s8 %v1740
        %v1742 = vlaneseq
        %v1743 = vshrl.u32 %v1742, 7
        %v1744 = vsub.s32 %v1741, %v1743
        %v1745 = vrot.slane %v1737, %v1744
        %v1747 = vunpack.c.l.s4 1934713408
        %v1748 = vunpack.c.0.s8 %v1747
        %v1749 = vlaneseq
        %v1750 = vshrl.u32 %v1749, 7
        %v1751 = vsub.s32 %v1748, %v1750
        %v1752 = vrot.slane %v1738, %v1751
        %v1753 = vcombine.low %v1728, %v1736
        %v1754 = vcombine.high %v1728, %v1736
        %v1756 = vunpack.c.l.s4 1934713408
        %v1757 = vunpack.c.0.s8 %v1756
        %v1758 = vlaneseq
        %v1759 = vshrl.u32 %v1758, 7
        %v1760 = vsub.s32 %v1757, %v1759
        %v1761 = vrot.slane %v1753, %v1760
        %v1763 = vunpack.c.l.s4 1934713408
        %v1764 = vunpack.c.0.s8 %v1763
        %v1765 = vlaneseq
        %v1766 = vshrl.u32 %v1765, 7
        %v1767 = vsub.s32 %v1764, %v1766
        %v1768 = vrot.slane %v1754, %v1767
        %v1769 = vcombine.low %v1745, %v1761
        %v1770 = vcombine.high %v1745, %v1761
        %v1771 = vcombine.low %v1752, %v1768
        %v1772 = vcombine.high %v1752, %v1768
        %v1773 = vpack.c.bf16 %v1769, %v1701
        %v1774 = vpack.c.bf16 %v1770, %v1702
        %v1775 = vpack.c.bf16 %v1771, %v1703
        %v1776 = vpack.c.bf16 %v1772, %v1704
        %1779 = vrot.lane.b32.xlu0 %v1179, 96
        %v1780 = vpop.permute.xlu0 %1779
        %1781 = vrot.lane.b32.xlu0 %v1182, 96
        %v1782 = vpop.permute.xlu0 %1781
        %1785 = vrot.lane.b32.xlu0 %v1179, 64
        %v1786 = vpop.permute.xlu0 %1785
        %1787 = vrot.lane.b32.xlu0 %v1182, 64
        %v1788 = vpop.permute.xlu0 %1787
        %1791 = vrot.lane.b32.xlu0 %v1179, 32
        %v1792 = vpop.permute.xlu0 %1791
        %1793 = vrot.lane.b32.xlu0 %v1182, 32
        %v1794 = vpop.permute.xlu0 %1793
        %v1797 = vcombine.low %v1179, %v1786
        %v1798 = vcombine.high %v1179, %v1786
        %v1800 = vunpack.c.l.s4 1983009808
        %v1801 = vunpack.c.0.s8 %v1800
        %v1802 = vlaneseq
        %v1803 = vshrl.u32 %v1802, 7
        %v1804 = vsub.s32 %v1801, %v1803
        %v1805 = vrot.slane %v1797, %v1804
        %v1807 = vunpack.c.l.s4 1983009808
        %v1808 = vunpack.c.0.s8 %v1807
        %v1809 = vlaneseq
        %v1810 = vshrl.u32 %v1809, 7
        %v1811 = vsub.s32 %v1808, %v1810
        %v1812 = vrot.slane %v1798, %v1811
        %v1813 = vcombine.low %v1780, %v1792
        %v1814 = vcombine.high %v1780, %v1792
        %v1816 = vunpack.c.l.s4 1983009808
        %v1817 = vunpack.c.0.s8 %v1816
        %v1818 = vlaneseq
        %v1819 = vshrl.u32 %v1818, 7
        %v1820 = vsub.s32 %v1817, %v1819
        %v1821 = vrot.slane %v1813, %v1820
        %v1823 = vunpack.c.l.s4 1983009808
        %v1824 = vunpack.c.0.s8 %v1823
        %v1825 = vlaneseq
        %v1826 = vshrl.u32 %v1825, 7
        %v1827 = vsub.s32 %v1824, %v1826
        %v1828 = vrot.slane %v1814, %v1827
        %v1829 = vcombine.low %v1805, %v1821
        %v1830 = vcombine.high %v1805, %v1821
        %v1832 = vunpack.c.l.s4 1934713408
        %v1833 = vunpack.c.0.s8 %v1832
        %v1834 = vlaneseq
        %v1835 = vshrl.u32 %v1834, 7
        %v1836 = vsub.s32 %v1833, %v1835
        %v1837 = vrot.slane %v1829, %v1836
        %v1839 = vunpack.c.l.s4 1934713408
        %v1840 = vunpack.c.0.s8 %v1839
        %v1841 = vlaneseq
        %v1842 = vshrl.u32 %v1841, 7
        %v1843 = vsub.s32 %v1840, %v1842
        %v1844 = vrot.slane %v1830, %v1843
        %v1845 = vcombine.low %v1812, %v1828
        %v1846 = vcombine.high %v1812, %v1828
        %v1848 = vunpack.c.l.s4 1934713408
        %v1849 = vunpack.c.0.s8 %v1848
        %v1850 = vlaneseq
        %v1851 = vshrl.u32 %v1850, 7
        %v1852 = vsub.s32 %v1849, %v1851
        %v1853 = vrot.slane %v1845, %v1852
        %v1855 = vunpack.c.l.s4 1934713408
        %v1856 = vunpack.c.0.s8 %v1855
        %v1857 = vlaneseq
        %v1858 = vshrl.u32 %v1857, 7
        %v1859 = vsub.s32 %v1856, %v1858
        %v1860 = vrot.slane %v1846, %v1859
        %v1861 = vcombine.high %v1837, 0.0
        %v1862 = vcombine.high %v1844, 0.0
        %v1863 = vcombine.high %v1853, 0.0
        %v1864 = vcombine.high %v1860, 0.0
        %v1865 = vcombine.low %v1182, %v1788
        %v1866 = vcombine.high %v1182, %v1788
        %v1868 = vunpack.c.l.s4 1983009808
        %v1869 = vunpack.c.0.s8 %v1868
        %v1870 = vlaneseq
        %v1871 = vshrl.u32 %v1870, 7
        %v1872 = vsub.s32 %v1869, %v1871
        %v1873 = vrot.slane %v1865, %v1872
        %v1875 = vunpack.c.l.s4 1983009808
        %v1876 = vunpack.c.0.s8 %v1875
        %v1877 = vlaneseq
        %v1878 = vshrl.u32 %v1877, 7
        %v1879 = vsub.s32 %v1876, %v1878
        %v1880 = vrot.slane %v1866, %v1879
        %v1881 = vcombine.low %v1782, %v1794
        %v1882 = vcombine.high %v1782, %v1794
        %v1884 = vunpack.c.l.s4 1983009808
        %v1885 = vunpack.c.0.s8 %v1884
        %v1886 = vlaneseq
        %v1887 = vshrl.u32 %v1886, 7
        %v1888 = vsub.s32 %v1885, %v1887
        %v1889 = vrot.slane %v1881, %v1888
        %v1891 = vunpack.c.l.s4 1983009808
        %v1892 = vunpack.c.0.s8 %v1891
        %v1893 = vlaneseq
        %v1894 = vshrl.u32 %v1893, 7
        %v1895 = vsub.s32 %v1892, %v1894
        %v1896 = vrot.slane %v1882, %v1895
        %v1897 = vcombine.low %v1873, %v1889
        %v1898 = vcombine.high %v1873, %v1889
        %v1900 = vunpack.c.l.s4 1934713408
        %v1901 = vunpack.c.0.s8 %v1900
        %v1902 = vlaneseq
        %v1903 = vshrl.u32 %v1902, 7
        %v1904 = vsub.s32 %v1901, %v1903
        %v1905 = vrot.slane %v1897, %v1904
        %v1907 = vunpack.c.l.s4 1934713408
        %v1908 = vunpack.c.0.s8 %v1907
        %v1909 = vlaneseq
        %v1910 = vshrl.u32 %v1909, 7
        %v1911 = vsub.s32 %v1908, %v1910
        %v1912 = vrot.slane %v1898, %v1911
        %v1913 = vcombine.low %v1880, %v1896
        %v1914 = vcombine.high %v1880, %v1896
        %v1916 = vunpack.c.l.s4 1934713408
        %v1917 = vunpack.c.0.s8 %v1916
        %v1918 = vlaneseq
        %v1919 = vshrl.u32 %v1918, 7
        %v1920 = vsub.s32 %v1917, %v1919
        %v1921 = vrot.slane %v1913, %v1920
        %v1923 = vunpack.c.l.s4 1934713408
        %v1924 = vunpack.c.0.s8 %v1923
        %v1925 = vlaneseq
        %v1926 = vshrl.u32 %v1925, 7
        %v1927 = vsub.s32 %v1924, %v1926
        %v1928 = vrot.slane %v1914, %v1927
        %v1929 = vcombine.high %v1905, 0.0
        %v1930 = vcombine.high %v1912, 0.0
        %v1931 = vcombine.high %v1921, 0.0
        %v1932 = vcombine.high %v1928, 0.0
        %v1933 = vcombine.low %v1837, %v1844
        %v1935 = vunpack.c.l.s4 1983009808
        %v1936 = vunpack.c.0.s8 %v1935
        %v1937 = vlaneseq
        %v1938 = vshrl.u32 %v1937, 7
        %v1939 = vsub.s32 %v1936, %v1938
        %v1940 = vrot.slane %v1933, %v1939
        %v1941 = vcombine.low %v1861, %v1862
        %v1943 = vunpack.c.l.s4 1983009808
        %v1944 = vunpack.c.0.s8 %v1943
        %v1945 = vlaneseq
        %v1946 = vshrl.u32 %v1945, 7
        %v1947 = vsub.s32 %v1944, %v1946
        %v1948 = vrot.slane %v1941, %v1947
        %v1949 = vcombine.low %v1853, %v1860
        %v1951 = vunpack.c.l.s4 1983009808
        %v1952 = vunpack.c.0.s8 %v1951
        %v1953 = vlaneseq
        %v1954 = vshrl.u32 %v1953, 7
        %v1955 = vsub.s32 %v1952, %v1954
        %v1956 = vrot.slane %v1949, %v1955
        %v1957 = vcombine.low %v1863, %v1864
        %v1959 = vunpack.c.l.s4 1983009808
        %v1960 = vunpack.c.0.s8 %v1959
        %v1961 = vlaneseq
        %v1962 = vshrl.u32 %v1961, 7
        %v1963 = vsub.s32 %v1960, %v1962
        %v1964 = vrot.slane %v1957, %v1963
        %v1965 = vcombine.low %v1940, %v1948
        %v1966 = vcombine.high %v1940, %v1948
        %v1968 = vunpack.c.l.s4 1934713408
        %v1969 = vunpack.c.0.s8 %v1968
        %v1970 = vlaneseq
        %v1971 = vshrl.u32 %v1970, 7
        %v1972 = vsub.s32 %v1969, %v1971
        %v1973 = vrot.slane %v1965, %v1972
        %v1975 = vunpack.c.l.s4 1934713408
        %v1976 = vunpack.c.0.s8 %v1975
        %v1977 = vlaneseq
        %v1978 = vshrl.u32 %v1977, 7
        %v1979 = vsub.s32 %v1976, %v1978
        %v1980 = vrot.slane %v1966, %v1979
        %v1981 = vcombine.low %v1956, %v1964
        %v1982 = vcombine.high %v1956, %v1964
        %v1984 = vunpack.c.l.s4 1934713408
        %v1985 = vunpack.c.0.s8 %v1984
        %v1986 = vlaneseq
        %v1987 = vshrl.u32 %v1986, 7
        %v1988 = vsub.s32 %v1985, %v1987
        %v1989 = vrot.slane %v1981, %v1988
        %v1991 = vunpack.c.l.s4 1934713408
        %v1992 = vunpack.c.0.s8 %v1991
        %v1993 = vlaneseq
        %v1994 = vshrl.u32 %v1993, 7
        %v1995 = vsub.s32 %v1992, %v1994
        %v1996 = vrot.slane %v1982, %v1995
        %v1997 = vcombine.low %v1973, %v1989
        %v1998 = vcombine.high %v1973, %v1989
        %v1999 = vcombine.low %v1980, %v1996
        %v2000 = vcombine.high %v1980, %v1996
        %v2001 = vcombine.low %v1905, %v1912
        %v2003 = vunpack.c.l.s4 1983009808
        %v2004 = vunpack.c.0.s8 %v2003
        %v2005 = vlaneseq
        %v2006 = vshrl.u32 %v2005, 7
        %v2007 = vsub.s32 %v2004, %v2006
        %v2008 = vrot.slane %v2001, %v2007
        %v2009 = vcombine.low %v1929, %v1930
        %v2011 = vunpack.c.l.s4 1983009808
        %v2012 = vunpack.c.0.s8 %v2011
        %v2013 = vlaneseq
        %v2014 = vshrl.u32 %v2013, 7
        %v2015 = vsub.s32 %v2012, %v2014
        %v2016 = vrot.slane %v2009, %v2015
        %v2017 = vcombine.low %v1921, %v1928
        %v2019 = vunpack.c.l.s4 1983009808
        %v2020 = vunpack.c.0.s8 %v2019
        %v2021 = vlaneseq
        %v2022 = vshrl.u32 %v2021, 7
        %v2023 = vsub.s32 %v2020, %v2022
        %v2024 = vrot.slane %v2017, %v2023
        %v2025 = vcombine.low %v1931, %v1932
        %v2027 = vunpack.c.l.s4 1983009808
        %v2028 = vunpack.c.0.s8 %v2027
        %v2029 = vlaneseq
        %v2030 = vshrl.u32 %v2029, 7
        %v2031 = vsub.s32 %v2028, %v2030
        %v2032 = vrot.slane %v2025, %v2031
        %v2033 = vcombine.low %v2008, %v2016
        %v2034 = vcombine.high %v2008, %v2016
        %v2036 = vunpack.c.l.s4 1934713408
        %v2037 = vunpack.c.0.s8 %v2036
        %v2038 = vlaneseq
        %v2039 = vshrl.u32 %v2038, 7
        %v2040 = vsub.s32 %v2037, %v2039
        %v2041 = vrot.slane %v2033, %v2040
        %v2043 = vunpack.c.l.s4 1934713408
        %v2044 = vunpack.c.0.s8 %v2043
        %v2045 = vlaneseq
        %v2046 = vshrl.u32 %v2045, 7
        %v2047 = vsub.s32 %v2044, %v2046
        %v2048 = vrot.slane %v2034, %v2047
        %v2049 = vcombine.low %v2024, %v2032
        %v2050 = vcombine.high %v2024, %v2032
        %v2052 = vunpack.c.l.s4 1934713408
        %v2053 = vunpack.c.0.s8 %v2052
        %v2054 = vlaneseq
        %v2055 = vshrl.u32 %v2054, 7
        %v2056 = vsub.s32 %v2053, %v2055
        %v2057 = vrot.slane %v2049, %v2056
        %v2059 = vunpack.c.l.s4 1934713408
        %v2060 = vunpack.c.0.s8 %v2059
        %v2061 = vlaneseq
        %v2062 = vshrl.u32 %v2061, 7
        %v2063 = vsub.s32 %v2060, %v2062
        %v2064 = vrot.slane %v2050, %v2063
        %v2065 = vcombine.low %v2041, %v2057
        %v2066 = vcombine.high %v2041, %v2057
        %v2067 = vcombine.low %v2048, %v2064
        %v2068 = vcombine.high %v2048, %v2064
        %v2069 = vpack.c.bf16 %v2065, %v1997
        %v2070 = vpack.c.bf16 %v2066, %v1998
        %v2071 = vpack.c.bf16 %v2067, %v1999
        %v2072 = vpack.c.bf16 %v2068, %v2000
        %v2073 = vld [vmem:[#allocation5] sm:$0xff]
        %v2074 = vld [vmem:[#allocation5 + $0x8] sm:$0xff]
        %vm2075 = vcmask 261120
        %v2077 = vsel %vm2075, %v1477, 0
        %v2080 = vsel %vm2075, %v1773, 0
        %2082 = vmatprep.subr.bf16.mxu0 0
        %2083 = vmatpush1.bf16.xpose.msra.mxu0 0
        %2084 = vmatprep.subr.bf16.mxu0 0
        %2085 = vmatpush1.bf16.xpose.msra.mxu0 0
        %2086 = vmatprep.subr.bf16.mxu0 0
        %2087 = vmatpush1.bf16.xpose.msra.mxu0 0
        %2088 = vmatprep.subr.bf16.mxu0 0
        %2089 = vmatpush1.bf16.xpose.msra.mxu0 0
        %2090 = vmatprep.subr.bf16.mxu0 0
        %2091 = vmatpush1.bf16.xpose.msra.mxu0 0
        %2092 = vmatprep.subr.bf16.mxu0 0
        %2093 = vmatpush1.bf16.xpose.msra.mxu0 0
        %2094 = vmatprep.subr.bf16.mxu0 0
        %2095 = vmatpush1.bf16.xpose.msra.mxu0 0
        %2096 = vmatprep.subr.bf16.mxu0 0
        %2097 = vmatpush1.bf16.xpose.msra.mxu0 %v2080
        %2098 = vmatprep.subr.bf16.mxu0 0
        %2099 = vmatpush2.bf16.xpose.msra.mxu0 0
        %2100 = vmatprep.subr.bf16.mxu0 0
        %2101 = vmatpush2.bf16.xpose.msra.mxu0 0
        %2102 = vmatprep.subr.bf16.mxu0 0
        %2103 = vmatpush2.bf16.xpose.msra.mxu0 0
        %2104 = vmatprep.subr.bf16.mxu0 0
        %2105 = vmatpush2.bf16.xpose.msra.mxu0 0
        %2106 = vmatprep.subr.bf16.mxu0 0
        %2107 = vmatpush2.bf16.xpose.msra.mxu0 0
        %2108 = vmatprep.subr.bf16.mxu0 0
        %2109 = vmatpush2.bf16.xpose.msra.mxu0 0
        %2110 = vmatprep.subr.bf16.mxu0 0
        %2111 = vmatpush2.bf16.xpose.msra.mxu0 0
        %2112 = vmatprep.subr.bf16.mxu0 0
        %2113 = vmatpush2.bf16.xpose.msra.mxu0 0
        %2114 = vmatprep.mubr.bf16.mxu0 0
        %2115 = vmatmul.mubr.bf16.gmra.mxu0 %v2077
        %v2116 = vpop.f32.mrf.mxu0
        %v2117 = vadd.f32 %v2073, %v2116
        %v2118 = vpop.f32.mrf.mxu0
        %v2119 = vpop.f32.mrf.mxu0
        %v2120 = vadd.f32 %v2074, %v2119
        %v2121 = vpop.f32.mrf.mxu0
        %2122 = vdwg.mxu0
        %v2124 = vsel %vm2075, %v1478, 0
        %v2127 = vsel %vm2075, %v1774, 0
        %2129 = vmatprep.subr.bf16.mxu0 0
        %2130 = vmatpush1.bf16.xpose.msra.mxu0 0
        %2131 = vmatprep.subr.bf16.mxu0 0
        %2132 = vmatpush1.bf16.xpose.msra.mxu0 0
        %2133 = vmatprep.subr.bf16.mxu0 0
        %2134 = vmatpush1.bf16.xpose.msra.mxu0 0
        %2135 = vmatprep.subr.bf16.mxu0 0
        %2136 = vmatpush1.bf16.xpose.msra.mxu0 0
        %2137 = vmatprep.subr.bf16.mxu0 0
        %2138 = vmatpush1.bf16.xpose.msra.mxu0 0
        %2139 = vmatprep.subr.bf16.mxu0 0
        %2140 = vmatpush1.bf16.xpose.msra.mxu0 0
        %2141 = vmatprep.subr.bf16.mxu0 0
        %2142 = vmatpush1.bf16.xpose.msra.mxu0 0
        %2143 = vmatprep.subr.bf16.mxu0 0
        %2144 = vmatpush1.bf16.xpose.msra.mxu0 %v2127
        %2145 = vmatprep.subr.bf16.mxu0 0
        %2146 = vmatpush2.bf16.xpose.msra.mxu0 0
        %2147 = vmatprep.subr.bf16.mxu0 0
        %2148 = vmatpush2.bf16.xpose.msra.mxu0 0
        %2149 = vmatprep.subr.bf16.mxu0 0
        %2150 = vmatpush2.bf16.xpose.msra.mxu0 0
        %2151 = vmatprep.subr.bf16.mxu0 0
        %2152 = vmatpush2.bf16.xpose.msra.mxu0 0
        %2153 = vmatprep.subr.bf16.mxu0 0
        %2154 = vmatpush2.bf16.xpose.msra.mxu0 0
        %2155 = vmatprep.subr.bf16.mxu0 0
        %2156 = vmatpush2.bf16.xpose.msra.mxu0 0
        %2157 = vmatprep.subr.bf16.mxu0 0
        %2158 = vmatpush2.bf16.xpose.msra.mxu0 0
        %2159 = vmatprep.subr.bf16.mxu0 0
        %2160 = vmatpush2.bf16.xpose.msra.mxu0 0
        %2161 = vmatprep.mubr.bf16.mxu0 0
        %2162 = vmatmul.mubr.bf16.gmra.mxu0 %v2124
        %v2163 = vpop.f32.mrf.mxu0
        %v2164 = vadd.f32 %v2073, %v2163
        %v2165 = vpop.f32.mrf.mxu0
        %v2166 = vpop.f32.mrf.mxu0
        %v2167 = vadd.f32 %v2074, %v2166
        %v2168 = vpop.f32.mrf.mxu0
        %2169 = vdwg.mxu0
        %v2171 = vsel %vm2075, %v1479, 0
        %v2174 = vsel %vm2075, %v1775, 0
        %2176 = vmatprep.subr.bf16.mxu0 0
        %2177 = vmatpush1.bf16.xpose.msra.mxu0 0
        %2178 = vmatprep.subr.bf16.mxu0 0
        %2179 = vmatpush1.bf16.xpose.msra.mxu0 0
        %2180 = vmatprep.subr.bf16.mxu0 0
        %2181 = vmatpush1.bf16.xpose.msra.mxu0 0
        %2182 = vmatprep.subr.bf16.mxu0 0
        %2183 = vmatpush1.bf16.xpose.msra.mxu0 0
        %2184 = vmatprep.subr.bf16.mxu0 0
        %2185 = vmatpush1.bf16.xpose.msra.mxu0 0
        %2186 = vmatprep.subr.bf16.mxu0 0
        %2187 = vmatpush1.bf16.xpose.msra.mxu0 0
        %2188 = vmatprep.subr.bf16.mxu0 0
        %2189 = vmatpush1.bf16.xpose.msra.mxu0 0
        %2190 = vmatprep.subr.bf16.mxu0 0
        %2191 = vmatpush1.bf16.xpose.msra.mxu0 %v2174
        %2192 = vmatprep.subr.bf16.mxu0 0
        %2193 = vmatpush2.bf16.xpose.msra.mxu0 0
        %2194 = vmatprep.subr.bf16.mxu0 0
        %2195 = vmatpush2.bf16.xpose.msra.mxu0 0
        %2196 = vmatprep.subr.bf16.mxu0 0
        %2197 = vmatpush2.bf16.xpose.msra.mxu0 0
        %2198 = vmatprep.subr.bf16.mxu0 0
        %2199 = vmatpush2.bf16.xpose.msra.mxu0 0
        %2200 = vmatprep.subr.bf16.mxu0 0
        %2201 = vmatpush2.bf16.xpose.msra.mxu0 0
        %2202 = vmatprep.subr.bf16.mxu0 0
        %2203 = vmatpush2.bf16.xpose.msra.mxu0 0
        %2204 = vmatprep.subr.bf16.mxu0 0
        %2205 = vmatpush2.bf16.xpose.msra.mxu0 0
        %2206 = vmatprep.subr.bf16.mxu0 0
        %2207 = vmatpush2.bf16.xpose.msra.mxu0 0
        %2208 = vmatprep.mubr.bf16.mxu0 0
        %2209 = vmatmul.mubr.bf16.gmra.mxu0 %v2171
        %v2210 = vpop.f32.mrf.mxu0
        %v2211 = vadd.f32 %v2073, %v2210
        %v2212 = vpop.f32.mrf.mxu0
        %v2213 = vpop.f32.mrf.mxu0
        %v2214 = vadd.f32 %v2074, %v2213
        %v2215 = vpop.f32.mrf.mxu0
        %2216 = vdwg.mxu0
        %v2218 = vsel %vm2075, %v1480, 0
        %v2221 = vsel %vm2075, %v1776, 0
        %2223 = vmatprep.subr.bf16.mxu0 0
        %2224 = vmatpush1.bf16.xpose.msra.mxu0 0
        %2225 = vmatprep.subr.bf16.mxu0 0
        %2226 = vmatpush1.bf16.xpose.msra.mxu0 0
        %2227 = vmatprep.subr.bf16.mxu0 0
        %2228 = vmatpush1.bf16.xpose.msra.mxu0 0
        %2229 = vmatprep.subr.bf16.mxu0 0
        %2230 = vmatpush1.bf16.xpose.msra.mxu0 0
        %2231 = vmatprep.subr.bf16.mxu0 0
        %2232 = vmatpush1.bf16.xpose.msra.mxu0 0
        %2233 = vmatprep.subr.bf16.mxu0 0
        %2234 = vmatpush1.bf16.xpose.msra.mxu0 0
        %2235 = vmatprep.subr.bf16.mxu0 0
        %2236 = vmatpush1.bf16.xpose.msra.mxu0 0
        %2237 = vmatprep.subr.bf16.mxu0 0
        %2238 = vmatpush1.bf16.xpose.msra.mxu0 %v2221
        %2239 = vmatprep.subr.bf16.mxu0 0
        %2240 = vmatpush2.bf16.xpose.msra.mxu0 0
        %2241 = vmatprep.subr.bf16.mxu0 0
        %2242 = vmatpush2.bf16.xpose.msra.mxu0 0
        %2243 = vmatprep.subr.bf16.mxu0 0
        %2244 = vmatpush2.bf16.xpose.msra.mxu0 0
        %2245 = vmatprep.subr.bf16.mxu0 0
        %2246 = vmatpush2.bf16.xpose.msra.mxu0 0
        %2247 = vmatprep.subr.bf16.mxu0 0
        %2248 = vmatpush2.bf16.xpose.msra.mxu0 0
        %2249 = vmatprep.subr.bf16.mxu0 0
        %2250 = vmatpush2.bf16.xpose.msra.mxu0 0
        %2251 = vmatprep.subr.bf16.mxu0 0
        %2252 = vmatpush2.bf16.xpose.msra.mxu0 0
        %2253 = vmatprep.subr.bf16.mxu0 0
        %2254 = vmatpush2.bf16.xpose.msra.mxu0 0
        %2255 = vmatprep.mubr.bf16.mxu0 0
        %2256 = vmatmul.mubr.bf16.gmra.mxu0 %v2218
        %v2257 = vpop.f32.mrf.mxu0
        %v2258 = vadd.f32 %v2073, %v2257
        %v2259 = vpop.f32.mrf.mxu0
        %v2260 = vpop.f32.mrf.mxu0
        %v2261 = vadd.f32 %v2074, %v2260
        %v2262 = vpop.f32.mrf.mxu0
        %2263 = vdwg.mxu0
        %vm2264 = vcmask 130048
        %v2265 = vsel %vm2264, %v2117, -inf
        %2266 = vmax.xlane.f32.xlu0 %v2265
        %v2267 = vpop.xlane.xlu0 %2266
        %v2268 = vsel %vm2264, %v2120, -inf
        %2269 = vmax.xlane.f32.xlu0 %v2268
        %v2270 = vpop.xlane.xlu0 %2269
        %v2271 = vsel %vm2264, %v2164, -inf
        %2272 = vmax.xlane.f32.xlu0 %v2271
        %v2273 = vpop.xlane.xlu0 %2272
        %v2274 = vsel %vm2264, %v2167, -inf
        %2275 = vmax.xlane.f32.xlu0 %v2274
        %v2276 = vpop.xlane.xlu0 %2275
        %v2277 = vsel %vm2264, %v2211, -inf
        %2278 = vmax.xlane.f32.xlu0 %v2277
        %v2279 = vpop.xlane.xlu0 %2278
        %v2280 = vsel %vm2264, %v2214, -inf
        %2281 = vmax.xlane.f32.xlu0 %v2280
        %v2282 = vpop.xlane.xlu0 %2281
        %v2283 = vsel %vm2264, %v2258, -inf
        %2284 = vmax.xlane.f32.xlu0 %v2283
        %v2285 = vpop.xlane.xlu0 %2284
        %v2286 = vsel %vm2264, %v2261, -inf
        %2287 = vmax.xlane.f32.xlu0 %v2286
        %v2288 = vpop.xlane.xlu0 %2287
        %v2289 = vsub.f32 %v2117, %v2267
        %v2290 = vsub.f32 %v2120, %v2270
        %v2291 = vsub.f32 %v2164, %v2273
        %v2292 = vsub.f32 %v2167, %v2276
        %v2293 = vsub.f32 %v2211, %v2279
        %v2294 = vsub.f32 %v2214, %v2282
        %v2295 = vsub.f32 %v2258, %v2285
        %v2296 = vsub.f32 %v2261, %v2288
        %v2297 = vpack.c.bf16 %v2290, %v2289
        %v2298 = vpack.c.bf16 %v2292, %v2291
        %v2299 = vpack.c.bf16 %v2294, %v2293
        %v2300 = vpack.c.bf16 %v2296, %v2295
        %v2302 = vmul.bf16 %v2297, 1069105081
        %v2303 = vpow.bf16.pop %v2302
        %v2305 = vmul.bf16 %v2298, 1069105081
        %v2306 = vpow.bf16.pop %v2305
        %v2308 = vmul.bf16 %v2299, 1069105081
        %v2309 = vpow.bf16.pop %v2308
        %v2311 = vmul.bf16 %v2300, 1069105081
        %v2312 = vpow.bf16.pop %v2311
        %v2313 = vunpack.c.l.bf16 %v2303
        %v2314 = vunpack.c.h.bf16 %v2303
        %v2315 = vunpack.c.l.bf16 %v2306
        %v2316 = vunpack.c.h.bf16 %v2306
        %v2317 = vunpack.c.l.bf16 %v2309
        %v2318 = vunpack.c.h.bf16 %v2309
        %v2319 = vunpack.c.l.bf16 %v2312
        %v2320 = vunpack.c.h.bf16 %v2312
        %v2321 = vsel %vm2264, %v2313, 0.0
        %2322 = vadd.xlane.f32.xlu0 %v2321
        %v2323 = vpop.xlane.xlu0 %2322
        %v2324 = vsel %vm2264, %v2314, 0.0
        %2325 = vadd.xlane.f32.xlu0 %v2324
        %v2326 = vpop.xlane.xlu0 %2325
        %v2327 = vsel %vm2264, %v2315, 0.0
        %2328 = vadd.xlane.f32.xlu0 %v2327
        %v2329 = vpop.xlane.xlu0 %2328
        %v2330 = vsel %vm2264, %v2316, 0.0
        %2331 = vadd.xlane.f32.xlu0 %v2330
        %v2332 = vpop.xlane.xlu0 %2331
        %v2333 = vsel %vm2264, %v2317, 0.0
        %2334 = vadd.xlane.f32.xlu0 %v2333
        %v2335 = vpop.xlane.xlu0 %2334
        %v2336 = vsel %vm2264, %v2318, 0.0
        %2337 = vadd.xlane.f32.xlu0 %v2336
        %v2338 = vpop.xlane.xlu0 %2337
        %v2339 = vsel %vm2264, %v2319, 0.0
        %2340 = vadd.xlane.f32.xlu0 %v2339
        %v2341 = vpop.xlane.xlu0 %2340
        %v2342 = vsel %vm2264, %v2320, 0.0
        %2343 = vadd.xlane.f32.xlu0 %v2342
        %v2344 = vpop.xlane.xlu0 %2343
        %v2346 = vsel %vm2264, %v2303, 0
        %2348 = vmatprep.subr.bf16.mxu0 0
        %2349 = vmatpush1.bf16.msra.mxu0 0
        %2350 = vmatprep.subr.bf16.mxu0 0
        %2351 = vmatpush1.bf16.msra.mxu0 0
        %2352 = vmatprep.subr.bf16.mxu0 0
        %2353 = vmatpush1.bf16.msra.mxu0 0
        %2354 = vmatprep.subr.bf16.mxu0 0
        %2355 = vmatpush1.bf16.msra.mxu0 0
        %2356 = vmatprep.subr.bf16.mxu0 0
        %2357 = vmatpush1.bf16.msra.mxu0 0
        %2358 = vmatprep.subr.bf16.mxu0 0
        %2359 = vmatpush1.bf16.msra.mxu0 0
        %2360 = vmatprep.subr.bf16.mxu0 0
        %2361 = vmatpush1.bf16.msra.mxu0 0
        %2362 = vmatprep.subr.bf16.mxu0 0
        %2363 = vmatpush1.bf16.msra.mxu0 %v2069
        %2364 = vmatprep.subr.bf16.mxu0 0
        %2365 = vmatpush2.bf16.msra.mxu0 0
        %2366 = vmatprep.subr.bf16.mxu0 0
        %2367 = vmatpush2.bf16.msra.mxu0 0
        %2368 = vmatprep.subr.bf16.mxu0 0
        %2369 = vmatpush2.bf16.msra.mxu0 0
        %2370 = vmatprep.subr.bf16.mxu0 0
        %2371 = vmatpush2.bf16.msra.mxu0 0
        %2372 = vmatprep.subr.bf16.mxu0 0
        %2373 = vmatpush2.bf16.msra.mxu0 0
        %2374 = vmatprep.subr.bf16.mxu0 0
        %2375 = vmatpush2.bf16.msra.mxu0 0
        %2376 = vmatprep.subr.bf16.mxu0 0
        %2377 = vmatpush2.bf16.msra.mxu0 0
        %2378 = vmatprep.subr.bf16.mxu0 0
        %2379 = vmatpush2.bf16.msra.mxu0 0
        %2380 = vmatprep.mubr.bf16.mxu0 0
        %2381 = vmatmul.mubr.bf16.gmra.mxu0 %v2346
        %v2382 = vpop.f32.mrf.mxu0
        %v2383 = vadd.f32 0.0, %v2382
        %v2384 = vpop.f32.mrf.mxu0
        %v2385 = vpop.f32.mrf.mxu0
        %v2386 = vadd.f32 0.0, %v2385
        %v2387 = vpop.f32.mrf.mxu0
        %2388 = vdwg.mxu0
        %v2390 = vsel %vm2264, %v2306, 0
        %2392 = vmatprep.subr.bf16.mxu0 0
        %2393 = vmatpush1.bf16.msra.mxu0 0
        %2394 = vmatprep.subr.bf16.mxu0 0
        %2395 = vmatpush1.bf16.msra.mxu0 0
        %2396 = vmatprep.subr.bf16.mxu0 0
        %2397 = vmatpush1.bf16.msra.mxu0 0
        %2398 = vmatprep.subr.bf16.mxu0 0
        %2399 = vmatpush1.bf16.msra.mxu0 0
        %2400 = vmatprep.subr.bf16.mxu0 0
        %2401 = vmatpush1.bf16.msra.mxu0 0
        %2402 = vmatprep.subr.bf16.mxu0 0
        %2403 = vmatpush1.bf16.msra.mxu0 0
        %2404 = vmatprep.subr.bf16.mxu0 0
        %2405 = vmatpush1.bf16.msra.mxu0 0
        %2406 = vmatprep.subr.bf16.mxu0 0
        %2407 = vmatpush1.bf16.msra.mxu0 %v2070
        %2408 = vmatprep.subr.bf16.mxu0 0
        %2409 = vmatpush2.bf16.msra.mxu0 0
        %2410 = vmatprep.subr.bf16.mxu0 0
        %2411 = vmatpush2.bf16.msra.mxu0 0
        %2412 = vmatprep.subr.bf16.mxu0 0
        %2413 = vmatpush2.bf16.msra.mxu0 0
        %2414 = vmatprep.subr.bf16.mxu0 0
        %2415 = vmatpush2.bf16.msra.mxu0 0
        %2416 = vmatprep.subr.bf16.mxu0 0
        %2417 = vmatpush2.bf16.msra.mxu0 0
        %2418 = vmatprep.subr.bf16.mxu0 0
        %2419 = vmatpush2.bf16.msra.mxu0 0
        %2420 = vmatprep.subr.bf16.mxu0 0
        %2421 = vmatpush2.bf16.msra.mxu0 0
        %2422 = vmatprep.subr.bf16.mxu0 0
        %2423 = vmatpush2.bf16.msra.mxu0 0
        %2424 = vmatprep.mubr.bf16.mxu0 0
        %2425 = vmatmul.mubr.bf16.gmra.mxu0 %v2390
        %v2426 = vpop.f32.mrf.mxu0
        %v2427 = vadd.f32 0.0, %v2426
        %v2428 = vpop.f32.mrf.mxu0
        %v2429 = vpop.f32.mrf.mxu0
        %v2430 = vadd.f32 0.0, %v2429
        %v2431 = vpop.f32.mrf.mxu0
        %2432 = vdwg.mxu0
        %v2434 = vsel %vm2264, %v2309, 0
        %2436 = vmatprep.subr.bf16.mxu0 0
        %2437 = vmatpush1.bf16.msra.mxu0 0
        %2438 = vmatprep.subr.bf16.mxu0 0
        %2439 = vmatpush1.bf16.msra.mxu0 0
        %2440 = vmatprep.subr.bf16.mxu0 0
        %2441 = vmatpush1.bf16.msra.mxu0 0
        %2442 = vmatprep.subr.bf16.mxu0 0
        %2443 = vmatpush1.bf16.msra.mxu0 0
        %2444 = vmatprep.subr.bf16.mxu0 0
        %2445 = vmatpush1.bf16.msra.mxu0 0
        %2446 = vmatprep.subr.bf16.mxu0 0
        %2447 = vmatpush1.bf16.msra.mxu0 0
        %2448 = vmatprep.subr.bf16.mxu0 0
        %2449 = vmatpush1.bf16.msra.mxu0 0
        %2450 = vmatprep.subr.bf16.mxu0 0
        %2451 = vmatpush1.bf16.msra.mxu0 %v2071
        %2452 = vmatprep.subr.bf16.mxu0 0
        %2453 = vmatpush2.bf16.msra.mxu0 0
        %2454 = vmatprep.subr.bf16.mxu0 0
        %2455 = vmatpush2.bf16.msra.mxu0 0
        %2456 = vmatprep.subr.bf16.mxu0 0
        %2457 = vmatpush2.bf16.msra.mxu0 0
        %2458 = vmatprep.subr.bf16.mxu0 0
        %2459 = vmatpush2.bf16.msra.mxu0 0
        %2460 = vmatprep.subr.bf16.mxu0 0
        %2461 = vmatpush2.bf16.msra.mxu0 0
        %2462 = vmatprep.subr.bf16.mxu0 0
        %2463 = vmatpush2.bf16.msra.mxu0 0
        %2464 = vmatprep.subr.bf16.mxu0 0
        %2465 = vmatpush2.bf16.msra.mxu0 0
        %2466 = vmatprep.subr.bf16.mxu0 0
        %2467 = vmatpush2.bf16.msra.mxu0 0
        %2468 = vmatprep.mubr.bf16.mxu0 0
        %2469 = vmatmul.mubr.bf16.gmra.mxu0 %v2434
        %v2470 = vpop.f32.mrf.mxu0
        %v2471 = vadd.f32 0.0, %v2470
        %v2472 = vpop.f32.mrf.mxu0
        %v2473 = vpop.f32.mrf.mxu0
        %v2474 = vadd.f32 0.0, %v2473
        %v2475 = vpop.f32.mrf.mxu0
        %2476 = vdwg.mxu0
        %v2478 = vsel %vm2264, %v2312, 0
        %2480 = vmatprep.subr.bf16.mxu0 0
        %2481 = vmatpush1.bf16.msra.mxu0 0
        %2482 = vmatprep.subr.bf16.mxu0 0
        %2483 = vmatpush1.bf16.msra.mxu0 0
        %2484 = vmatprep.subr.bf16.mxu0 0
        %2485 = vmatpush1.bf16.msra.mxu0 0
        %2486 = vmatprep.subr.bf16.mxu0 0
        %2487 = vmatpush1.bf16.msra.mxu0 0
        %2488 = vmatprep.subr.bf16.mxu0 0
        %2489 = vmatpush1.bf16.msra.mxu0 0
        %2490 = vmatprep.subr.bf16.mxu0 0
        %2491 = vmatpush1.bf16.msra.mxu0 0
        %2492 = vmatprep.subr.bf16.mxu0 0
        %2493 = vmatpush1.bf16.msra.mxu0 0
        %2494 = vmatprep.subr.bf16.mxu0 0
        %2495 = vmatpush1.bf16.msra.mxu0 %v2072
        %2496 = vmatprep.subr.bf16.mxu0 0
        %2497 = vmatpush2.bf16.msra.mxu0 0
        %2498 = vmatprep.subr.bf16.mxu0 0
        %2499 = vmatpush2.bf16.msra.mxu0 0
        %2500 = vmatprep.subr.bf16.mxu0 0
        %2501 = vmatpush2.bf16.msra.mxu0 0
        %2502 = vmatprep.subr.bf16.mxu0 0
        %2503 = vmatpush2.bf16.msra.mxu0 0
        %2504 = vmatprep.subr.bf16.mxu0 0
        %2505 = vmatpush2.bf16.msra.mxu0 0
        %2506 = vmatprep.subr.bf16.mxu0 0
        %2507 = vmatpush2.bf16.msra.mxu0 0
        %2508 = vmatprep.subr.bf16.mxu0 0
        %2509 = vmatpush2.bf16.msra.mxu0 0
        %2510 = vmatprep.subr.bf16.mxu0 0
        %2511 = vmatpush2.bf16.msra.mxu0 0
        %2512 = vmatprep.mubr.bf16.mxu0 0
        %2513 = vmatmul.mubr.bf16.gmra.mxu0 %v2478
        %v2514 = vpop.f32.mrf.mxu0
        %v2515 = vadd.f32 0.0, %v2514
        %v2516 = vpop.f32.mrf.mxu0
        %v2517 = vpop.f32.mrf.mxu0
        %v2518 = vadd.f32 0.0, %v2517
        %v2519 = vpop.f32.mrf.mxu0
        %2520 = vdwg.mxu0
        %v2521 = vrcp.pop %v2323
        %v2522 = vrcp.pop %v2326
        %v2523 = vrcp.pop %v2329
        %v2524 = vrcp.pop %v2332
        %v2525 = vrcp.pop %v2335
        %v2526 = vrcp.pop %v2338
        %v2527 = vrcp.pop %v2341
        %v2528 = vrcp.pop %v2344
        %v2529 = vmul.f32 %v2383, %v2521
        %v2530 = vmul.f32 %v2386, %v2522
        %v2531 = vmul.f32 %v2427, %v2523
        %v2532 = vmul.f32 %v2430, %v2524
        %v2533 = vmul.f32 %v2471, %v2525
        %v2534 = vmul.f32 %v2474, %v2526
        %v2535 = vmul.f32 %v2515, %v2527
        %v2536 = vmul.f32 %v2518, %v2528
        %v2537 = vcombine.low %v2529, %v2533
        %v2538 = vcombine.high %v2529, %v2533
        %v2540 = vunpack.c.l.s4 1983009808
        %v2541 = vunpack.c.0.s8 %v2540
        %v2542 = vlaneseq
        %v2543 = vshrl.u32 %v2542, 7
        %v2544 = vsub.s32 %v2541, %v2543
        %v2545 = vrot.slane %v2537, %v2544
        %v2547 = vunpack.c.l.s4 1983009808
        %v2548 = vunpack.c.0.s8 %v2547
        %v2549 = vlaneseq
        %v2550 = vshrl.u32 %v2549, 7
        %v2551 = vsub.s32 %v2548, %v2550
        %v2552 = vrot.slane %v2538, %v2551
        %v2553 = vcombine.low %v2531, %v2535
        %v2554 = vcombine.high %v2531, %v2535
        %v2556 = vunpack.c.l.s4 1983009808
        %v2557 = vunpack.c.0.s8 %v2556
        %v2558 = vlaneseq
        %v2559 = vshrl.u32 %v2558, 7
        %v2560 = vsub.s32 %v2557, %v2559
        %v2561 = vrot.slane %v2553, %v2560
        %v2563 = vunpack.c.l.s4 1983009808
        %v2564 = vunpack.c.0.s8 %v2563
        %v2565 = vlaneseq
        %v2566 = vshrl.u32 %v2565, 7
        %v2567 = vsub.s32 %v2564, %v2566
        %v2568 = vrot.slane %v2554, %v2567
        %v2569 = vcombine.low %v2545, %v2561
        %v2570 = vcombine.high %v2545, %v2561
        %v2572 = vunpack.c.l.s4 1934713408
        %v2573 = vunpack.c.0.s8 %v2572
        %v2574 = vlaneseq
        %v2575 = vshrl.u32 %v2574, 7
        %v2576 = vsub.s32 %v2573, %v2575
        %v2577 = vrot.slane %v2569, %v2576
        %v2579 = vunpack.c.l.s4 1934713408
        %v2580 = vunpack.c.0.s8 %v2579
        %v2581 = vlaneseq
        %v2582 = vshrl.u32 %v2581, 7
        %v2583 = vsub.s32 %v2580, %v2582
        %v2584 = vrot.slane %v2570, %v2583
        %v2585 = vcombine.low %v2552, %v2568
        %v2586 = vcombine.high %v2552, %v2568
        %v2588 = vunpack.c.l.s4 1934713408
        %v2589 = vunpack.c.0.s8 %v2588
        %v2590 = vlaneseq
        %v2591 = vshrl.u32 %v2590, 7
        %v2592 = vsub.s32 %v2589, %v2591
        %v2593 = vrot.slane %v2585, %v2592
        %v2595 = vunpack.c.l.s4 1934713408
        %v2596 = vunpack.c.0.s8 %v2595
        %v2597 = vlaneseq
        %v2598 = vshrl.u32 %v2597, 7
        %v2599 = vsub.s32 %v2596, %v2598
        %v2600 = vrot.slane %v2586, %v2599
        %v2601 = vcombine.high %v2577, 0.0
        %v2602 = vcombine.high %v2584, 0.0
        %v2603 = vcombine.high %v2593, 0.0
        %v2604 = vcombine.high %v2600, 0.0
        %v2605 = vcombine.low %v2530, %v2534
        %v2606 = vcombine.high %v2530, %v2534
        %v2608 = vunpack.c.l.s4 1983009808
        %v2609 = vunpack.c.0.s8 %v2608
        %v2610 = vlaneseq
        %v2611 = vshrl.u32 %v2610, 7
        %v2612 = vsub.s32 %v2609, %v2611
        %v2613 = vrot.slane %v2605, %v2612
        %v2615 = vunpack.c.l.s4 1983009808
        %v2616 = vunpack.c.0.s8 %v2615
        %v2617 = vlaneseq
        %v2618 = vshrl.u32 %v2617, 7
        %v2619 = vsub.s32 %v2616, %v2618
        %v2620 = vrot.slane %v2606, %v2619
        %v2621 = vcombine.low %v2532, %v2536
        %v2622 = vcombine.high %v2532, %v2536
        %v2624 = vunpack.c.l.s4 1983009808
        %v2625 = vunpack.c.0.s8 %v2624
        %v2626 = vlaneseq
        %v2627 = vshrl.u32 %v2626, 7
        %v2628 = vsub.s32 %v2625, %v2627
        %v2629 = vrot.slane %v2621, %v2628
        %v2631 = vunpack.c.l.s4 1983009808
        %v2632 = vunpack.c.0.s8 %v2631
        %v2633 = vlaneseq
        %v2634 = vshrl.u32 %v2633, 7
        %v2635 = vsub.s32 %v2632, %v2634
        %v2636 = vrot.slane %v2622, %v2635
        %v2637 = vcombine.low %v2613, %v2629
        %v2638 = vcombine.high %v2613, %v2629
        %v2640 = vunpack.c.l.s4 1934713408
        %v2641 = vunpack.c.0.s8 %v2640
        %v2642 = vlaneseq
        %v2643 = vshrl.u32 %v2642, 7
        %v2644 = vsub.s32 %v2641, %v2643
        %v2645 = vrot.slane %v2637, %v2644
        %v2647 = vunpack.c.l.s4 1934713408
        %v2648 = vunpack.c.0.s8 %v2647
        %v2649 = vlaneseq
        %v2650 = vshrl.u32 %v2649, 7
        %v2651 = vsub.s32 %v2648, %v2650
        %v2652 = vrot.slane %v2638, %v2651
        %v2653 = vcombine.low %v2620, %v2636
        %v2654 = vcombine.high %v2620, %v2636
        %v2656 = vunpack.c.l.s4 1934713408
        %v2657 = vunpack.c.0.s8 %v2656
        %v2658 = vlaneseq
        %v2659 = vshrl.u32 %v2658, 7
        %v2660 = vsub.s32 %v2657, %v2659
        %v2661 = vrot.slane %v2653, %v2660
        %v2663 = vunpack.c.l.s4 1934713408
        %v2664 = vunpack.c.0.s8 %v2663
        %v2665 = vlaneseq
        %v2666 = vshrl.u32 %v2665, 7
        %v2667 = vsub.s32 %v2664, %v2666
        %v2668 = vrot.slane %v2654, %v2667
        %v2669 = vcombine.high %v2645, 0.0
        %v2670 = vcombine.high %v2652, 0.0
        %v2671 = vcombine.high %v2661, 0.0
        %v2672 = vcombine.high %v2668, 0.0
        %v2673 = vcombine.low %v2577, %v2584
        %v2675 = vunpack.c.l.s4 1983009808
        %v2676 = vunpack.c.0.s8 %v2675
        %v2677 = vlaneseq
        %v2678 = vshrl.u32 %v2677, 7
        %v2679 = vsub.s32 %v2676, %v2678
        %v2680 = vrot.slane %v2673, %v2679
        %v2681 = vcombine.low %v2601, %v2602
        %v2683 = vunpack.c.l.s4 1983009808
        %v2684 = vunpack.c.0.s8 %v2683
        %v2685 = vlaneseq
        %v2686 = vshrl.u32 %v2685, 7
        %v2687 = vsub.s32 %v2684, %v2686
        %v2688 = vrot.slane %v2681, %v2687
        %v2689 = vcombine.low %v2593, %v2600
        %v2691 = vunpack.c.l.s4 1983009808
        %v2692 = vunpack.c.0.s8 %v2691
        %v2693 = vlaneseq
        %v2694 = vshrl.u32 %v2693, 7
        %v2695 = vsub.s32 %v2692, %v2694
        %v2696 = vrot.slane %v2689, %v2695
        %v2697 = vcombine.low %v2603, %v2604
        %v2699 = vunpack.c.l.s4 1983009808
        %v2700 = vunpack.c.0.s8 %v2699
        %v2701 = vlaneseq
        %v2702 = vshrl.u32 %v2701, 7
        %v2703 = vsub.s32 %v2700, %v2702
        %v2704 = vrot.slane %v2697, %v2703
        %v2705 = vcombine.low %v2680, %v2688
        %v2706 = vcombine.high %v2680, %v2688
        %v2708 = vunpack.c.l.s4 1934713408
        %v2709 = vunpack.c.0.s8 %v2708
        %v2710 = vlaneseq
        %v2711 = vshrl.u32 %v2710, 7
        %v2712 = vsub.s32 %v2709, %v2711
        %v2713 = vrot.slane %v2705, %v2712
        %v2715 = vunpack.c.l.s4 1934713408
        %v2716 = vunpack.c.0.s8 %v2715
        %v2717 = vlaneseq
        %v2718 = vshrl.u32 %v2717, 7
        %v2719 = vsub.s32 %v2716, %v2718
        %v2720 = vrot.slane %v2706, %v2719
        %v2721 = vcombine.low %v2696, %v2704
        %v2722 = vcombine.high %v2696, %v2704
        %v2724 = vunpack.c.l.s4 1934713408
        %v2725 = vunpack.c.0.s8 %v2724
        %v2726 = vlaneseq
        %v2727 = vshrl.u32 %v2726, 7
        %v2728 = vsub.s32 %v2725, %v2727
        %v2729 = vrot.slane %v2721, %v2728
        %v2731 = vunpack.c.l.s4 1934713408
        %v2732 = vunpack.c.0.s8 %v2731
        %v2733 = vlaneseq
        %v2734 = vshrl.u32 %v2733, 7
        %v2735 = vsub.s32 %v2732, %v2734
        %v2736 = vrot.slane %v2722, %v2735
        %v2737 = vcombine.low %v2713, %v2729
        %v2738 = vcombine.high %v2713, %v2729
        %v2739 = vcombine.low %v2720, %v2736
        %v2740 = vcombine.high %v2720, %v2736
        %v2741 = vcombine.low %v2645, %v2652
        %v2743 = vunpack.c.l.s4 1983009808
        %v2744 = vunpack.c.0.s8 %v2743
        %v2745 = vlaneseq
        %v2746 = vshrl.u32 %v2745, 7
        %v2747 = vsub.s32 %v2744, %v2746
        %v2748 = vrot.slane %v2741, %v2747
        %v2749 = vcombine.low %v2669, %v2670
        %v2751 = vunpack.c.l.s4 1983009808
        %v2752 = vunpack.c.0.s8 %v2751
        %v2753 = vlaneseq
        %v2754 = vshrl.u32 %v2753, 7
        %v2755 = vsub.s32 %v2752, %v2754
        %v2756 = vrot.slane %v2749, %v2755
        %v2757 = vcombine.low %v2661, %v2668
        %v2759 = vunpack.c.l.s4 1983009808
        %v2760 = vunpack.c.0.s8 %v2759
        %v2761 = vlaneseq
        %v2762 = vshrl.u32 %v2761, 7
        %v2763 = vsub.s32 %v2760, %v2762
        %v2764 = vrot.slane %v2757, %v2763
        %v2765 = vcombine.low %v2671, %v2672
        %v2767 = vunpack.c.l.s4 1983009808
        %v2768 = vunpack.c.0.s8 %v2767
        %v2769 = vlaneseq
        %v2770 = vshrl.u32 %v2769, 7
        %v2771 = vsub.s32 %v2768, %v2770
        %v2772 = vrot.slane %v2765, %v2771
        %v2773 = vcombine.low %v2748, %v2756
        %v2774 = vcombine.high %v2748, %v2756
        %v2776 = vunpack.c.l.s4 1934713408
        %v2777 = vunpack.c.0.s8 %v2776
        %v2778 = vlaneseq
        %v2779 = vshrl.u32 %v2778, 7
        %v2780 = vsub.s32 %v2777, %v2779
        %v2781 = vrot.slane %v2773, %v2780
        %v2783 = vunpack.c.l.s4 1934713408
        %v2784 = vunpack.c.0.s8 %v2783
        %v2785 = vlaneseq
        %v2786 = vshrl.u32 %v2785, 7
        %v2787 = vsub.s32 %v2784, %v2786
        %v2788 = vrot.slane %v2774, %v2787
        %v2789 = vcombine.low %v2764, %v2772
        %v2790 = vcombine.high %v2764, %v2772
        %v2792 = vunpack.c.l.s4 1934713408
        %v2793 = vunpack.c.0.s8 %v2792
        %v2794 = vlaneseq
        %v2795 = vshrl.u32 %v2794, 7
        %v2796 = vsub.s32 %v2793, %v2795
        %v2797 = vrot.slane %v2789, %v2796
        %v2799 = vunpack.c.l.s4 1934713408
        %v2800 = vunpack.c.0.s8 %v2799
        %v2801 = vlaneseq
        %v2802 = vshrl.u32 %v2801, 7
        %v2803 = vsub.s32 %v2800, %v2802
        %v2804 = vrot.slane %v2790, %v2803
        %v2805 = vcombine.low %v2781, %v2797
        %v2806 = vcombine.high %v2781, %v2797
        %v2807 = vcombine.low %v2788, %v2804
        %v2808 = vcombine.high %v2788, %v2804
        %2811 = vrot.lane.b32.xlu0 %v2738, 32
        %v2812 = vpop.permute.xlu0 %2811
        %2813 = vrot.lane.b32.xlu0 %v2806, 32
        %v2814 = vpop.permute.xlu0 %2813
        %2819 = vrot.lane.b32.xlu0 %v2739, 64
        %v2820 = vpop.permute.xlu0 %2819
        %2821 = vrot.lane.b32.xlu0 %v2807, 64
        %v2822 = vpop.permute.xlu0 %2821
        %2827 = vrot.lane.b32.xlu0 %v2740, 96
        %v2828 = vpop.permute.xlu0 %2827
        %2829 = vrot.lane.b32.xlu0 %v2808, 96
        %v2830 = vpop.permute.xlu0 %2829
        %v2833 = vsel %vm2075, %v2737, %v2812
        %v2834 = vsel %vm2075, %v2805, %v2814
        %vm2835 = vcmask 523264
        %v2836 = vsel %vm2835, %v2833, %v2820
        %v2837 = vsel %vm2835, %v2834, %v2822
        %vm2838 = vcmask 785408
        %v2839 = vsel %vm2838, %v2836, %v2828
        %v2840 = vsel %vm2838, %v2837, %v2830
        %v2841 = vpack.c.bf16 %v2840, %v2839
        %v2842 = vld [vmem:[%s732] sm:$0xf]
        %v2843 = vld [vmem:[%s732 + $0x4] sm:$0xf]
        %v2844 = vld [vmem:[%s732 + $0x8] sm:$0xf]
        %v2845 = vld [vmem:[%s732 + $0xc] sm:$0xf]
        %v2846 = vld [vmem:[%s732 + $0x10] sm:$0xf]
        %v2847 = vld [vmem:[%s732 + $0x14] sm:$0xf]
        %v2848 = vld [vmem:[%s732 + $0x18] sm:$0xf]
        %v2849 = vld [vmem:[%s732 + $0x1c] sm:$0xf]
        %v2850 = vld [vmem:[%s732 + $0x20] sm:$0xf]
        %v2851 = vld [vmem:[%s732 + $0x24] sm:$0xf]
        %v2852 = vld [vmem:[%s732 + $0x28] sm:$0xf]
        %v2853 = vld [vmem:[%s732 + $0x2c] sm:$0xf]
        %v2854 = vld [vmem:[%s732 + $0x30] sm:$0xf]
        %v2855 = vld [vmem:[%s732 + $0x34] sm:$0xf]
        %v2856 = vld [vmem:[%s732 + $0x38] sm:$0xf]
        %v2857 = vld [vmem:[%s732 + $0x3c] sm:$0xf]
        %v2858 = vld [vmem:[%s854] sm:$0x1]
        %v2860 = vlaneseq
        %v2861 = vshrl.u32 %v2860, 7
        %v2862 = vsub.s32 0, %v2861
        %v2863 = vrot.slane %v2858, %v2862
        %v2881 = vunpack.c.l.b16 %v2842
        %v2882 = vunpack.c.l.b16 %v2843
        %v2883 = vunpack.c.l.b16 %v2844
        %v2884 = vunpack.c.l.b16 %v2845
        %v2885 = vunpack.c.l.b16 %v2846
        %v2886 = vunpack.c.l.b16 %v2847
        %v2887 = vunpack.c.l.b16 %v2848
        %v2888 = vunpack.c.l.b16 %v2849
        %v2889 = vunpack.c.l.b16 %v2850
        %v2890 = vunpack.c.l.b16 %v2851
        %v2891 = vunpack.c.l.b16 %v2852
        %v2892 = vunpack.c.l.b16 %v2853
        %v2893 = vunpack.c.l.b16 %v2854
        %v2894 = vunpack.c.l.b16 %v2855
        %v2895 = vunpack.c.l.b16 %v2856
        %v2896 = vunpack.c.l.b16 %v2857
        %v2897 = vpack.c.b16 %v2882, %v2881
        %v2898 = vpack.c.b16 %v2884, %v2883
        %v2899 = vpack.c.b16 %v2886, %v2885
        %v2900 = vpack.c.b16 %v2888, %v2887
        %v2901 = vpack.c.b16 %v2890, %v2889
        %v2902 = vpack.c.b16 %v2892, %v2891
        %v2903 = vpack.c.b16 %v2894, %v2893
        %v2904 = vpack.c.b16 %v2896, %v2895
        %2913 = vmatprep.subr.bf16.mxu0 0
        %2914 = vmatpush1.bf16.msra.mxu0 %v2904
        %2915 = vmatprep.subr.bf16.mxu0 0
        %2916 = vmatpush1.bf16.msra.mxu0 %v2903
        %2917 = vmatprep.subr.bf16.mxu0 0
        %2918 = vmatpush1.bf16.msra.mxu0 %v2902
        %2919 = vmatprep.subr.bf16.mxu0 0
        %2920 = vmatpush1.bf16.msra.mxu0 %v2901
        %2921 = vmatprep.subr.bf16.mxu0 0
        %2922 = vmatpush1.bf16.msra.mxu0 %v2900
        %2923 = vmatprep.subr.bf16.mxu0 0
        %2924 = vmatpush1.bf16.msra.mxu0 %v2899
        %2925 = vmatprep.subr.bf16.mxu0 0
        %2926 = vmatpush1.bf16.msra.mxu0 %v2898
        %2927 = vmatprep.subr.bf16.mxu0 0
        %2928 = vmatpush1.bf16.msra.mxu0 %v2897
        %2929 = vmatprep.subr.bf16.mxu0 0
        %2930 = vmatpush2.bf16.msra.mxu0 0
        %2931 = vmatprep.subr.bf16.mxu0 0
        %2932 = vmatpush2.bf16.msra.mxu0 0
        %2933 = vmatprep.subr.bf16.mxu0 0
        %2934 = vmatpush2.bf16.msra.mxu0 0
        %2935 = vmatprep.subr.bf16.mxu0 0
        %2936 = vmatpush2.bf16.msra.mxu0 0
        %2937 = vmatprep.subr.bf16.mxu0 0
        %2938 = vmatpush2.bf16.msra.mxu0 0
        %2939 = vmatprep.subr.bf16.mxu0 0
        %2940 = vmatpush2.bf16.msra.mxu0 0
        %2941 = vmatprep.subr.bf16.mxu0 0
        %2942 = vmatpush2.bf16.msra.mxu0 0
        %2943 = vmatprep.subr.bf16.mxu0 0
        %2944 = vmatpush2.bf16.msra.mxu0 0
        %2945 = vmatprep.mubr.bf16.mxu0 0
        %2946 = vmatmul.mubr.bf16.gmra.mxu0 %v2841
        %v2947 = vpop.f32.mrf.mxu0
        %v2948 = vadd.f32 %v2863, %v2947
        %v2949 = vpop.f32.mrf.mxu0
        %v2950 = vpop.f32.mrf.mxu0
        %v2951 = vadd.f32 %v2863, %v2950
        %v2952 = vpop.f32.mrf.mxu0
        %2953 = vdwg.mxu0
        %v2954 = vadd.f32 %v880, %v2948
        %v2955 = vadd.f32 %v881, %v2951
        %v2956 = vld [vmem:[%s857] sm:$0x1]
        %v2957 = vld [vmem:[%s860] sm:$0x1]
        %2958 = vadd.xlane.f32.xlu0 %v2954
        %v2959 = vpop.xlane.xlu0 %2958
        %2960 = vadd.xlane.f32.xlu0 %v2955
        %v2961 = vpop.xlane.xlu0 %2960
        %v2962 = vmul.f32 %v2959, %v888
        %v2963 = vmul.f32 %v2961, %v888
        %v2964 = vsub.f32 %v2954, %v2962
        %v2965 = vsub.f32 %v2955, %v2963
        %v2966 = vmul.f32 %v2964, %v2964
        %v2967 = vmul.f32 %v2965, %v2965
        %2968 = vadd.xlane.f32.xlu0 %v2966
        %v2969 = vpop.xlane.xlu0 %2968
        %2970 = vadd.xlane.f32.xlu0 %v2967
        %v2971 = vpop.xlane.xlu0 %2970
        %v2972 = vmul.f32 %v2969, %v888
        %v2973 = vmul.f32 %v2971, %v888
        %v2974 = vadd.f32 %v2972, 1e-05
        %v2975 = vadd.f32 %v2973, 1e-05
        %v2976 = vrsqrt.pop %v2974
        %v2977 = vrsqrt.pop %v2975
        %v2978 = vmul.f32 %v2964, %v2976
        %v2979 = vmul.f32 %v2965, %v2977
        %v2981 = vlaneseq
        %v2982 = vshrl.u32 %v2981, 7
        %v2983 = vsub.s32 0, %v2982
        %v2984 = vrot.slane %v2956, %v2983
        %v2986 = vmul.f32 %v2978, %v2984
        %v2987 = vmul.f32 %v2979, %v2984
        %v2989 = vlaneseq
        %v2990 = vshrl.u32 %v2989, 7
        %v2991 = vsub.s32 0, %v2990
        %v2992 = vrot.slane %v2957, %v2991
        %v2994 = vadd.f32 %v2986, %v2992
        %v2995 = vadd.f32 %v2987, %v2992
        %v2996 = vpack.c.bf16 %v2995, %v2994
        %v2997 = vld [vmem:[%s741] sm:$0xff]
        %v2998 = vld [vmem:[%s741 + $0x8] sm:$0xff]
        %v2999 = vld [vmem:[%s741 + $0x10] sm:$0xff]
        %v3000 = vld [vmem:[%s741 + $0x18] sm:$0xff]
        %v3001 = vld [vmem:[%s741 + $0x20] sm:$0xff]
        %v3002 = vld [vmem:[%s741 + $0x28] sm:$0xff]
        %v3003 = vld [vmem:[%s741 + $0x30] sm:$0xff]
        %v3004 = vld [vmem:[%s741 + $0x38] sm:$0xff]
        %v3005 = vld [vmem:[%s741 + $0x40] sm:$0xff]
        %v3006 = vld [vmem:[%s741 + $0x48] sm:$0xff]
        %v3007 = vld [vmem:[%s741 + $0x50] sm:$0xff]
        %v3008 = vld [vmem:[%s741 + $0x58] sm:$0xff]
        %v3009 = vld [vmem:[%s741 + $0x60] sm:$0xff]
        %v3010 = vld [vmem:[%s741 + $0x68] sm:$0xff]
        %v3011 = vld [vmem:[%s741 + $0x70] sm:$0xff]
        %v3012 = vld [vmem:[%s741 + $0x78] sm:$0xff]
        %v3013 = vld [vmem:[%s864] sm:$0x3]
        %v3015 = vlaneseq
        %v3016 = vshrl.u32 %v3015, 7
        %v3017 = vsub.s32 0, %v3016
        %v3018 = vrot.slane %v3013, %v3017
        %v3019 = vlaneseq
        %v3020 = vshrl.u32 %v3019, 7
        %v3021 = vsub.s32 1, %v3020
        %v3022 = vrot.slane %v3013, %v3021
        %v3041 = vunpack.c.l.b16 %v2997
        %v3042 = vunpack.c.h.b16 %v2997
        %v3043 = vunpack.c.l.b16 %v2998
        %v3044 = vunpack.c.h.b16 %v2998
        %v3045 = vunpack.c.l.b16 %v2999
        %v3046 = vunpack.c.h.b16 %v2999
        %v3047 = vunpack.c.l.b16 %v3000
        %v3048 = vunpack.c.h.b16 %v3000
        %v3049 = vunpack.c.l.b16 %v3001
        %v3050 = vunpack.c.h.b16 %v3001
        %v3051 = vunpack.c.l.b16 %v3002
        %v3052 = vunpack.c.h.b16 %v3002
        %v3053 = vunpack.c.l.b16 %v3003
        %v3054 = vunpack.c.h.b16 %v3003
        %v3055 = vunpack.c.l.b16 %v3004
        %v3056 = vunpack.c.h.b16 %v3004
        %v3057 = vunpack.c.l.b16 %v3005
        %v3058 = vunpack.c.h.b16 %v3005
        %v3059 = vunpack.c.l.b16 %v3006
        %v3060 = vunpack.c.h.b16 %v3006
        %v3061 = vunpack.c.l.b16 %v3007
        %v3062 = vunpack.c.h.b16 %v3007
        %v3063 = vunpack.c.l.b16 %v3008
        %v3064 = vunpack.c.h.b16 %v3008
        %v3065 = vunpack.c.l.b16 %v3009
        %v3066 = vunpack.c.h.b16 %v3009
        %v3067 = vunpack.c.l.b16 %v3010
        %v3068 = vunpack.c.h.b16 %v3010
        %v3069 = vunpack.c.l.b16 %v3011
        %v3070 = vunpack.c.h.b16 %v3011
        %v3071 = vunpack.c.l.b16 %v3012
        %v3072 = vunpack.c.h.b16 %v3012
        %v3073 = vpack.c.b16 %v3043, %v3041
        %v3074 = vpack.c.b16 %v3044, %v3042
        %v3075 = vpack.c.b16 %v3047, %v3045
        %v3076 = vpack.c.b16 %v3048, %v3046
        %v3077 = vpack.c.b16 %v3051, %v3049
        %v3078 = vpack.c.b16 %v3052, %v3050
        %v3079 = vpack.c.b16 %v3055, %v3053
        %v3080 = vpack.c.b16 %v3056, %v3054
        %v3081 = vpack.c.b16 %v3059, %v3057
        %v3082 = vpack.c.b16 %v3060, %v3058
        %v3083 = vpack.c.b16 %v3063, %v3061
        %v3084 = vpack.c.b16 %v3064, %v3062
        %v3085 = vpack.c.b16 %v3067, %v3065
        %v3086 = vpack.c.b16 %v3068, %v3066
        %v3087 = vpack.c.b16 %v3071, %v3069
        %v3088 = vpack.c.b16 %v3072, %v3070
        %3105 = vmatprep.subr.bf16.mxu0 %v3088
        %3106 = vmatpush1.bf16.msra.mxu0 %v3087
        %3107 = vmatprep.subr.bf16.mxu0 %v3086
        %3108 = vmatpush1.bf16.msra.mxu0 %v3085
        %3109 = vmatprep.subr.bf16.mxu0 %v3084
        %3110 = vmatpush1.bf16.msra.mxu0 %v3083
        %3111 = vmatprep.subr.bf16.mxu0 %v3082
        %3112 = vmatpush1.bf16.msra.mxu0 %v3081
        %3113 = vmatprep.subr.bf16.mxu0 %v3080
        %3114 = vmatpush1.bf16.msra.mxu0 %v3079
        %3115 = vmatprep.subr.bf16.mxu0 %v3078
        %3116 = vmatpush1.bf16.msra.mxu0 %v3077
        %3117 = vmatprep.subr.bf16.mxu0 %v3076
        %3118 = vmatpush1.bf16.msra.mxu0 %v3075
        %3119 = vmatprep.subr.bf16.mxu0 %v3074
        %3120 = vmatpush1.bf16.msra.mxu0 %v3073
        %3121 = vmatprep.subr.bf16.mxu0 0
        %3122 = vmatpush2.bf16.msra.mxu0 0
        %3123 = vmatprep.subr.bf16.mxu0 0
        %3124 = vmatpush2.bf16.msra.mxu0 0
        %3125 = vmatprep.subr.bf16.mxu0 0
        %3126 = vmatpush2.bf16.msra.mxu0 0
        %3127 = vmatprep.subr.bf16.mxu0 0
        %3128 = vmatpush2.bf16.msra.mxu0 0
        %3129 = vmatprep.subr.bf16.mxu0 0
        %3130 = vmatpush2.bf16.msra.mxu0 0
        %3131 = vmatprep.subr.bf16.mxu0 0
        %3132 = vmatpush2.bf16.msra.mxu0 0
        %3133 = vmatprep.subr.bf16.mxu0 0
        %3134 = vmatpush2.bf16.msra.mxu0 0
        %3135 = vmatprep.subr.bf16.mxu0 0
        %3136 = vmatpush2.bf16.msra.mxu0 0
        %3137 = vmatprep.mubr.bf16.mxu0 0
        %3138 = vmatmul.mubr.bf16.gmra.mxu0 %v2996
        %v3139 = vpop.f32.mrf.mxu0
        %v3140 = vadd.f32 %v3018, %v3139
        %v3141 = vpop.f32.mrf.mxu0
        %v3142 = vadd.f32 %v3022, %v3141
        %v3143 = vpop.f32.mrf.mxu0
        %v3144 = vadd.f32 %v3018, %v3143
        %v3145 = vpop.f32.mrf.mxu0
        %v3146 = vadd.f32 %v3022, %v3145
        %3147 = vdwg.mxu0
        %v3148 = vpack.c.bf16 %v3144, %v3140
        %v3149 = vpack.c.bf16 %v3146, %v3142
        %v3150 = vmul.bf16 %v3148, 1071267802
        %v3151 = vmul.bf16 %v3149, 1071267802
        %v3152 = vxor.u32 %v3150, 2147516416
        %v3153 = vxor.u32 %v3151, 2147516416
        %v3155 = vmul.bf16 %v3152, 1069105081
        %v3156 = vpow.bf16.pop %v3155
        %v3158 = vmul.bf16 %v3153, 1069105081
        %v3159 = vpow.bf16.pop %v3158
        %v3160 = vadd.bf16 %v3156, 1065369472
        %v3161 = vadd.bf16 %v3159, 1065369472
        %v3162 = vrcp.bf16.pop %v3160
        %v3163 = vmul.bf16 1065369472, %v3162
        %v3164 = vrcp.bf16.pop %v3161
        %v3165 = vmul.bf16 1065369472, %v3164
        %v3166 = vmul.bf16 %v3148, %v3163
        %v3167 = vmul.bf16 %v3149, %v3165
        %v3168 = vld [vmem:[%s750] sm:$0xf]
        %v3169 = vld [vmem:[%s750 + $0x4] sm:$0xf]
        %v3170 = vld [vmem:[%s750 + $0x8] sm:$0xf]
        %v3171 = vld [vmem:[%s750 + $0xc] sm:$0xf]
        %v3172 = vld [vmem:[%s750 + $0x10] sm:$0xf]
        %v3173 = vld [vmem:[%s750 + $0x14] sm:$0xf]
        %v3174 = vld [vmem:[%s750 + $0x18] sm:$0xf]
        %v3175 = vld [vmem:[%s750 + $0x1c] sm:$0xf]
        %v3176 = vld [vmem:[%s750 + $0x20] sm:$0xf]
        %v3177 = vld [vmem:[%s750 + $0x24] sm:$0xf]
        %v3178 = vld [vmem:[%s750 + $0x28] sm:$0xf]
        %v3179 = vld [vmem:[%s750 + $0x2c] sm:$0xf]
        %v3180 = vld [vmem:[%s750 + $0x30] sm:$0xf]
        %v3181 = vld [vmem:[%s750 + $0x34] sm:$0xf]
        %v3182 = vld [vmem:[%s750 + $0x38] sm:$0xf]
        %v3183 = vld [vmem:[%s750 + $0x3c] sm:$0xf]
        %v3184 = vld [vmem:[%s750 + $0x40] sm:$0xf]
        %v3185 = vld [vmem:[%s750 + $0x44] sm:$0xf]
        %v3186 = vld [vmem:[%s750 + $0x48] sm:$0xf]
        %v3187 = vld [vmem:[%s750 + $0x4c] sm:$0xf]
        %v3188 = vld [vmem:[%s750 + $0x50] sm:$0xf]
        %v3189 = vld [vmem:[%s750 + $0x54] sm:$0xf]
        %v3190 = vld [vmem:[%s750 + $0x58] sm:$0xf]
        %v3191 = vld [vmem:[%s750 + $0x5c] sm:$0xf]
        %v3192 = vld [vmem:[%s750 + $0x60] sm:$0xf]
        %v3193 = vld [vmem:[%s750 + $0x64] sm:$0xf]
        %v3194 = vld [vmem:[%s750 + $0x68] sm:$0xf]
        %v3195 = vld [vmem:[%s750 + $0x6c] sm:$0xf]
        %v3196 = vld [vmem:[%s750 + $0x70] sm:$0xf]
        %v3197 = vld [vmem:[%s750 + $0x74] sm:$0xf]
        %v3198 = vld [vmem:[%s750 + $0x78] sm:$0xf]
        %v3199 = vld [vmem:[%s750 + $0x7c] sm:$0xf]
        %v3200 = vld [vmem:[%s867] sm:$0x1]
        %v3202 = vlaneseq
        %v3203 = vshrl.u32 %v3202, 7
        %v3204 = vsub.s32 0, %v3203
        %v3205 = vrot.slane %v3200, %v3204
        %v3239 = vunpack.c.l.b16 %v3168
        %v3240 = vunpack.c.l.b16 %v3169
        %v3241 = vunpack.c.l.b16 %v3170
        %v3242 = vunpack.c.l.b16 %v3171
        %v3243 = vunpack.c.l.b16 %v3172
        %v3244 = vunpack.c.l.b16 %v3173
        %v3245 = vunpack.c.l.b16 %v3174
        %v3246 = vunpack.c.l.b16 %v3175
        %v3247 = vunpack.c.l.b16 %v3176
        %v3248 = vunpack.c.l.b16 %v3177
        %v3249 = vunpack.c.l.b16 %v3178
        %v3250 = vunpack.c.l.b16 %v3179
        %v3251 = vunpack.c.l.b16 %v3180
        %v3252 = vunpack.c.l.b16 %v3181
        %v3253 = vunpack.c.l.b16 %v3182
        %v3254 = vunpack.c.l.b16 %v3183
        %v3255 = vunpack.c.l.b16 %v3184
        %v3256 = vunpack.c.l.b16 %v3185
        %v3257 = vunpack.c.l.b16 %v3186
        %v3258 = vunpack.c.l.b16 %v3187
        %v3259 = vunpack.c.l.b16 %v3188
        %v3260 = vunpack.c.l.b16 %v3189
        %v3261 = vunpack.c.l.b16 %v3190
        %v3262 = vunpack.c.l.b16 %v3191
        %v3263 = vunpack.c.l.b16 %v3192
        %v3264 = vunpack.c.l.b16 %v3193
        %v3265 = vunpack.c.l.b16 %v3194
        %v3266 = vunpack.c.l.b16 %v3195
        %v3267 = vunpack.c.l.b16 %v3196
        %v3268 = vunpack.c.l.b16 %v3197
        %v3269 = vunpack.c.l.b16 %v3198
        %v3270 = vunpack.c.l.b16 %v3199
        %v3271 = vpack.c.b16 %v3240, %v3239
        %v3272 = vpack.c.b16 %v3242, %v3241
        %v3273 = vpack.c.b16 %v3244, %v3243
        %v3274 = vpack.c.b16 %v3246, %v3245
        %v3275 = vpack.c.b16 %v3248, %v3247
        %v3276 = vpack.c.b16 %v3250, %v3249
        %v3277 = vpack.c.b16 %v3252, %v3251
        %v3278 = vpack.c.b16 %v3254, %v3253
        %v3279 = vpack.c.b16 %v3256, %v3255
        %v3280 = vpack.c.b16 %v3258, %v3257
        %v3281 = vpack.c.b16 %v3260, %v3259
        %v3282 = vpack.c.b16 %v3262, %v3261
        %v3283 = vpack.c.b16 %v3264, %v3263
        %v3284 = vpack.c.b16 %v3266, %v3265
        %v3285 = vpack.c.b16 %v3268, %v3267
        %v3286 = vpack.c.b16 %v3270, %v3269
        %3303 = vmatprep.subr.bf16.mxu0 0
        %3304 = vmatpush1.bf16.msra.mxu0 %v3278
        %3305 = vmatprep.subr.bf16.mxu0 0
        %3306 = vmatpush1.bf16.msra.mxu0 %v3277
        %3307 = vmatprep.subr.bf16.mxu0 0
        %3308 = vmatpush1.bf16.msra.mxu0 %v3276
        %3309 = vmatprep.subr.bf16.mxu0 0
        %3310 = vmatpush1.bf16.msra.mxu0 %v3275
        %3311 = vmatprep.subr.bf16.mxu0 0
        %3312 = vmatpush1.bf16.msra.mxu0 %v3274
        %3313 = vmatprep.subr.bf16.mxu0 0
        %3314 = vmatpush1.bf16.msra.mxu0 %v3273
        %3315 = vmatprep.subr.bf16.mxu0 0
        %3316 = vmatpush1.bf16.msra.mxu0 %v3272
        %3317 = vmatprep.subr.bf16.mxu0 0
        %3318 = vmatpush1.bf16.msra.mxu0 %v3271
        %3319 = vmatprep.subr.bf16.mxu0 0
        %3320 = vmatpush2.bf16.msra.mxu0 %v3286
        %3321 = vmatprep.subr.bf16.mxu0 0
        %3322 = vmatpush2.bf16.msra.mxu0 %v3285
        %3323 = vmatprep.subr.bf16.mxu0 0
        %3324 = vmatpush2.bf16.msra.mxu0 %v3284
        %3325 = vmatprep.subr.bf16.mxu0 0
        %3326 = vmatpush2.bf16.msra.mxu0 %v3283
        %3327 = vmatprep.subr.bf16.mxu0 0
        %3328 = vmatpush2.bf16.msra.mxu0 %v3282
        %3329 = vmatprep.subr.bf16.mxu0 0
        %3330 = vmatpush2.bf16.msra.mxu0 %v3281
        %3331 = vmatprep.subr.bf16.mxu0 0
        %3332 = vmatpush2.bf16.msra.mxu0 %v3280
        %3333 = vmatprep.subr.bf16.mxu0 0
        %3334 = vmatpush2.bf16.msra.mxu0 %v3279
        %3335 = vmatprep.mubr.bf16.mxu0 %v3167
        %3336 = vmatmul.mubr.bf16.gmra.mxu0 %v3166
        %v3337 = vpop.f32.mrf.mxu0
        %v3338 = vadd.f32 %v3205, %v3337
        %v3339 = vpop.f32.mrf.mxu0
        %v3340 = vpop.f32.mrf.mxu0
        %v3341 = vadd.f32 %v3205, %v3340
        %v3342 = vpop.f32.mrf.mxu0
        %3343 = vdwg.mxu0
        %v3344 = vadd.f32 %v2954, %v3338
        %v3345 = vadd.f32 %v2955, %v3341
        %p3346 = scmp.lt.s32.totalorder %s39, 1
        // Predicated region
        $region121: #{tpu_custom_call.1} parent=83 // pred_check
          %p3347 = pneg %p3346
        $region122: #{tpu_custom_call.1} parent=83 // pred_check_branch
          %3349 = sbr.rel (%p3347) target = $region124
        $region123: #{tpu_custom_call.1} parent=83 // pred_region
          %3350 = vst [vmem:[%s846] sm:$0xff] %v3344
          %3351 = vst [vmem:[%s846 + $0x8] sm:$0xff] %v3345
        $region124: #{tpu_custom_call.1} parent=83 // pred_fallthru
          _
        %p3352 = scmp.eq.s32.totalorder %s39, 1
        // Predicated region
        $region125: #{tpu_custom_call.1} parent=83 // pred_check
          %p3353 = pneg %p3352
        $region126: #{tpu_custom_call.1} parent=83 // pred_check_branch
          %3355 = sbr.rel (%p3353) target = $region128
        $region127: #{tpu_custom_call.1} parent=83 // pred_region
          %v3356 = vld [vmem:[%s14] sm:$0x1]
          %v3357 = vld [vmem:[%s15] sm:$0x1]
          %3358 = vadd.xlane.f32.xlu0 %v3344
          %v3359 = vpop.xlane.xlu0 %3358
          %3360 = vadd.xlane.f32.xlu0 %v3345
          %v3361 = vpop.xlane.xlu0 %3360
          %v3362 = vmul.f32 %v3359, %v888
          %v3363 = vmul.f32 %v3361, %v888
          %v3364 = vsub.f32 %v3344, %v3362
          %v3365 = vsub.f32 %v3345, %v3363
          %v3366 = vmul.f32 %v3364, %v3364
          %v3367 = vmul.f32 %v3365, %v3365
          %3368 = vadd.xlane.f32.xlu0 %v3366
          %v3369 = vpop.xlane.xlu0 %3368
          %3370 = vadd.xlane.f32.xlu0 %v3367
          %v3371 = vpop.xlane.xlu0 %3370
          %v3372 = vmul.f32 %v3369, %v888
          %v3373 = vmul.f32 %v3371, %v888
          %v3374 = vadd.f32 %v3372, 1e-05
          %v3375 = vadd.f32 %v3373, 1e-05
          %v3376 = vrsqrt.pop %v3374
          %v3377 = vrsqrt.pop %v3375
          %v3378 = vmul.f32 %v3364, %v3376
          %v3379 = vmul.f32 %v3365, %v3377
          %v3381 = vlaneseq
          %v3382 = vshrl.u32 %v3381, 7
          %v3383 = vsub.s32 0, %v3382
          %v3384 = vrot.slane %v3356, %v3383
          %v3386 = vmul.f32 %v3378, %v3384
          %v3387 = vmul.f32 %v3379, %v3384
          %v3389 = vlaneseq
          %v3390 = vshrl.u32 %v3389, 7
          %v3391 = vsub.s32 0, %v3390
          %v3392 = vrot.slane %v3357, %v3391
          %v3394 = vadd.f32 %v3386, %v3392
          %v3395 = vadd.f32 %v3387, %v3392
          %3396 = vst [vmem:[%s846] sm:$0xff] %v3394
          %3397 = vst [vmem:[%s846 + $0x8] sm:$0xff] %v3395
        $region128: #{tpu_custom_call.1} parent=83 // pred_fallthru
          _
        %s3398 = sand.u32 %s455, 1
        %s3399 = scalar_lea.sflag [#allocation4], %s3398
        %s3400 = sand.u32 %s455, 1
        %s3401 = smul.addr %s3400, 16
        %s3402 = scalar_lea.vmem [#allocation13], %s3401
        // Predicated region
        $region129: #{tpu_custom_call.1} parent=83 // pred_check
          %p3403 = pneg %p465
        $region130: #{tpu_custom_call.1} parent=83 // pred_check_branch
          %3405 = sbr.rel (%p3403) target = $region132
        $region131: #{tpu_custom_call.1} parent=83 // pred_region
          %s3406 = smul.u32 2, %s38
          %s3408 = ssub.s32 256, 256
          %3409 = vsyncadd %s3399, %s3408
          %s3410 = smul.addr %s3406, 128
          %s3411 = scalar_lea.hbm %s16, %s3410
          %s3412 = sshll.u32 %s3402, 4
          %s3413 = int_to_ptr.vmem [resolvable:$true] %s3412
          %3418 = dma.vmem_to_hbm [thread:$0]  %s3413, 256, %s3411, %s3399, 128, 128, 8
        $region132: #{tpu_custom_call.1} parent=83 // pred_fallthru
          _
      $region84: #{tpu_custom_call.1} parent=5 // pred_fallthru
        _
      %p3419 = scmp.le.s32.totalorder 2, %s29
      // Predicated region
      $region133: #{tpu_custom_call.1} parent=5 // pred_check
        %p3420 = pneg %p3419
      $region134: #{tpu_custom_call.1} parent=5 // pred_check_branch
        %3422 = sbr.rel (%p3420) target = $region136
      $region135: #{tpu_custom_call.1} parent=5 // pred_region
        %s3423 = ssub.s32 %s29, 2
        // Predicated region
        $region137: #{tpu_custom_call.1} parent=135 // pred_check
          %p3424 = pneg %p471
        $region138: #{tpu_custom_call.1} parent=135 // pred_check_branch
          %3426 = sbr.rel (%p3424) target = $region140
        $region139: #{tpu_custom_call.1} parent=135 // pred_region
          %s3427 = sand.u32 %s456, 1
          %s3428 = scalar_lea.sflag [#allocation4], %s3427
          %s3429 = sand.u32 %s456, 1
          %s3430 = smul.addr %s3429, 16
          %s3431 = scalar_lea.vmem [#allocation13], %s3430
          %3432 = dma.done %s3428, 256
        $region140: #{tpu_custom_call.1} parent=135 // pred_fallthru
          _
      $region136: #{tpu_custom_call.1} parent=5 // pred_fallthru
        _
    $region6: #{tpu_custom_call.1} parent=1 // loop_footer
      %s33 = sadd.s32 1, %s29
    $region7: #{tpu_custom_call.1} parent=1 // loop_footer_branch
      %28 = sbr.rel target = $region3
    $region8: #{tpu_custom_call.1} parent=1 // loop_exit
      _
    %3433 = vsyncpa [#allocation3], 1
    %s3434 = scalar_lea.sflag [#allocation3], 1
    %3435 = vsyncpa %s3434, 1
    %3436 = vsyncpa [#allocation6], 1
    %3437 = vsyncpa [#allocation4], 1
    %s3438 = scalar_lea.sflag [#allocation4], 1
    %3439 = vsyncpa %s3438, 1

</llo_original>
